<compile_context>
chip_gen: v7x
topology: tpu7x:2x2x1
jax: 0.10.0
libtpu: 0.0.40
codegen_flags: <defaults>
</compile_context>

<pallas_src>
import functools

import jax
import jax.numpy as jnp
from jax import lax
from jax.experimental import pallas as pl
from jax.experimental.pallas import tpu as pltpu


# ----------------------------------------------------------------------------
# Kernel
# ----------------------------------------------------------------------------
def _conv_kernel(x_ref, w_ref, b_ref, o_ref, xpad_ref, *, kh, kw):
    """KxK 'same' conv for one image, output in transposed (Cout, H*W) form.

    x_ref:    (1, H, W, Cin)          bf16 unpadded NHWC image
    w_ref:    (kh*kw, Cout, Cin)      bf16 per-tap weight matrices (t = dy*kw+dx)
    b_ref:    (Cout, 1)               f32 bias (broadcast over the H*W lanes)
    o_ref:    (1, Cout, H*W)          f32 output, lane dim = H*W (fully dense)
    xpad_ref: (H+kh-1, W+kw-1, Cin)   bf16 VMEM halo buffer (zero border)
    """
    _, H, W, Cin = x_ref.shape
    Cout = o_ref.shape[1]
    ph, pw = (kh - 1) // 2, (kw - 1) // 2

    # In-kernel 'same' padding: zero the halo buffer, drop the image inside.
    xpad_ref[...] = jnp.zeros_like(xpad_ref)
    xpad_ref[pl.ds(ph, H), pl.ds(pw, W), :] = x_ref[0]

    # Accumulate kh*kw per-tap matmuls (Cout, Cin) x (H*W, Cin)^T -> (Cout, H*W)
    # in f32.  The MXU N/lane dimension is H*W, not the tiny Cout.
    acc = jnp.zeros((Cout, H * W), jnp.float32)
    for dy in range(kh):
        for dx in range(kw):
            t = dy * kw + dx
            patch = xpad_ref[pl.ds(dy, H), pl.ds(dx, W), :]      # (H, W, Cin)
            patch2d = patch.reshape(H * W, Cin)                  # bf16
            acc = acc + lax.dot_general(
                w_ref[t], patch2d,
                dimension_numbers=(((1,), (1,)), ((), ())),      # contract Cin
                preferred_element_type=jnp.float32)              # (Cout, H*W)

    o_ref[0] = (acc + b_ref[...]).astype(o_ref.dtype)


# ----------------------------------------------------------------------------
# Wrapper
# ----------------------------------------------------------------------------
def conv2d_pallas(x_nhwc, w_hwio, b, *, k=3):
    """'same' KxK conv.  x: (N,H,W,Cin), w: (k,k,Cin,Cout), b: (Cout,).

    Returns (N, Cout, H, W) float32 — i.e. NCHW, matching the PyTorch module.
    """
    N, H, W, Cin = x_nhwc.shape
    Cout = w_hwio.shape[-1]
    Hp, Wp = H + k - 1, W + k - 1

    x_bf = x_nhwc.astype(jnp.bfloat16)
    # (k, k, Cin, Cout) -> (k*k, Cout, Cin); tap order t = dy*k + dx.
    w_taps = jnp.transpose(w_hwio.reshape(k * k, Cin, Cout),
                           (0, 2, 1)).astype(jnp.bfloat16)
    b_col = b.astype(jnp.float32).reshape(Cout, 1)

    kern = functools.partial(_conv_kernel, kh=k, kw=k)
    out = pl.pallas_call(
        kern,
        out_shape=jax.ShapeDtypeStruct((N, Cout, H * W), jnp.float32),
        grid=(N,),
        in_specs=[
            pl.BlockSpec((1, H, W, Cin), lambda n: (n, 0, 0, 0)),
            pl.BlockSpec((k * k, Cout, Cin), lambda n: (0, 0, 0)),
            pl.BlockSpec((Cout, 1), lambda n: (0, 0)),
        ],
        out_specs=pl.BlockSpec((1, Cout, H * W), lambda n: (n, 0, 0)),
        scratch_shapes=[pltpu.VMEM((Hp, Wp, Cin), jnp.bfloat16)],
        compiler_params=pltpu.CompilerParams(
            dimension_semantics=("parallel",),          # images are independent
            vmem_limit_bytes=32 * 1024 * 1024),
    )(x_bf, w_taps, b_col)
    # Free, metadata-only split of the lane dim back into (H, W).
    return out.reshape(N, Cout, H, W)


def conv2d_forward(x_nchw, w_hwio, b):
    """PyTorch-module-equivalent forward: NCHW in -> NCHW out."""
    x = jnp.transpose(x_nchw, (0, 2, 3, 1))     # NCHW -> NHWC (fuses with cast)
    return conv2d_pallas(x, w_hwio, b, k=3)     # kernel emits NCHW natively


# ----------------------------------------------------------------------------
# Pure-JAX reference (f32) for validation
# ----------------------------------------------------------------------------
def ref_conv(x_nchw, w_hwio, b):
    x = jnp.transpose(x_nchw, (0, 2, 3, 1)).astype(jnp.float32)
    y = lax.conv_general_dilated(
        x, w_hwio.astype(jnp.float32), (1, 1), [(1, 1), (1, 1)],
        dimension_numbers=('NHWC', 'HWIO', 'NHWC'))
    y = y + b[None, None, None, :]
    return jnp.transpose(y, (0, 3, 1, 2))


# ----------------------------------------------------------------------------
# Main
# ----------------------------------------------------------------------------
if __name__ == "__main__":
    key = jax.random.PRNGKey(0)
    # Module defaults: in_channel=256, out_channel=8, 3x3, stride 1, pad 1.
    N, Cin, Cout, H, W = 2, 256, 8, 16, 16
    kx, kw_key, kb_key = jax.random.split(key, 3)

    x = jax.random.normal(kx, (N, Cin, H, W), jnp.float32)         # NCHW
    fan_in = Cin * 3 * 3
    bound = float(fan_in ** -0.5)                                   # PyTorch-like init
    w = jax.random.uniform(kw_key, (3, 3, Cin, Cout), jnp.float32, -bound, bound)
    b = jax.random.uniform(kb_key, (Cout,), jnp.float32, -bound, bound)

    out = jax.block_until_ready(conv2d_forward(x, w, b))
    assert out.shape == (N, Cout, H, W), out.shape

    ref = jax.block_until_ready(ref_conv(x, w, b))
    # bf16 operands (f32 accumulation) -> tolerance loosened vs the f32 reference.
    if not bool(jnp.allclose(out, ref, atol=5e-2, rtol=5e-2)):
        raise AssertionError(
            f"Pallas/reference mismatch, max abs err = {jnp.max(jnp.abs(out - ref))}")
    print("KERNEL_OK")
</pallas_src>

<mosaic_0001>
module attributes {stable_mosaic.version = 11 : i64} {
  func.func @_conv_kernel(%arg0: i32, %arg1: memref<1x16x16x256xbf16, #tpu.memory_space<vmem>>, %arg2: memref<9x8x256xbf16, #tpu.memory_space<vmem>>, %arg3: memref<8x1xf32, #tpu.memory_space<vmem>>, %arg4: memref<1x8x256xf32, #tpu.memory_space<vmem>>, %arg5: memref<18x18x256xbf16, #tpu.memory_space<vmem>>) attributes {dimension_semantics = [#tpu.dimension_semantics<parallel>], iteration_bounds = array<i64: 2>, scalar_prefetch = 0 : i64, scratch_operands = 1 : i64, tpu.core_type = #tpu.core_type<tc>, window_params = [{transform_indices = @transform_0, window_bounds = array<i64: 1, 16, 16, 256>}, {pipeline_mode = #tpu.pipeline_mode<synchronous>, transform_indices = @transform_1, window_bounds = array<i64: 9, 8, 256>}, {pipeline_mode = #tpu.pipeline_mode<synchronous>, transform_indices = @transform_2, window_bounds = array<i64: 8, 1>}, {transform_indices = @transform_3, window_bounds = array<i64: 1, 8, 256>}]} {
    %cst = arith.constant 0.000000e+00 : bf16
    %0 = vector.broadcast %cst : bf16 to vector<18x18x256xbf16>
    %c0 = arith.constant 0 : index
    %c0_0 = arith.constant 0 : index
    %c0_1 = arith.constant 0 : index
    %1 = vector.load %arg5[%c0, %c0_0, %c0_1] : memref<18x18x256xbf16, #tpu.memory_space<vmem>>, vector<18x18x256xbf16>
    tpu.vector_store %arg5[%c0, %c0_0, %c0_1], %0 {strides = array<i32>} : memref<18x18x256xbf16, #tpu.memory_space<vmem>>, vector<18x18x256xbf16>,
    %c0_2 = arith.constant 0 : index
    %c0_3 = arith.constant 0 : index
    %c0_4 = arith.constant 0 : index
    %c0_5 = arith.constant 0 : index
    %2 = vector.load %arg1[%c0_2, %c0_3, %c0_4, %c0_5] : memref<1x16x16x256xbf16, #tpu.memory_space<vmem>>, vector<1x16x16x256xbf16>
    %3 = vector.shape_cast %2 : vector<1x16x16x256xbf16> to vector<16x16x256xbf16>
    %c1 = arith.constant 1 : index
    %c1_6 = arith.constant 1 : index
    %c0_7 = arith.constant 0 : index
    %4 = vector.load %arg5[%c1, %c1_6, %c0_7] : memref<18x18x256xbf16, #tpu.memory_space<vmem>>, vector<16x16x256xbf16>
    tpu.vector_store %arg5[%c1, %c1_6, %c0_7], %3 {strides = array<i32>} : memref<18x18x256xbf16, #tpu.memory_space<vmem>>, vector<16x16x256xbf16>,
    %cst_8 = arith.constant 0.000000e+00 : f32
    %5 = vector.broadcast %cst_8 : f32 to vector<8x256xf32>
    %c0_9 = arith.constant 0 : index
    %c0_10 = arith.constant 0 : index
    %c0_11 = arith.constant 0 : index
    %6 = vector.load %arg5[%c0_9, %c0_10, %c0_11] : memref<18x18x256xbf16, #tpu.memory_space<vmem>>, vector<16x16x256xbf16>
    %7 = vector.shape_cast %6 : vector<16x16x256xbf16> to vector<256x256xbf16>
    %c0_12 = arith.constant 0 : index
    %c0_13 = arith.constant 0 : index
    %c0_14 = arith.constant 0 : index
    %8 = vector.load %arg2[%c0_12, %c0_13, %c0_14] : memref<9x8x256xbf16, #tpu.memory_space<vmem>>, vector<1x8x256xbf16>
    %9 = vector.shape_cast %8 : vector<1x8x256xbf16> to vector<8x256xbf16>
    %cst_15 = arith.constant dense<0.000000e+00> : vector<8x256xf32>
    %10 = tpu.matmul %9, %7, %cst_15 {dimension_numbers = #tpu.dot_dimension_numbers<[1], [1], [0], [0], [0, 0, 1, 0], [], []>} : vector<8x256xbf16>, vector<256x256xbf16>, vector<8x256xf32> -> vector<8x256xf32>
    %11 = arith.addf %5, %10 : vector<8x256xf32>
    %c0_16 = arith.constant 0 : index
    %c1_17 = arith.constant 1 : index
    %c0_18 = arith.constant 0 : index
    %12 = vector.load %arg5[%c0_16, %c1_17, %c0_18] : memref<18x18x256xbf16, #tpu.memory_space<vmem>>, vector<16x16x256xbf16>
    %13 = vector.shape_cast %12 : vector<16x16x256xbf16> to vector<256x256xbf16>
    %c1_19 = arith.constant 1 : index
    %c0_20 = arith.constant 0 : index
    %c0_21 = arith.constant 0 : index
    %14 = vector.load %arg2[%c1_19, %c0_20, %c0_21] : memref<9x8x256xbf16, #tpu.memory_space<vmem>>, vector<1x8x256xbf16>
    %15 = vector.shape_cast %14 : vector<1x8x256xbf16> to vector<8x256xbf16>
    %cst_22 = arith.constant dense<0.000000e+00> : vector<8x256xf32>
    %16 = tpu.matmul %15, %13, %cst_22 {dimension_numbers = #tpu.dot_dimension_numbers<[1], [1], [0], [0], [0, 0, 1, 0], [], []>} : vector<8x256xbf16>, vector<256x256xbf16>, vector<8x256xf32> -> vector<8x256xf32>
    %17 = arith.addf %11, %16 : vector<8x256xf32>
    %c0_23 = arith.constant 0 : index
    %c2 = arith.constant 2 : index
    %c0_24 = arith.constant 0 : index
    %18 = vector.load %arg5[%c0_23, %c2, %c0_24] : memref<18x18x256xbf16, #tpu.memory_space<vmem>>, vector<16x16x256xbf16>
    %19 = vector.shape_cast %18 : vector<16x16x256xbf16> to vector<256x256xbf16>
    %c2_25 = arith.constant 2 : index
    %c0_26 = arith.constant 0 : index
    %c0_27 = arith.constant 0 : index
    %20 = vector.load %arg2[%c2_25, %c0_26, %c0_27] : memref<9x8x256xbf16, #tpu.memory_space<vmem>>, vector<1x8x256xbf16>
    %21 = vector.shape_cast %20 : vector<1x8x256xbf16> to vector<8x256xbf16>
    %cst_28 = arith.constant dense<0.000000e+00> : vector<8x256xf32>
    %22 = tpu.matmul %21, %19, %cst_28 {dimension_numbers = #tpu.dot_dimension_numbers<[1], [1], [0], [0], [0, 0, 1, 0], [], []>} : vector<8x256xbf16>, vector<256x256xbf16>, vector<8x256xf32> -> vector<8x256xf32>
    %23 = arith.addf %17, %22 : vector<8x256xf32>
    %c1_29 = arith.constant 1 : index
    %c0_30 = arith.constant 0 : index
    %c0_31 = arith.constant 0 : index
    %24 = vector.load %arg5[%c1_29, %c0_30, %c0_31] : memref<18x18x256xbf16, #tpu.memory_space<vmem>>, vector<16x16x256xbf16>
    %25 = vector.shape_cast %24 : vector<16x16x256xbf16> to vector<256x256xbf16>
    %c3 = arith.constant 3 : index
    %c0_32 = arith.constant 0 : index
    %c0_33 = arith.constant 0 : index
    %26 = vector.load %arg2[%c3, %c0_32, %c0_33] : memref<9x8x256xbf16, #tpu.memory_space<vmem>>, vector<1x8x256xbf16>
    %27 = vector.shape_cast %26 : vector<1x8x256xbf16> to vector<8x256xbf16>
    %cst_34 = arith.constant dense<0.000000e+00> : vector<8x256xf32>
    %28 = tpu.matmul %27, %25, %cst_34 {dimension_numbers = #tpu.dot_dimension_numbers<[1], [1], [0], [0], [0, 0, 1, 0], [], []>} : vector<8x256xbf16>, vector<256x256xbf16>, vector<8x256xf32> -> vector<8x256xf32>
    %29 = arith.addf %23, %28 : vector<8x256xf32>
    %c1_35 = arith.constant 1 : index
    %c1_36 = arith.constant 1 : index
    %c0_37 = arith.constant 0 : index
    %30 = vector.load %arg5[%c1_35, %c1_36, %c0_37] : memref<18x18x256xbf16, #tpu.memory_space<vmem>>, vector<16x16x256xbf16>
    %31 = vector.shape_cast %30 : vector<16x16x256xbf16> to vector<256x256xbf16>
    %c4 = arith.constant 4 : index
    %c0_38 = arith.constant 0 : index
    %c0_39 = arith.constant 0 : index
    %32 = vector.load %arg2[%c4, %c0_38, %c0_39] : memref<9x8x256xbf16, #tpu.memory_space<vmem>>, vector<1x8x256xbf16>
    %33 = vector.shape_cast %32 : vector<1x8x256xbf16> to vector<8x256xbf16>
    %cst_40 = arith.constant dense<0.000000e+00> : vector<8x256xf32>
    %34 = tpu.matmul %33, %31, %cst_40 {dimension_numbers = #tpu.dot_dimension_numbers<[1], [1], [0], [0], [0, 0, 1, 0], [], []>} : vector<8x256xbf16>, vector<256x256xbf16>, vector<8x256xf32> -> vector<8x256xf32>
    %35 = arith.addf %29, %34 : vector<8x256xf32>
    %c1_41 = arith.constant 1 : index
    %c2_42 = arith.constant 2 : index
    %c0_43 = arith.constant 0 : index
    %36 = vector.load %arg5[%c1_41, %c2_42, %c0_43] : memref<18x18x256xbf16, #tpu.memory_space<vmem>>, vector<16x16x256xbf16>
    %37 = vector.shape_cast %36 : vector<16x16x256xbf16> to vector<256x256xbf16>
    %c5 = arith.constant 5 : index
    %c0_44 = arith.constant 0 : index
    %c0_45 = arith.constant 0 : index
    %38 = vector.load %arg2[%c5, %c0_44, %c0_45] : memref<9x8x256xbf16, #tpu.memory_space<vmem>>, vector<1x8x256xbf16>
    %39 = vector.shape_cast %38 : vector<1x8x256xbf16> to vector<8x256xbf16>
    %cst_46 = arith.constant dense<0.000000e+00> : vector<8x256xf32>
    %40 = tpu.matmul %39, %37, %cst_46 {dimension_numbers = #tpu.dot_dimension_numbers<[1], [1], [0], [0], [0, 0, 1, 0], [], []>} : vector<8x256xbf16>, vector<256x256xbf16>, vector<8x256xf32> -> vector<8x256xf32>
    %41 = arith.addf %35, %40 : vector<8x256xf32>
    %c2_47 = arith.constant 2 : index
    %c0_48 = arith.constant 0 : index
    %c0_49 = arith.constant 0 : index
    %42 = vector.load %arg5[%c2_47, %c0_48, %c0_49] : memref<18x18x256xbf16, #tpu.memory_space<vmem>>, vector<16x16x256xbf16>
    %43 = vector.shape_cast %42 : vector<16x16x256xbf16> to vector<256x256xbf16>
    %c6 = arith.constant 6 : index
    %c0_50 = arith.constant 0 : index
    %c0_51 = arith.constant 0 : index
    %44 = vector.load %arg2[%c6, %c0_50, %c0_51] : memref<9x8x256xbf16, #tpu.memory_space<vmem>>, vector<1x8x256xbf16>
    %45 = vector.shape_cast %44 : vector<1x8x256xbf16> to vector<8x256xbf16>
    %cst_52 = arith.constant dense<0.000000e+00> : vector<8x256xf32>
    %46 = tpu.matmul %45, %43, %cst_52 {dimension_numbers = #tpu.dot_dimension_numbers<[1], [1], [0], [0], [0, 0, 1, 0], [], []>} : vector<8x256xbf16>, vector<256x256xbf16>, vector<8x256xf32> -> vector<8x256xf32>
    %47 = arith.addf %41, %46 : vector<8x256xf32>
    %c2_53 = arith.constant 2 : index
    %c1_54 = arith.constant 1 : index
    %c0_55 = arith.constant 0 : index
    %48 = vector.load %arg5[%c2_53, %c1_54, %c0_55] : memref<18x18x256xbf16, #tpu.memory_space<vmem>>, vector<16x16x256xbf16>
    %49 = vector.shape_cast %48 : vector<16x16x256xbf16> to vector<256x256xbf16>
    %c7 = arith.constant 7 : index
    %c0_56 = arith.constant 0 : index
    %c0_57 = arith.constant 0 : index
    %50 = vector.load %arg2[%c7, %c0_56, %c0_57] : memref<9x8x256xbf16, #tpu.memory_space<vmem>>, vector<1x8x256xbf16>
    %51 = vector.shape_cast %50 : vector<1x8x256xbf16> to vector<8x256xbf16>
    %cst_58 = arith.constant dense<0.000000e+00> : vector<8x256xf32>
    %52 = tpu.matmul %51, %49, %cst_58 {dimension_numbers = #tpu.dot_dimension_numbers<[1], [1], [0], [0], [0, 0, 1, 0], [], []>} : vector<8x256xbf16>, vector<256x256xbf16>, vector<8x256xf32> -> vector<8x256xf32>
    %53 = arith.addf %47, %52 : vector<8x256xf32>
    %c2_59 = arith.constant 2 : index
    %c2_60 = arith.constant 2 : index
    %c0_61 = arith.constant 0 : index
    %54 = vector.load %arg5[%c2_59, %c2_60, %c0_61] : memref<18x18x256xbf16, #tpu.memory_space<vmem>>, vector<16x16x256xbf16>
    %55 = vector.shape_cast %54 : vector<16x16x256xbf16> to vector<256x256xbf16>
    %c8 = arith.constant 8 : index
    %c0_62 = arith.constant 0 : index
    %c0_63 = arith.constant 0 : index
    %56 = vector.load %arg2[%c8, %c0_62, %c0_63] : memref<9x8x256xbf16, #tpu.memory_space<vmem>>, vector<1x8x256xbf16>
    %57 = vector.shape_cast %56 : vector<1x8x256xbf16> to vector<8x256xbf16>
    %cst_64 = arith.constant dense<0.000000e+00> : vector<8x256xf32>
    %58 = tpu.matmul %57, %55, %cst_64 {dimension_numbers = #tpu.dot_dimension_numbers<[1], [1], [0], [0], [0, 0, 1, 0], [], []>} : vector<8x256xbf16>, vector<256x256xbf16>, vector<8x256xf32> -> vector<8x256xf32>
    %59 = arith.addf %53, %58 : vector<8x256xf32>
    %c0_65 = arith.constant 0 : index
    %c0_66 = arith.constant 0 : index
    %60 = vector.load %arg3[%c0_65, %c0_66] : memref<8x1xf32, #tpu.memory_space<vmem>>, vector<8x1xf32>
    %61 = vector.broadcast %60 : vector<8x1xf32> to vector<8x256xf32>
    %62 = arith.addf %59, %61 : vector<8x256xf32>
    %c0_67 = arith.constant 0 : index
    %c0_68 = arith.constant 0 : index
    %c0_69 = arith.constant 0 : index
    %63 = vector.load %arg4[%c0_67, %c0_68, %c0_69] : memref<1x8x256xf32, #tpu.memory_space<vmem>>, vector<1x8x256xf32>
    %64 = vector.shape_cast %63 : vector<1x8x256xf32> to vector<8x256xf32>
    %65 = vector.shape_cast %62 : vector<8x256xf32> to vector<1x8x256xf32>
    tpu.vector_store %arg4[%c0_67, %c0_68, %c0_69], %65 {strides = array<i32>} : memref<1x8x256xf32, #tpu.memory_space<vmem>>, vector<1x8x256xf32>,
    return
  }
  func.func @transform_0(%arg0: i32) -> (i32, i32, i32, i32) {
    %c0_i32 = arith.constant 0 : i32
    %c0_i32_0 = arith.constant 0 : i32
    %c0_i32_1 = arith.constant 0 : i32
    %c0_i32_2 = arith.constant 0 : i32
    return %arg0, %c0_i32, %c0_i32_0, %c0_i32_1 : i32, i32, i32, i32
  }
  func.func @transform_1(%arg0: i32) -> (i32, i32, i32) {
    %c0_i32 = arith.constant 0 : i32
    %c0_i32_0 = arith.constant 0 : i32
    %c0_i32_1 = arith.constant 0 : i32
    %c0_i32_2 = arith.constant 0 : i32
    return %c0_i32, %c0_i32_0, %c0_i32_1 : i32, i32, i32
  }
  func.func @transform_2(%arg0: i32) -> (i32, i32) {
    %c0_i32 = arith.constant 0 : i32
    %c0_i32_0 = arith.constant 0 : i32
    %c0_i32_1 = arith.constant 0 : i32
    return %c0_i32, %c0_i32_0 : i32, i32
  }
  func.func @transform_3(%arg0: i32) -> (i32, i32, i32) {
    %c0_i32 = arith.constant 0 : i32
    %c0_i32_0 = arith.constant 0 : i32
    %c0_i32_1 = arith.constant 0 : i32
    return %arg0, %c0_i32, %c0_i32_0 : i32, i32, i32
  }
}

</mosaic_0001>

<llo_original>
// kernel: tpu_custom_call.1
$region0: #{tpu_custom_call.1}
  #allocation0 [shape = 'u32[]', space=smem, size = 0x4, offset = 0x4, fixed_abs, tag = 'smem constant byte address 0x4 - core index']
  #allocation1 [shape = 'u32[144,128]{1,0:T(1,128)}', space=vmem, size = 0x12000, scoped, tag = 'internal scratch']
  #allocation2 [shape = 'bf16[18,18,256]{2,1,0:T(8,128)(2,1)}', space=vmem, size = 0x36000, scoped, tag = 'scratch operand']
  %s0 = inlined_call_operand.hbm [shape: bf16[2,16,16,256], index: 0, kind: input, shape index: {}]
  %s1 = inlined_call_operand.hbm [shape: bf16[9,8,256], index: 1, kind: input, shape index: {}]
  %s2 = inlined_call_operand.vmem [shape: f32[8,1], index: 2, kind: input, shape index: {}]
  %s3 = inlined_call_operand.hbm [shape: f32[2,8,256], index: 3, kind: output, shape index: {}]
  %s4 = sld [smem:[#allocation0]]
  $region53: #{tpu_custom_call.1} parent=0
    _
  %s6 = ssub.s32 1, %s4
  %s7 = scalar_select 0, %s6, %s4
  $region1: #{tpu_custom_call.1} parent=0
    #allocation3 [shape = 'u8[262144]{0}', space=vmem, size = 0x40000, scoped, tag = 'input window, operand 0']
    #allocation4 [shape = 's32[2]{0}', space=sflag, size = 0x8, scoped, tag = 'scoped memory for tpu_custom_call.1']
    #allocation5 [shape = 's32[2]{0}', space=sflag, size = 0x8, scoped, tag = 'scoped memory for tpu_custom_call.1']
    #allocation6 [shape = 'u8[36864]{0}', space=vmem, size = 0x9000, scoped, tag = 'input window, operand 1, single buffered']
    #allocation7 [shape = 's32[1]{0}', space=sflag, size = 0x4, scoped, tag = 'scoped memory for tpu_custom_call.1']
    #allocation8 [shape = 'u8[16384]{0}', space=vmem, size = 0x4000, scoped, tag = 'output window, operand 0']
    %8 = vsyncpa [#allocation4], 0
    %s9 = scalar_lea.sflag [#allocation4], 1
    %10 = vsyncpa %s9, 0
    %11 = vsyncpa [#allocation7], 0
    %12 = vsyncpa [#allocation5], 0
    %s13 = scalar_lea.sflag [#allocation5], 1
    %14 = vsyncpa %s13, 0
    loop: start=0, step=1, limit=4
    $region2: #{tpu_custom_call.1} parent=1 // loop_pre_header
      _
    $region3: #{tpu_custom_call.1} parent=1 // loop_header
      %s16 = sphi 0, %s20
      %p17 = scmp.ge.s32.totalorder %s16, 4
      %s26 = sphi 0, %s28
      %s29 = sphi 0, %s26
      %s30 = sphi 0, %s29
      %s46 = sphi 0, %s30
      %s50 = sphi 0, %s50
      %s52 = sphi 0, %s50
      %s53 = sphi 0, %s52
      %s67 = sphi 0, %s53
      %s71 = sphi 0, %s71
      %s73 = sphi 0, %s71
      %s74 = sphi 0, %s73
      %s88 = sphi 0, %s74
      %s94 = sphi 0, %s96
      %s97 = sphi 0, %s94
      %s98 = sphi 0, %s97
      %s114 = sphi 0, %s98
    $region4: #{tpu_custom_call.1} parent=1 // loop_header_branch
      %19 = sbr.rel (%p17) target = $region8
    $region5: #{tpu_custom_call.1} parent=1 // loop_body
      %s21 = ssub.s32 %s16, 1
      %s22 = ssub.s32 %s16, 2
      %s23 = sadd.s32 %s16, 1
      %s24 = ssub.s32 %s16, %s23
      %p25 = scmp.eq.s32.totalorder %s24, 0
      %s27 = sadd.s32 %s26, 1
      %s28 = scalar_select %p25, %s26, %s27
      %p31 = pneg %p25
      %p32 = scmp.eq.s32.totalorder %s16, 1
      %p33 = por %p31, %p32
      %p34 = scmp.ne.s32.totalorder %s26, %s29
      %p35 = scmp.eq.s32.totalorder %s16, 0
      %p36 = por %p34, %p35
      %p37 = scmp.ne.s32.totalorder %s26, %s29
      %p38 = scmp.eq.s32.totalorder %s21, 1
      %p39 = por %p37, %p38
      %p40 = scmp.ne.s32.totalorder %s29, %s30
      %p41 = scmp.eq.s32.totalorder %s21, 0
      %p42 = por %p40, %p41
      %p43 = scmp.ne.s32.totalorder %s29, %s30
      %p44 = scmp.eq.s32.totalorder %s22, 1
      %p45 = por %p43, %p44
      %p47 = scmp.ne.s32.totalorder %s30, %s46
      %p48 = scmp.eq.s32.totalorder %s22, 0
      %p49 = por %p47, %p48
      %s51 = sadd.s32 %s50, 1
      %p54 = scmp.eq.s32.totalorder %s16, 1
      %p55 = scmp.ne.s32.totalorder %s50, %s52
      %p56 = scmp.eq.s32.totalorder %s16, 0
      %p57 = por %p55, %p56
      %p58 = scmp.ne.s32.totalorder %s50, %s52
      %p59 = scmp.eq.s32.totalorder %s21, 1
      %p60 = por %p58, %p59
      %p61 = scmp.ne.s32.totalorder %s52, %s53
      %p62 = scmp.eq.s32.totalorder %s21, 0
      %p63 = por %p61, %p62
      %p64 = scmp.ne.s32.totalorder %s52, %s53
      %p65 = scmp.eq.s32.totalorder %s22, 1
      %p66 = por %p64, %p65
      %p68 = scmp.ne.s32.totalorder %s53, %s67
      %p69 = scmp.eq.s32.totalorder %s22, 0
      %p70 = por %p68, %p69
      %s72 = sadd.s32 %s71, 1
      %p75 = scmp.eq.s32.totalorder %s16, 1
      %p76 = scmp.ne.s32.totalorder %s71, %s73
      %p77 = scmp.eq.s32.totalorder %s16, 0
      %p78 = por %p76, %p77
      %p79 = scmp.ne.s32.totalorder %s71, %s73
      %p80 = scmp.eq.s32.totalorder %s21, 1
      %p81 = por %p79, %p80
      %p82 = scmp.ne.s32.totalorder %s73, %s74
      %p83 = scmp.eq.s32.totalorder %s21, 0
      %p84 = por %p82, %p83
      %p85 = scmp.ne.s32.totalorder %s73, %s74
      %p86 = scmp.eq.s32.totalorder %s22, 1
      %p87 = por %p85, %p86
      %p89 = scmp.ne.s32.totalorder %s74, %s88
      %p90 = scmp.eq.s32.totalorder %s22, 0
      %p91 = por %p89, %p90
      %s92 = ssub.s32 %s16, %s23
      %p93 = scmp.eq.s32.totalorder %s92, 0
      %s95 = sadd.s32 %s94, 1
      %s96 = scalar_select %p93, %s94, %s95
      %p99 = pneg %p93
      %p100 = scmp.eq.s32.totalorder %s16, 1
      %p101 = por %p99, %p100
      %p102 = scmp.ne.s32.totalorder %s94, %s97
      %p103 = scmp.eq.s32.totalorder %s16, 0
      %p104 = por %p102, %p103
      %p105 = scmp.ne.s32.totalorder %s94, %s97
      %p106 = scmp.eq.s32.totalorder %s21, 1
      %p107 = por %p105, %p106
      %p108 = scmp.ne.s32.totalorder %s97, %s98
      %p109 = scmp.eq.s32.totalorder %s21, 0
      %p110 = por %p108, %p109
      %p111 = scmp.ne.s32.totalorder %s97, %s98
      %p112 = scmp.eq.s32.totalorder %s22, 1
      %p113 = por %p111, %p112
      %p115 = scmp.ne.s32.totalorder %s98, %s114
      %p116 = scmp.eq.s32.totalorder %s22, 0
      %p117 = por %p115, %p116
      %p118 = scmp.le.s32.totalorder 1, %s16
      %p119 = scmp.lt.s32.totalorder %s16, 3
      %p120 = pnand %p118, %p119
      %p121 = pneg %p120
      // Predicated region
      $region9: #{tpu_custom_call.1} parent=5 // pred_check
        _
      $region10: #{tpu_custom_call.1} parent=5 // pred_check_branch
        %123 = sbr.rel (%p120) target = $region12
      $region11: #{tpu_custom_call.1} parent=5 // pred_region
        %s124 = ssub.s32 %s16, 1
        // Predicated region
        $region13: #{tpu_custom_call.1} parent=11 // pred_check
          %p125 = pneg %p63
        $region14: #{tpu_custom_call.1} parent=11 // pred_check_branch
          %127 = sbr.rel (%p125) target = $region16
        $region15: #{tpu_custom_call.1} parent=11 // pred_region
          %s129 = ssub.s32 1152, 1152
          %130 = vsyncadd [#allocation7], %s129
          %s131 = sshll.u32 [#allocation6], 4
          %s132 = int_to_ptr.vmem [resolvable:$true] %s131
          %137 = dma.hbm_to_vmem [thread:$0]  %s1, 1152, %s132, [#allocation7], 128, 128, 8
        $region16: #{tpu_custom_call.1} parent=11 // pred_fallthru
          _
        // Predicated region
        $region17: #{tpu_custom_call.1} parent=11 // pred_check
          %p138 = pneg %p84
        $region18: #{tpu_custom_call.1} parent=11 // pred_check_branch
          %140 = sbr.rel (%p138) target = $region20
        $region19: #{tpu_custom_call.1} parent=11 // pred_region
          _
        $region20: #{tpu_custom_call.1} parent=11 // pred_fallthru
          _
      $region12: #{tpu_custom_call.1} parent=5 // pred_fallthru
        _
      %p141 = scmp.lt.s32.totalorder %s16, 2
      // Predicated region
      $region21: #{tpu_custom_call.1} parent=5 // pred_check
        %p142 = pneg %p141
      $region22: #{tpu_custom_call.1} parent=5 // pred_check_branch
        %144 = sbr.rel (%p142) target = $region24
      $region23: #{tpu_custom_call.1} parent=5 // pred_region
        // Predicated region
        $region25: #{tpu_custom_call.1} parent=23 // pred_check
          %p145 = pneg %p36
        $region26: #{tpu_custom_call.1} parent=23 // pred_check_branch
          %147 = sbr.rel (%p145) target = $region28
        $region27: #{tpu_custom_call.1} parent=23 // pred_region
          %s148 = sand.u32 %s26, 1
          %s149 = scalar_lea.sflag [#allocation4], %s148
          %s150 = sand.u32 %s26, 1
          %s151 = smul.addr %s150, 256
          %s152 = scalar_lea.vmem [#allocation3], %s151
          %s154 = ssub.s32 4096, 4096
          %155 = vsyncadd %s149, %s154
          %s156 = smul.addr %s16, 64
          %s157 = smul.addr %s156, 64
          %s158 = scalar_lea.hbm %s0, %s157
          %s159 = sshll.u32 %s152, 4
          %s160 = int_to_ptr.vmem [resolvable:$true] %s159
          %165 = dma.hbm_to_vmem [thread:$0]  %s158, 4096, %s160, %s149, 128, 128, 8
        $region28: #{tpu_custom_call.1} parent=23 // pred_fallthru
          _
      $region24: #{tpu_custom_call.1} parent=5 // pred_fallthru
        _
      %p166 = scmp.le.s32.totalorder 1, %s16
      %p167 = scmp.lt.s32.totalorder %s16, 3
      %p168 = pnand %p166, %p167
      %p169 = pneg %p168
      // Predicated region
      $region29: #{tpu_custom_call.1} parent=5 // pred_check
        _
      $region30: #{tpu_custom_call.1} parent=5 // pred_check_branch
        %171 = sbr.rel (%p168) target = $region32
      $region31: #{tpu_custom_call.1} parent=5 // pred_region
        %s172 = ssub.s32 %s16, 1
        %s173 = sand.u32 %s29, 1
        %s174 = scalar_lea.sflag [#allocation4], %s173
        %s175 = sand.u32 %s29, 1
        %s176 = smul.addr %s175, 256
        %s177 = scalar_lea.vmem [#allocation3], %s176
        // Predicated region
        $region33: #{tpu_custom_call.1} parent=31 // pred_check
          %p178 = pneg %p42
        $region34: #{tpu_custom_call.1} parent=31 // pred_check_branch
          %180 = sbr.rel (%p178) target = $region36
        $region35: #{tpu_custom_call.1} parent=31 // pred_region
          %181 = dma.done %s174, 4096
        $region36: #{tpu_custom_call.1} parent=31 // pred_fallthru
          _
        // Predicated region
        $region37: #{tpu_custom_call.1} parent=31 // pred_check
          %p182 = pneg %p63
        $region38: #{tpu_custom_call.1} parent=31 // pred_check_branch
          %184 = sbr.rel (%p182) target = $region40
        $region39: #{tpu_custom_call.1} parent=31 // pred_region
          %185 = dma.done [#allocation7], 1152
        $region40: #{tpu_custom_call.1} parent=31 // pred_fallthru
          _
        %s186 = sand.u32 %s29, 1
        %s187 = scalar_lea.sflag [#allocation4], %s186
        %s188 = sand.u32 %s29, 1
        %s189 = smul.addr %s188, 256
        %s190 = scalar_lea.vmem [#allocation3], %s189
        %p191 = pneg %p42
        %p192 = pneg %p39
        %p193 = pneg %p63
        %p194 = pneg %p60
        %p195 = pneg %p84
        %p196 = pneg %p81
        %p197 = pneg %p110
        %p198 = pneg %p107
        %s199 = sand.u32 %s97, 1
        %s200 = scalar_lea.sflag [#allocation5], %s199
        %s201 = sand.u32 %s97, 1
        %s202 = smul.addr %s201, 16
        %s203 = scalar_lea.vmem [#allocation8], %s202
        %205 = vst [vmem:[#allocation2] sm:$0xff] 0
        %206 = vst [vmem:[#allocation2 + $0x8] sm:$0xff] 0
        %207 = vst [vmem:[#allocation2 + $0x10] sm:$0x11] 0
        %208 = vst [vmem:[#allocation2 + $0x18] sm:$0xff] 0
        %209 = vst [vmem:[#allocation2 + $0x20] sm:$0xff] 0
        %210 = vst [vmem:[#allocation2 + $0x28] sm:$0x11] 0
        %211 = vst [vmem:[#allocation2 + $0x30] sm:$0xff] 0
        %212 = vst [vmem:[#allocation2 + $0x38] sm:$0xff] 0
        %213 = vst [vmem:[#allocation2 + $0x40] sm:$0x11] 0
        %214 = vst [vmem:[#allocation2 + $0x48] sm:$0xff] 0
        %215 = vst [vmem:[#allocation2 + $0x50] sm:$0xff] 0
        %216 = vst [vmem:[#allocation2 + $0x58] sm:$0x11] 0
        %217 = vst [vmem:[#allocation2 + $0x60] sm:$0xff] 0
        %218 = vst [vmem:[#allocation2 + $0x68] sm:$0xff] 0
        %219 = vst [vmem:[#allocation2 + $0x70] sm:$0x11] 0
        %220 = vst [vmem:[#allocation2 + $0x78] sm:$0xff] 0
        %221 = vst [vmem:[#allocation2 + $0x80] sm:$0xff] 0
        %222 = vst [vmem:[#allocation2 + $0x88] sm:$0x11] 0
        %223 = vst [vmem:[#allocation2 + $0x90] sm:$0xff] 0
        %224 = vst [vmem:[#allocation2 + $0x98] sm:$0xff] 0
        %225 = vst [vmem:[#allocation2 + $0xa0] sm:$0x11] 0
        %226 = vst [vmem:[#allocation2 + $0xa8] sm:$0xff] 0
        %227 = vst [vmem:[#allocation2 + $0xb0] sm:$0xff] 0
        %228 = vst [vmem:[#allocation2 + $0xb8] sm:$0x11] 0
        %229 = vst [vmem:[#allocation2 + $0xc0] sm:$0xff] 0
        %230 = vst [vmem:[#allocation2 + $0xc8] sm:$0xff] 0
        %231 = vst [vmem:[#allocation2 + $0xd0] sm:$0x11] 0
        %232 = vst [vmem:[#allocation2 + $0xd8] sm:$0xff] 0
        %233 = vst [vmem:[#allocation2 + $0xe0] sm:$0xff] 0
        %234 = vst [vmem:[#allocation2 + $0xe8] sm:$0x11] 0
        %235 = vst [vmem:[#allocation2 + $0xf0] sm:$0xff] 0
        %236 = vst [vmem:[#allocation2 + $0xf8] sm:$0xff] 0
        %237 = vst [vmem:[#allocation2 + $0x100] sm:$0x11] 0
        %238 = vst [vmem:[#allocation2 + $0x108] sm:$0xff] 0
        %239 = vst [vmem:[#allocation2 + $0x110] sm:$0xff] 0
        %240 = vst [vmem:[#allocation2 + $0x118] sm:$0x11] 0
        %241 = vst [vmem:[#allocation2 + $0x120] sm:$0xff] 0
        %242 = vst [vmem:[#allocation2 + $0x128] sm:$0xff] 0
        %243 = vst [vmem:[#allocation2 + $0x130] sm:$0x11] 0
        %244 = vst [vmem:[#allocation2 + $0x138] sm:$0xff] 0
        %245 = vst [vmem:[#allocation2 + $0x140] sm:$0xff] 0
        %246 = vst [vmem:[#allocation2 + $0x148] sm:$0x11] 0
        %247 = vst [vmem:[#allocation2 + $0x150] sm:$0xff] 0
        %248 = vst [vmem:[#allocation2 + $0x158] sm:$0xff] 0
        %249 = vst [vmem:[#allocation2 + $0x160] sm:$0x11] 0
        %250 = vst [vmem:[#allocation2 + $0x168] sm:$0xff] 0
        %251 = vst [vmem:[#allocation2 + $0x170] sm:$0xff] 0
        %252 = vst [vmem:[#allocation2 + $0x178] sm:$0x11] 0
        %253 = vst [vmem:[#allocation2 + $0x180] sm:$0xff] 0
        %254 = vst [vmem:[#allocation2 + $0x188] sm:$0xff] 0
        %255 = vst [vmem:[#allocation2 + $0x190] sm:$0x11] 0
        %256 = vst [vmem:[#allocation2 + $0x198] sm:$0xff] 0
        %257 = vst [vmem:[#allocation2 + $0x1a0] sm:$0xff] 0
        %258 = vst [vmem:[#allocation2 + $0x1a8] sm:$0x11] 0
        %v259 = vld [vmem:[%s177] sm:$0xff]
        %v260 = vld [vmem:[%s177 + $0x8] sm:$0xff]
        %v261 = vld [vmem:[%s177 + $0x10] sm:$0xff]
        %v262 = vld [vmem:[%s177 + $0x18] sm:$0xff]
        %v263 = vld [vmem:[%s177 + $0x20] sm:$0xff]
        %v264 = vld [vmem:[%s177 + $0x28] sm:$0xff]
        %v265 = vld [vmem:[%s177 + $0x30] sm:$0xff]
        %v266 = vld [vmem:[%s177 + $0x38] sm:$0xff]
        %v267 = vld [vmem:[%s177 + $0x40] sm:$0xff]
        %v268 = vld [vmem:[%s177 + $0x48] sm:$0xff]
        %v269 = vld [vmem:[%s177 + $0x50] sm:$0xff]
        %v270 = vld [vmem:[%s177 + $0x58] sm:$0xff]
        %v271 = vld [vmem:[%s177 + $0x60] sm:$0xff]
        %v272 = vld [vmem:[%s177 + $0x68] sm:$0xff]
        %v273 = vld [vmem:[%s177 + $0x70] sm:$0xff]
        %v274 = vld [vmem:[%s177 + $0x78] sm:$0xff]
        %v275 = vld [vmem:[%s177 + $0x80] sm:$0xff]
        %v276 = vld [vmem:[%s177 + $0x88] sm:$0xff]
        %v277 = vld [vmem:[%s177 + $0x90] sm:$0xff]
        %v278 = vld [vmem:[%s177 + $0x98] sm:$0xff]
        %v279 = vld [vmem:[%s177 + $0xa0] sm:$0xff]
        %v280 = vld [vmem:[%s177 + $0xa8] sm:$0xff]
        %v281 = vld [vmem:[%s177 + $0xb0] sm:$0xff]
        %v282 = vld [vmem:[%s177 + $0xb8] sm:$0xff]
        %v283 = vld [vmem:[%s177 + $0xc0] sm:$0xff]
        %v284 = vld [vmem:[%s177 + $0xc8] sm:$0xff]
        %v285 = vld [vmem:[%s177 + $0xd0] sm:$0xff]
        %v286 = vld [vmem:[%s177 + $0xd8] sm:$0xff]
        %v287 = vld [vmem:[%s177 + $0xe0] sm:$0xff]
        %v288 = vld [vmem:[%s177 + $0xe8] sm:$0xff]
        %v289 = vld [vmem:[%s177 + $0xf0] sm:$0xff]
        %v290 = vld [vmem:[%s177 + $0xf8] sm:$0xff]
        %vm291 = vsmask.f32 256
        %vm292 = vsmask.f32 4368
        %vm293 = vmor %vm291, %vm292
        %v295 = vshrl.u32 %v259, 16
        %v297 = vrot.slane %v295, 7
        %v298 = vshll.u32 %v259, 16
        %v300 = vor.u32 %v297, %v298
        %v301 = vrot.slane %v297, 4
        %v303 = vshrl.u32 %v260, 16
        %v305 = vrot.slane %v303, 7
        %v306 = vshll.u32 %v260, 16
        %v308 = vor.u32 %v305, %v306
        %v309 = vsel %vm293, %v301, %v308
        %v310 = vrot.slane %v305, 4
        %v312 = vshrl.u32 %v261, 16
        %v314 = vrot.slane %v312, 7
        %v315 = vshll.u32 %v261, 16
        %v317 = vor.u32 %v314, %v315
        %v318 = vrot.slane %v314, 4
        %v320 = vshrl.u32 %v262, 16
        %v322 = vrot.slane %v320, 7
        %v323 = vshll.u32 %v262, 16
        %v325 = vor.u32 %v322, %v323
        %v326 = vsel %vm293, %v318, %v325
        %v327 = vrot.slane %v322, 4
        %v329 = vshrl.u32 %v263, 16
        %v331 = vrot.slane %v329, 7
        %v332 = vshll.u32 %v263, 16
        %v334 = vor.u32 %v331, %v332
        %v335 = vrot.slane %v331, 4
        %v337 = vshrl.u32 %v264, 16
        %v339 = vrot.slane %v337, 7
        %v340 = vshll.u32 %v264, 16
        %v342 = vor.u32 %v339, %v340
        %v343 = vsel %vm293, %v335, %v342
        %v344 = vrot.slane %v339, 4
        %v346 = vshrl.u32 %v265, 16
        %v348 = vrot.slane %v346, 7
        %v349 = vshll.u32 %v265, 16
        %v351 = vor.u32 %v348, %v349
        %v352 = vrot.slane %v348, 4
        %v354 = vshrl.u32 %v266, 16
        %v356 = vrot.slane %v354, 7
        %v357 = vshll.u32 %v266, 16
        %v359 = vor.u32 %v356, %v357
        %v360 = vsel %vm293, %v352, %v359
        %v361 = vrot.slane %v356, 4
        %v363 = vshrl.u32 %v267, 16
        %v365 = vrot.slane %v363, 7
        %v366 = vshll.u32 %v267, 16
        %v368 = vor.u32 %v365, %v366
        %v369 = vrot.slane %v365, 4
        %v371 = vshrl.u32 %v268, 16
        %v373 = vrot.slane %v371, 7
        %v374 = vshll.u32 %v268, 16
        %v376 = vor.u32 %v373, %v374
        %v377 = vsel %vm293, %v369, %v376
        %v378 = vrot.slane %v373, 4
        %v380 = vshrl.u32 %v269, 16
        %v382 = vrot.slane %v380, 7
        %v383 = vshll.u32 %v269, 16
        %v385 = vor.u32 %v382, %v383
        %v386 = vrot.slane %v382, 4
        %v388 = vshrl.u32 %v270, 16
        %v390 = vrot.slane %v388, 7
        %v391 = vshll.u32 %v270, 16
        %v393 = vor.u32 %v390, %v391
        %v394 = vsel %vm293, %v386, %v393
        %v395 = vrot.slane %v390, 4
        %v397 = vshrl.u32 %v271, 16
        %v399 = vrot.slane %v397, 7
        %v400 = vshll.u32 %v271, 16
        %v402 = vor.u32 %v399, %v400
        %v403 = vrot.slane %v399, 4
        %v405 = vshrl.u32 %v272, 16
        %v407 = vrot.slane %v405, 7
        %v408 = vshll.u32 %v272, 16
        %v410 = vor.u32 %v407, %v408
        %v411 = vsel %vm293, %v403, %v410
        %v412 = vrot.slane %v407, 4
        %v414 = vshrl.u32 %v273, 16
        %v416 = vrot.slane %v414, 7
        %v417 = vshll.u32 %v273, 16
        %v419 = vor.u32 %v416, %v417
        %v420 = vrot.slane %v416, 4
        %v422 = vshrl.u32 %v274, 16
        %v424 = vrot.slane %v422, 7
        %v425 = vshll.u32 %v274, 16
        %v427 = vor.u32 %v424, %v425
        %v428 = vsel %vm293, %v420, %v427
        %v429 = vrot.slane %v424, 4
        %v431 = vshrl.u32 %v275, 16
        %v433 = vrot.slane %v431, 7
        %v434 = vshll.u32 %v275, 16
        %v436 = vor.u32 %v433, %v434
        %v437 = vrot.slane %v433, 4
        %v439 = vshrl.u32 %v276, 16
        %v441 = vrot.slane %v439, 7
        %v442 = vshll.u32 %v276, 16
        %v444 = vor.u32 %v441, %v442
        %v445 = vsel %vm293, %v437, %v444
        %v446 = vrot.slane %v441, 4
        %v448 = vshrl.u32 %v277, 16
        %v450 = vrot.slane %v448, 7
        %v451 = vshll.u32 %v277, 16
        %v453 = vor.u32 %v450, %v451
        %v454 = vrot.slane %v450, 4
        %v456 = vshrl.u32 %v278, 16
        %v458 = vrot.slane %v456, 7
        %v459 = vshll.u32 %v278, 16
        %v461 = vor.u32 %v458, %v459
        %v462 = vsel %vm293, %v454, %v461
        %v463 = vrot.slane %v458, 4
        %v465 = vshrl.u32 %v279, 16
        %v467 = vrot.slane %v465, 7
        %v468 = vshll.u32 %v279, 16
        %v470 = vor.u32 %v467, %v468
        %v471 = vrot.slane %v467, 4
        %v473 = vshrl.u32 %v280, 16
        %v475 = vrot.slane %v473, 7
        %v476 = vshll.u32 %v280, 16
        %v478 = vor.u32 %v475, %v476
        %v479 = vsel %vm293, %v471, %v478
        %v480 = vrot.slane %v475, 4
        %v482 = vshrl.u32 %v281, 16
        %v484 = vrot.slane %v482, 7
        %v485 = vshll.u32 %v281, 16
        %v487 = vor.u32 %v484, %v485
        %v488 = vrot.slane %v484, 4
        %v490 = vshrl.u32 %v282, 16
        %v492 = vrot.slane %v490, 7
        %v493 = vshll.u32 %v282, 16
        %v495 = vor.u32 %v492, %v493
        %v496 = vsel %vm293, %v488, %v495
        %v497 = vrot.slane %v492, 4
        %v499 = vshrl.u32 %v283, 16
        %v501 = vrot.slane %v499, 7
        %v502 = vshll.u32 %v283, 16
        %v504 = vor.u32 %v501, %v502
        %v505 = vrot.slane %v501, 4
        %v507 = vshrl.u32 %v284, 16
        %v509 = vrot.slane %v507, 7
        %v510 = vshll.u32 %v284, 16
        %v512 = vor.u32 %v509, %v510
        %v513 = vsel %vm293, %v505, %v512
        %v514 = vrot.slane %v509, 4
        %v516 = vshrl.u32 %v285, 16
        %v518 = vrot.slane %v516, 7
        %v519 = vshll.u32 %v285, 16
        %v521 = vor.u32 %v518, %v519
        %v522 = vrot.slane %v518, 4
        %v524 = vshrl.u32 %v286, 16
        %v526 = vrot.slane %v524, 7
        %v527 = vshll.u32 %v286, 16
        %v529 = vor.u32 %v526, %v527
        %v530 = vsel %vm293, %v522, %v529
        %v531 = vrot.slane %v526, 4
        %v533 = vshrl.u32 %v287, 16
        %v535 = vrot.slane %v533, 7
        %v536 = vshll.u32 %v287, 16
        %v538 = vor.u32 %v535, %v536
        %v539 = vrot.slane %v535, 4
        %v541 = vshrl.u32 %v288, 16
        %v543 = vrot.slane %v541, 7
        %v544 = vshll.u32 %v288, 16
        %v546 = vor.u32 %v543, %v544
        %v547 = vsel %vm293, %v539, %v546
        %v548 = vrot.slane %v543, 4
        %v550 = vshrl.u32 %v289, 16
        %v552 = vrot.slane %v550, 7
        %v553 = vshll.u32 %v289, 16
        %v555 = vor.u32 %v552, %v553
        %v556 = vrot.slane %v552, 4
        %v558 = vshrl.u32 %v290, 16
        %v560 = vrot.slane %v558, 7
        %v561 = vshll.u32 %v290, 16
        %v563 = vor.u32 %v560, %v561
        %v564 = vsel %vm293, %v556, %v563
        %v565 = vrot.slane %v560, 4
        %s614 = scalar_lea.vmem [#allocation2], 24
        %vm615 = vcmask 1043456
        %vm616 = vsmask.f32 7938
        %vm617 = vmand %vm615, %vm616
        %vm618 = vcmask 1047556
        %vm619 = vsmask.f32 7954
        %vm620 = vmand %vm618, %vm619
        %vm621 = vmor %vm620, %vm617
        %v622 = vld [vmem:[%s614] sm:$0xff]
        %v623 = vsel %vm621, %v300, %v622
        %624 = vst [vmem:[%s614] sm:$0xff] %v623
        %625 = vst [vmem:[%s614 + $0x8] sm:$0xff] %v309
        %vm626 = vcmask 1040384
        %vm627 = vmand %vm626, %vm291
        %vm628 = vcmask 1044484
        %vm629 = vsmask.f32 4352
        %vm630 = vmand %vm628, %vm629
        %vm631 = vmor %vm630, %vm627
        %v632 = vld [vmem:[%s614 + $0x10] sm:$0x11]
        %v633 = vsel %vm631, %v310, %v632
        %634 = vst [vmem:[%s614 + $0x10] sm:$0x11] %v633
        %v635 = vld [vmem:[%s614 + $0x18] sm:$0xff]
        %v636 = vsel %vm621, %v317, %v635
        %637 = vst [vmem:[%s614 + $0x18] sm:$0xff] %v636
        %638 = vst [vmem:[%s614 + $0x20] sm:$0xff] %v326
        %v639 = vld [vmem:[%s614 + $0x28] sm:$0x11]
        %v640 = vsel %vm631, %v327, %v639
        %641 = vst [vmem:[%s614 + $0x28] sm:$0x11] %v640
        %v642 = vld [vmem:[%s614 + $0x30] sm:$0xff]
        %v643 = vsel %vm621, %v334, %v642
        %644 = vst [vmem:[%s614 + $0x30] sm:$0xff] %v643
        %645 = vst [vmem:[%s614 + $0x38] sm:$0xff] %v343
        %v646 = vld [vmem:[%s614 + $0x40] sm:$0x11]
        %v647 = vsel %vm631, %v344, %v646
        %648 = vst [vmem:[%s614 + $0x40] sm:$0x11] %v647
        %v649 = vld [vmem:[%s614 + $0x48] sm:$0xff]
        %v650 = vsel %vm621, %v351, %v649
        %651 = vst [vmem:[%s614 + $0x48] sm:$0xff] %v650
        %652 = vst [vmem:[%s614 + $0x50] sm:$0xff] %v360
        %v653 = vld [vmem:[%s614 + $0x58] sm:$0x11]
        %v654 = vsel %vm631, %v361, %v653
        %655 = vst [vmem:[%s614 + $0x58] sm:$0x11] %v654
        %v656 = vld [vmem:[%s614 + $0x60] sm:$0xff]
        %v657 = vsel %vm621, %v368, %v656
        %658 = vst [vmem:[%s614 + $0x60] sm:$0xff] %v657
        %659 = vst [vmem:[%s614 + $0x68] sm:$0xff] %v377
        %v660 = vld [vmem:[%s614 + $0x70] sm:$0x11]
        %v661 = vsel %vm631, %v378, %v660
        %662 = vst [vmem:[%s614 + $0x70] sm:$0x11] %v661
        %v663 = vld [vmem:[%s614 + $0x78] sm:$0xff]
        %v664 = vsel %vm621, %v385, %v663
        %665 = vst [vmem:[%s614 + $0x78] sm:$0xff] %v664
        %666 = vst [vmem:[%s614 + $0x80] sm:$0xff] %v394
        %v667 = vld [vmem:[%s614 + $0x88] sm:$0x11]
        %v668 = vsel %vm631, %v395, %v667
        %669 = vst [vmem:[%s614 + $0x88] sm:$0x11] %v668
        %v670 = vld [vmem:[%s614 + $0x90] sm:$0xff]
        %v671 = vsel %vm621, %v402, %v670
        %672 = vst [vmem:[%s614 + $0x90] sm:$0xff] %v671
        %673 = vst [vmem:[%s614 + $0x98] sm:$0xff] %v411
        %v674 = vld [vmem:[%s614 + $0xa0] sm:$0x11]
        %v675 = vsel %vm631, %v412, %v674
        %676 = vst [vmem:[%s614 + $0xa0] sm:$0x11] %v675
        %v677 = vld [vmem:[%s614 + $0xa8] sm:$0xff]
        %v678 = vsel %vm621, %v419, %v677
        %679 = vst [vmem:[%s614 + $0xa8] sm:$0xff] %v678
        %680 = vst [vmem:[%s614 + $0xb0] sm:$0xff] %v428
        %v681 = vld [vmem:[%s614 + $0xb8] sm:$0x11]
        %v682 = vsel %vm631, %v429, %v681
        %683 = vst [vmem:[%s614 + $0xb8] sm:$0x11] %v682
        %v684 = vld [vmem:[%s614 + $0xc0] sm:$0xff]
        %v685 = vsel %vm621, %v436, %v684
        %686 = vst [vmem:[%s614 + $0xc0] sm:$0xff] %v685
        %687 = vst [vmem:[%s614 + $0xc8] sm:$0xff] %v445
        %v688 = vld [vmem:[%s614 + $0xd0] sm:$0x11]
        %v689 = vsel %vm631, %v446, %v688
        %690 = vst [vmem:[%s614 + $0xd0] sm:$0x11] %v689
        %v691 = vld [vmem:[%s614 + $0xd8] sm:$0xff]
        %v692 = vsel %vm621, %v453, %v691
        %693 = vst [vmem:[%s614 + $0xd8] sm:$0xff] %v692
        %694 = vst [vmem:[%s614 + $0xe0] sm:$0xff] %v462
        %v695 = vld [vmem:[%s614 + $0xe8] sm:$0x11]
        %v696 = vsel %vm631, %v463, %v695
        %697 = vst [vmem:[%s614 + $0xe8] sm:$0x11] %v696
        %v698 = vld [vmem:[%s614 + $0xf0] sm:$0xff]
        %v699 = vsel %vm621, %v470, %v698
        %700 = vst [vmem:[%s614 + $0xf0] sm:$0xff] %v699
        %701 = vst [vmem:[%s614 + $0xf8] sm:$0xff] %v479
        %v702 = vld [vmem:[%s614 + $0x100] sm:$0x11]
        %v703 = vsel %vm631, %v480, %v702
        %704 = vst [vmem:[%s614 + $0x100] sm:$0x11] %v703
        %v705 = vld [vmem:[%s614 + $0x108] sm:$0xff]
        %v706 = vsel %vm621, %v487, %v705
        %707 = vst [vmem:[%s614 + $0x108] sm:$0xff] %v706
        %708 = vst [vmem:[%s614 + $0x110] sm:$0xff] %v496
        %v709 = vld [vmem:[%s614 + $0x118] sm:$0x11]
        %v710 = vsel %vm631, %v497, %v709
        %711 = vst [vmem:[%s614 + $0x118] sm:$0x11] %v710
        %v712 = vld [vmem:[%s614 + $0x120] sm:$0xff]
        %v713 = vsel %vm621, %v504, %v712
        %714 = vst [vmem:[%s614 + $0x120] sm:$0xff] %v713
        %715 = vst [vmem:[%s614 + $0x128] sm:$0xff] %v513
        %v716 = vld [vmem:[%s614 + $0x130] sm:$0x11]
        %v717 = vsel %vm631, %v514, %v716
        %718 = vst [vmem:[%s614 + $0x130] sm:$0x11] %v717
        %v719 = vld [vmem:[%s614 + $0x138] sm:$0xff]
        %v720 = vsel %vm621, %v521, %v719
        %721 = vst [vmem:[%s614 + $0x138] sm:$0xff] %v720
        %722 = vst [vmem:[%s614 + $0x140] sm:$0xff] %v530
        %v723 = vld [vmem:[%s614 + $0x148] sm:$0x11]
        %v724 = vsel %vm631, %v531, %v723
        %725 = vst [vmem:[%s614 + $0x148] sm:$0x11] %v724
        %v726 = vld [vmem:[%s614 + $0x150] sm:$0xff]
        %v727 = vsel %vm621, %v538, %v726
        %728 = vst [vmem:[%s614 + $0x150] sm:$0xff] %v727
        %729 = vst [vmem:[%s614 + $0x158] sm:$0xff] %v547
        %v730 = vld [vmem:[%s614 + $0x160] sm:$0x11]
        %v731 = vsel %vm631, %v548, %v730
        %732 = vst [vmem:[%s614 + $0x160] sm:$0x11] %v731
        %v733 = vld [vmem:[%s614 + $0x168] sm:$0xff]
        %v734 = vsel %vm621, %v555, %v733
        %735 = vst [vmem:[%s614 + $0x168] sm:$0xff] %v734
        %736 = vst [vmem:[%s614 + $0x170] sm:$0xff] %v564
        %v737 = vld [vmem:[%s614 + $0x178] sm:$0x11]
        %v738 = vsel %vm631, %v565, %v737
        %739 = vst [vmem:[%s614 + $0x178] sm:$0x11] %v738
        %v740 = vld [vmem:[#allocation2] sm:$0xff]
        %v741 = vld [vmem:[#allocation2 + $0x8] sm:$0xff]
        %v742 = vld [vmem:[#allocation2 + $0x18] sm:$0xff]
        %v743 = vld [vmem:[#allocation2 + $0x20] sm:$0xff]
        %v744 = vld [vmem:[#allocation2 + $0x30] sm:$0xff]
        %v745 = vld [vmem:[#allocation2 + $0x38] sm:$0xff]
        %v746 = vld [vmem:[#allocation2 + $0x48] sm:$0xff]
        %v747 = vld [vmem:[#allocation2 + $0x50] sm:$0xff]
        %v748 = vld [vmem:[#allocation2 + $0x60] sm:$0xff]
        %v749 = vld [vmem:[#allocation2 + $0x68] sm:$0xff]
        %v750 = vld [vmem:[#allocation2 + $0x78] sm:$0xff]
        %v751 = vld [vmem:[#allocation2 + $0x80] sm:$0xff]
        %v752 = vld [vmem:[#allocation2 + $0x90] sm:$0xff]
        %v753 = vld [vmem:[#allocation2 + $0x98] sm:$0xff]
        %v754 = vld [vmem:[#allocation2 + $0xa8] sm:$0xff]
        %v755 = vld [vmem:[#allocation2 + $0xb0] sm:$0xff]
        %v756 = vld [vmem:[#allocation2 + $0xc0] sm:$0xff]
        %v757 = vld [vmem:[#allocation2 + $0xc8] sm:$0xff]
        %v758 = vld [vmem:[#allocation2 + $0xd8] sm:$0xff]
        %v759 = vld [vmem:[#allocation2 + $0xe0] sm:$0xff]
        %v760 = vld [vmem:[#allocation2 + $0xf0] sm:$0xff]
        %v761 = vld [vmem:[#allocation2 + $0xf8] sm:$0xff]
        %v762 = vld [vmem:[#allocation2 + $0x108] sm:$0xff]
        %v763 = vld [vmem:[#allocation2 + $0x110] sm:$0xff]
        %v764 = vld [vmem:[#allocation2 + $0x120] sm:$0xff]
        %v765 = vld [vmem:[#allocation2 + $0x128] sm:$0xff]
        %v766 = vld [vmem:[#allocation2 + $0x138] sm:$0xff]
        %v767 = vld [vmem:[#allocation2 + $0x140] sm:$0xff]
        %v768 = vld [vmem:[#allocation2 + $0x150] sm:$0xff]
        %v769 = vld [vmem:[#allocation2 + $0x158] sm:$0xff]
        %v770 = vld [vmem:[#allocation2 + $0x168] sm:$0xff]
        %v771 = vld [vmem:[#allocation2 + $0x170] sm:$0xff]
        %v772 = vld [vmem:[#allocation6] sm:$0xff]
        %v773 = vld [vmem:[#allocation2 + $0x10] sm:$0x11]
        %v774 = vld [vmem:[#allocation2 + $0x28] sm:$0x11]
        %v775 = vld [vmem:[#allocation2 + $0x40] sm:$0x11]
        %v776 = vld [vmem:[#allocation2 + $0x58] sm:$0x11]
        %v777 = vld [vmem:[#allocation2 + $0x70] sm:$0x11]
        %v778 = vld [vmem:[#allocation2 + $0x88] sm:$0x11]
        %v779 = vld [vmem:[#allocation2 + $0xa0] sm:$0x11]
        %v780 = vld [vmem:[#allocation2 + $0xb8] sm:$0x11]
        %v781 = vld [vmem:[#allocation2 + $0xd0] sm:$0x11]
        %v782 = vld [vmem:[#allocation2 + $0xe8] sm:$0x11]
        %v783 = vld [vmem:[#allocation2 + $0x100] sm:$0x11]
        %v784 = vld [vmem:[#allocation2 + $0x118] sm:$0x11]
        %v785 = vld [vmem:[#allocation2 + $0x130] sm:$0x11]
        %v786 = vld [vmem:[#allocation2 + $0x148] sm:$0x11]
        %v787 = vld [vmem:[#allocation2 + $0x160] sm:$0x11]
        %v788 = vld [vmem:[#allocation2 + $0x178] sm:$0x11]
        %vm789 = vsmask.f32 3328
        %vm790 = vsmask.f32 7440
        %vm791 = vmor %vm789, %vm790
        %v793 = vshrl.u32 %v740, 16
        %v795 = vrot.slane %v793, 4
        %v796 = vshll.u32 %v740, 16
        %v798 = vrot.slane %v796, 5
        %v799 = vor.u32 %v795, %v798
        %v800 = vrot.slane %v799, 4
        %v802 = vshll.u32 %v741, 16
        %v804 = vrot.slane %v802, 5
        %v805 = vsel %vm791, %v800, %v804
        %v806 = vshrl.u32 %v741, 16
        %v808 = vrot.slane %v806, 4
        %v809 = vor.u32 %v808, %v804
        %v810 = vrot.slane %v809, 4
        %v812 = vshll.u32 %v773, 16
        %v814 = vrot.slane %v812, 5
        %v815 = vsel %vm791, %v810, %v814
        %v817 = vshrl.u32 %v742, 16
        %v819 = vrot.slane %v817, 4
        %v820 = vshll.u32 %v742, 16
        %v822 = vrot.slane %v820, 5
        %v823 = vor.u32 %v819, %v822
        %v824 = vrot.slane %v823, 4
        %v826 = vshll.u32 %v743, 16
        %v828 = vrot.slane %v826, 5
        %v829 = vsel %vm791, %v824, %v828
        %v830 = vshrl.u32 %v743, 16
        %v832 = vrot.slane %v830, 4
        %v833 = vor.u32 %v832, %v828
        %v834 = vrot.slane %v833, 4
        %v836 = vshll.u32 %v774, 16
        %v838 = vrot.slane %v836, 5
        %v839 = vsel %vm791, %v834, %v838
        %v841 = vshrl.u32 %v744, 16
        %v843 = vrot.slane %v841, 4
        %v844 = vshll.u32 %v744, 16
        %v846 = vrot.slane %v844, 5
        %v847 = vor.u32 %v843, %v846
        %v848 = vrot.slane %v847, 4
        %v850 = vshll.u32 %v745, 16
        %v852 = vrot.slane %v850, 5
        %v853 = vsel %vm791, %v848, %v852
        %v854 = vshrl.u32 %v745, 16
        %v856 = vrot.slane %v854, 4
        %v857 = vor.u32 %v856, %v852
        %v858 = vrot.slane %v857, 4
        %v860 = vshll.u32 %v775, 16
        %v862 = vrot.slane %v860, 5
        %v863 = vsel %vm791, %v858, %v862
        %v865 = vshrl.u32 %v746, 16
        %v867 = vrot.slane %v865, 4
        %v868 = vshll.u32 %v746, 16
        %v870 = vrot.slane %v868, 5
        %v871 = vor.u32 %v867, %v870
        %v872 = vrot.slane %v871, 4
        %v874 = vshll.u32 %v747, 16
        %v876 = vrot.slane %v874, 5
        %v877 = vsel %vm791, %v872, %v876
        %v878 = vshrl.u32 %v747, 16
        %v880 = vrot.slane %v878, 4
        %v881 = vor.u32 %v880, %v876
        %v882 = vrot.slane %v881, 4
        %v884 = vshll.u32 %v776, 16
        %v886 = vrot.slane %v884, 5
        %v887 = vsel %vm791, %v882, %v886
        %v889 = vshrl.u32 %v748, 16
        %v891 = vrot.slane %v889, 4
        %v892 = vshll.u32 %v748, 16
        %v894 = vrot.slane %v892, 5
        %v895 = vor.u32 %v891, %v894
        %v896 = vrot.slane %v895, 4
        %v898 = vshll.u32 %v749, 16
        %v900 = vrot.slane %v898, 5
        %v901 = vsel %vm791, %v896, %v900
        %v902 = vshrl.u32 %v749, 16
        %v904 = vrot.slane %v902, 4
        %v905 = vor.u32 %v904, %v900
        %v906 = vrot.slane %v905, 4
        %v908 = vshll.u32 %v777, 16
        %v910 = vrot.slane %v908, 5
        %v911 = vsel %vm791, %v906, %v910
        %v913 = vshrl.u32 %v750, 16
        %v915 = vrot.slane %v913, 4
        %v916 = vshll.u32 %v750, 16
        %v918 = vrot.slane %v916, 5
        %v919 = vor.u32 %v915, %v918
        %v920 = vrot.slane %v919, 4
        %v922 = vshll.u32 %v751, 16
        %v924 = vrot.slane %v922, 5
        %v925 = vsel %vm791, %v920, %v924
        %v926 = vshrl.u32 %v751, 16
        %v928 = vrot.slane %v926, 4
        %v929 = vor.u32 %v928, %v924
        %v930 = vrot.slane %v929, 4
        %v932 = vshll.u32 %v778, 16
        %v934 = vrot.slane %v932, 5
        %v935 = vsel %vm791, %v930, %v934
        %v937 = vshrl.u32 %v752, 16
        %v939 = vrot.slane %v937, 4
        %v940 = vshll.u32 %v752, 16
        %v942 = vrot.slane %v940, 5
        %v943 = vor.u32 %v939, %v942
        %v944 = vrot.slane %v943, 4
        %v946 = vshll.u32 %v753, 16
        %v948 = vrot.slane %v946, 5
        %v949 = vsel %vm791, %v944, %v948
        %v950 = vshrl.u32 %v753, 16
        %v952 = vrot.slane %v950, 4
        %v953 = vor.u32 %v952, %v948
        %v954 = vrot.slane %v953, 4
        %v956 = vshll.u32 %v779, 16
        %v958 = vrot.slane %v956, 5
        %v959 = vsel %vm791, %v954, %v958
        %v961 = vshrl.u32 %v754, 16
        %v963 = vrot.slane %v961, 4
        %v964 = vshll.u32 %v754, 16
        %v966 = vrot.slane %v964, 5
        %v967 = vor.u32 %v963, %v966
        %v968 = vrot.slane %v967, 4
        %v970 = vshll.u32 %v755, 16
        %v972 = vrot.slane %v970, 5
        %v973 = vsel %vm791, %v968, %v972
        %v974 = vshrl.u32 %v755, 16
        %v976 = vrot.slane %v974, 4
        %v977 = vor.u32 %v976, %v972
        %v978 = vrot.slane %v977, 4
        %v980 = vshll.u32 %v780, 16
        %v982 = vrot.slane %v980, 5
        %v983 = vsel %vm791, %v978, %v982
        %v985 = vshrl.u32 %v756, 16
        %v987 = vrot.slane %v985, 4
        %v988 = vshll.u32 %v756, 16
        %v990 = vrot.slane %v988, 5
        %v991 = vor.u32 %v987, %v990
        %v992 = vrot.slane %v991, 4
        %v994 = vshll.u32 %v757, 16
        %v996 = vrot.slane %v994, 5
        %v997 = vsel %vm791, %v992, %v996
        %v998 = vshrl.u32 %v757, 16
        %v1000 = vrot.slane %v998, 4
        %v1001 = vor.u32 %v1000, %v996
        %v1002 = vrot.slane %v1001, 4
        %v1004 = vshll.u32 %v781, 16
        %v1006 = vrot.slane %v1004, 5
        %v1007 = vsel %vm791, %v1002, %v1006
        %v1009 = vshrl.u32 %v758, 16
        %v1011 = vrot.slane %v1009, 4
        %v1012 = vshll.u32 %v758, 16
        %v1014 = vrot.slane %v1012, 5
        %v1015 = vor.u32 %v1011, %v1014
        %v1016 = vrot.slane %v1015, 4
        %v1018 = vshll.u32 %v759, 16
        %v1020 = vrot.slane %v1018, 5
        %v1021 = vsel %vm791, %v1016, %v1020
        %v1022 = vshrl.u32 %v759, 16
        %v1024 = vrot.slane %v1022, 4
        %v1025 = vor.u32 %v1024, %v1020
        %v1026 = vrot.slane %v1025, 4
        %v1028 = vshll.u32 %v782, 16
        %v1030 = vrot.slane %v1028, 5
        %v1031 = vsel %vm791, %v1026, %v1030
        %v1033 = vshrl.u32 %v760, 16
        %v1035 = vrot.slane %v1033, 4
        %v1036 = vshll.u32 %v760, 16
        %v1038 = vrot.slane %v1036, 5
        %v1039 = vor.u32 %v1035, %v1038
        %v1040 = vrot.slane %v1039, 4
        %v1042 = vshll.u32 %v761, 16
        %v1044 = vrot.slane %v1042, 5
        %v1045 = vsel %vm791, %v1040, %v1044
        %v1046 = vshrl.u32 %v761, 16
        %v1048 = vrot.slane %v1046, 4
        %v1049 = vor.u32 %v1048, %v1044
        %v1050 = vrot.slane %v1049, 4
        %v1052 = vshll.u32 %v783, 16
        %v1054 = vrot.slane %v1052, 5
        %v1055 = vsel %vm791, %v1050, %v1054
        %v1057 = vshrl.u32 %v762, 16
        %v1059 = vrot.slane %v1057, 4
        %v1060 = vshll.u32 %v762, 16
        %v1062 = vrot.slane %v1060, 5
        %v1063 = vor.u32 %v1059, %v1062
        %v1064 = vrot.slane %v1063, 4
        %v1066 = vshll.u32 %v763, 16
        %v1068 = vrot.slane %v1066, 5
        %v1069 = vsel %vm791, %v1064, %v1068
        %v1070 = vshrl.u32 %v763, 16
        %v1072 = vrot.slane %v1070, 4
        %v1073 = vor.u32 %v1072, %v1068
        %v1074 = vrot.slane %v1073, 4
        %v1076 = vshll.u32 %v784, 16
        %v1078 = vrot.slane %v1076, 5
        %v1079 = vsel %vm791, %v1074, %v1078
        %v1081 = vshrl.u32 %v764, 16
        %v1083 = vrot.slane %v1081, 4
        %v1084 = vshll.u32 %v764, 16
        %v1086 = vrot.slane %v1084, 5
        %v1087 = vor.u32 %v1083, %v1086
        %v1088 = vrot.slane %v1087, 4
        %v1090 = vshll.u32 %v765, 16
        %v1092 = vrot.slane %v1090, 5
        %v1093 = vsel %vm791, %v1088, %v1092
        %v1094 = vshrl.u32 %v765, 16
        %v1096 = vrot.slane %v1094, 4
        %v1097 = vor.u32 %v1096, %v1092
        %v1098 = vrot.slane %v1097, 4
        %v1100 = vshll.u32 %v785, 16
        %v1102 = vrot.slane %v1100, 5
        %v1103 = vsel %vm791, %v1098, %v1102
        %v1105 = vshrl.u32 %v766, 16
        %v1107 = vrot.slane %v1105, 4
        %v1108 = vshll.u32 %v766, 16
        %v1110 = vrot.slane %v1108, 5
        %v1111 = vor.u32 %v1107, %v1110
        %v1112 = vrot.slane %v1111, 4
        %v1114 = vshll.u32 %v767, 16
        %v1116 = vrot.slane %v1114, 5
        %v1117 = vsel %vm791, %v1112, %v1116
        %v1118 = vshrl.u32 %v767, 16
        %v1120 = vrot.slane %v1118, 4
        %v1121 = vor.u32 %v1120, %v1116
        %v1122 = vrot.slane %v1121, 4
        %v1124 = vshll.u32 %v786, 16
        %v1126 = vrot.slane %v1124, 5
        %v1127 = vsel %vm791, %v1122, %v1126
        %v1129 = vshrl.u32 %v768, 16
        %v1131 = vrot.slane %v1129, 4
        %v1132 = vshll.u32 %v768, 16
        %v1134 = vrot.slane %v1132, 5
        %v1135 = vor.u32 %v1131, %v1134
        %v1136 = vrot.slane %v1135, 4
        %v1138 = vshll.u32 %v769, 16
        %v1140 = vrot.slane %v1138, 5
        %v1141 = vsel %vm791, %v1136, %v1140
        %v1142 = vshrl.u32 %v769, 16
        %v1144 = vrot.slane %v1142, 4
        %v1145 = vor.u32 %v1144, %v1140
        %v1146 = vrot.slane %v1145, 4
        %v1148 = vshll.u32 %v787, 16
        %v1150 = vrot.slane %v1148, 5
        %v1151 = vsel %vm791, %v1146, %v1150
        %v1153 = vshrl.u32 %v770, 16
        %v1155 = vrot.slane %v1153, 4
        %v1156 = vshll.u32 %v770, 16
        %v1158 = vrot.slane %v1156, 5
        %v1159 = vor.u32 %v1155, %v1158
        %v1160 = vrot.slane %v1159, 4
        %v1162 = vshll.u32 %v771, 16
        %v1164 = vrot.slane %v1162, 5
        %v1165 = vsel %vm791, %v1160, %v1164
        %v1166 = vshrl.u32 %v771, 16
        %v1168 = vrot.slane %v1166, 4
        %v1169 = vor.u32 %v1168, %v1164
        %v1170 = vrot.slane %v1169, 4
        %v1172 = vshll.u32 %v788, 16
        %v1174 = vrot.slane %v1172, 5
        %v1175 = vsel %vm791, %v1170, %v1174
        %s1176 = scalar_lea.vmem [#allocation6], 8
        %v1177 = vld [vmem:[%s1176] sm:$0xff]
        %v1179 = vunpack.c.l.b16 %v1177
        %v1180 = vunpack.c.h.b16 %v1177
        %v1181 = vpack.c.b16 %v1179, %v1179
        %v1182 = vpack.c.b16 %v1180, %v1180
        %v1185 = vunpack.c.l.b16 %v805
        %v1186 = vunpack.c.h.b16 %v805
        %v1187 = vunpack.c.l.b16 %v815
        %v1188 = vunpack.c.h.b16 %v815
        %v1189 = vunpack.c.l.b16 %v829
        %v1190 = vunpack.c.h.b16 %v829
        %v1191 = vunpack.c.l.b16 %v839
        %v1192 = vunpack.c.h.b16 %v839
        %v1193 = vunpack.c.l.b16 %v853
        %v1194 = vunpack.c.h.b16 %v853
        %v1195 = vunpack.c.l.b16 %v863
        %v1196 = vunpack.c.h.b16 %v863
        %v1197 = vunpack.c.l.b16 %v877
        %v1198 = vunpack.c.h.b16 %v877
        %v1199 = vunpack.c.l.b16 %v887
        %v1200 = vunpack.c.h.b16 %v887
        %v1201 = vunpack.c.l.b16 %v901
        %v1202 = vunpack.c.h.b16 %v901
        %v1203 = vunpack.c.l.b16 %v911
        %v1204 = vunpack.c.h.b16 %v911
        %v1205 = vunpack.c.l.b16 %v925
        %v1206 = vunpack.c.h.b16 %v925
        %v1207 = vunpack.c.l.b16 %v935
        %v1208 = vunpack.c.h.b16 %v935
        %v1209 = vunpack.c.l.b16 %v949
        %v1210 = vunpack.c.h.b16 %v949
        %v1211 = vunpack.c.l.b16 %v959
        %v1212 = vunpack.c.h.b16 %v959
        %v1213 = vunpack.c.l.b16 %v973
        %v1214 = vunpack.c.h.b16 %v973
        %v1215 = vunpack.c.l.b16 %v983
        %v1216 = vunpack.c.h.b16 %v983
        %v1217 = vunpack.c.l.b16 %v997
        %v1218 = vunpack.c.h.b16 %v997
        %v1219 = vunpack.c.l.b16 %v1007
        %v1220 = vunpack.c.h.b16 %v1007
        %v1221 = vunpack.c.l.b16 %v1021
        %v1222 = vunpack.c.h.b16 %v1021
        %v1223 = vunpack.c.l.b16 %v1031
        %v1224 = vunpack.c.h.b16 %v1031
        %v1225 = vunpack.c.l.b16 %v1045
        %v1226 = vunpack.c.h.b16 %v1045
        %v1227 = vunpack.c.l.b16 %v1055
        %v1228 = vunpack.c.h.b16 %v1055
        %v1229 = vunpack.c.l.b16 %v1069
        %v1230 = vunpack.c.h.b16 %v1069
        %v1231 = vunpack.c.l.b16 %v1079
        %v1232 = vunpack.c.h.b16 %v1079
        %v1233 = vunpack.c.l.b16 %v1093
        %v1234 = vunpack.c.h.b16 %v1093
        %v1235 = vunpack.c.l.b16 %v1103
        %v1236 = vunpack.c.h.b16 %v1103
        %v1237 = vunpack.c.l.b16 %v1117
        %v1238 = vunpack.c.h.b16 %v1117
        %v1239 = vunpack.c.l.b16 %v1127
        %v1240 = vunpack.c.h.b16 %v1127
        %v1241 = vunpack.c.l.b16 %v1141
        %v1242 = vunpack.c.h.b16 %v1141
        %v1243 = vunpack.c.l.b16 %v1151
        %v1244 = vunpack.c.h.b16 %v1151
        %v1245 = vunpack.c.l.b16 %v1165
        %v1246 = vunpack.c.h.b16 %v1165
        %v1247 = vunpack.c.l.b16 %v1175
        %v1248 = vunpack.c.h.b16 %v1175
        %v1249 = vpack.c.b16 %v1187, %v1185
        %v1250 = vpack.c.b16 %v1188, %v1186
        %v1251 = vpack.c.b16 %v1191, %v1189
        %v1252 = vpack.c.b16 %v1192, %v1190
        %v1253 = vpack.c.b16 %v1195, %v1193
        %v1254 = vpack.c.b16 %v1196, %v1194
        %v1255 = vpack.c.b16 %v1199, %v1197
        %v1256 = vpack.c.b16 %v1200, %v1198
        %v1257 = vpack.c.b16 %v1203, %v1201
        %v1258 = vpack.c.b16 %v1204, %v1202
        %v1259 = vpack.c.b16 %v1207, %v1205
        %v1260 = vpack.c.b16 %v1208, %v1206
        %v1261 = vpack.c.b16 %v1211, %v1209
        %v1262 = vpack.c.b16 %v1212, %v1210
        %v1263 = vpack.c.b16 %v1215, %v1213
        %v1264 = vpack.c.b16 %v1216, %v1214
        %v1265 = vpack.c.b16 %v1219, %v1217
        %v1266 = vpack.c.b16 %v1220, %v1218
        %v1267 = vpack.c.b16 %v1223, %v1221
        %v1268 = vpack.c.b16 %v1224, %v1222
        %v1269 = vpack.c.b16 %v1227, %v1225
        %v1270 = vpack.c.b16 %v1228, %v1226
        %v1271 = vpack.c.b16 %v1231, %v1229
        %v1272 = vpack.c.b16 %v1232, %v1230
        %v1273 = vpack.c.b16 %v1235, %v1233
        %v1274 = vpack.c.b16 %v1236, %v1234
        %v1275 = vpack.c.b16 %v1239, %v1237
        %v1276 = vpack.c.b16 %v1240, %v1238
        %v1277 = vpack.c.b16 %v1243, %v1241
        %v1278 = vpack.c.b16 %v1244, %v1242
        %v1279 = vpack.c.b16 %v1247, %v1245
        %v1280 = vpack.c.b16 %v1248, %v1246
        %1313 = vmatprep.subr.bf16.mxu0 %v1250
        %1314 = vmatpush1.bf16.xpose.msra.mxu0 %v1249
        %1315 = vmatprep.subr.bf16.mxu0 %v1252
        %1316 = vmatpush1.bf16.xpose.msra.mxu0 %v1251
        %1317 = vmatprep.subr.bf16.mxu0 %v1254
        %1318 = vmatpush1.bf16.xpose.msra.mxu0 %v1253
        %1319 = vmatprep.subr.bf16.mxu0 %v1256
        %1320 = vmatpush1.bf16.xpose.msra.mxu0 %v1255
        %1321 = vmatprep.subr.bf16.mxu0 %v1258
        %1322 = vmatpush1.bf16.xpose.msra.mxu0 %v1257
        %1323 = vmatprep.subr.bf16.mxu0 %v1260
        %1324 = vmatpush1.bf16.xpose.msra.mxu0 %v1259
        %1325 = vmatprep.subr.bf16.mxu0 %v1262
        %1326 = vmatpush1.bf16.xpose.msra.mxu0 %v1261
        %1327 = vmatprep.subr.bf16.mxu0 %v1264
        %1328 = vmatpush1.bf16.xpose.msra.mxu0 %v1263
        %1329 = vmatprep.subr.bf16.mxu0 %v1266
        %1330 = vmatpush1.bf16.xpose.msra.mxu0 %v1265
        %1331 = vmatprep.subr.bf16.mxu0 %v1268
        %1332 = vmatpush1.bf16.xpose.msra.mxu0 %v1267
        %1333 = vmatprep.subr.bf16.mxu0 %v1270
        %1334 = vmatpush1.bf16.xpose.msra.mxu0 %v1269
        %1335 = vmatprep.subr.bf16.mxu0 %v1272
        %1336 = vmatpush1.bf16.xpose.msra.mxu0 %v1271
        %1337 = vmatprep.subr.bf16.mxu0 %v1274
        %1338 = vmatpush1.bf16.xpose.msra.mxu0 %v1273
        %1339 = vmatprep.subr.bf16.mxu0 %v1276
        %1340 = vmatpush1.bf16.xpose.msra.mxu0 %v1275
        %1341 = vmatprep.subr.bf16.mxu0 %v1278
        %1342 = vmatpush1.bf16.xpose.msra.mxu0 %v1277
        %1343 = vmatprep.subr.bf16.mxu0 %v1280
        %1344 = vmatpush1.bf16.xpose.msra.mxu0 %v1279
        %1345 = vmatprep.mubr.bf16.mxu0 %v1182
        %1346 = vmatmul.mubr.bf16.gmra.mrb[0].mxu0 %v1181
        %v1347 = vpop.f32.mrb[0].mxu0
        %v1348 = vadd.f32 0.0, %v1347
        %v1349 = vpop.f32.mrb[0].mxu0
        %v1350 = vadd.f32 0.0, %v1349
        %v1351 = vpop.f32.mrb[0].mxu0
        %v1352 = vpop.f32.mrb[0].mxu0
        %1353 = vdwg.mxu0
        %v1355 = vunpack.c.l.b16 %v772
        %v1356 = vunpack.c.h.b16 %v772
        %v1357 = vpack.c.b16 %v1355, %v1355
        %v1358 = vpack.c.b16 %v1356, %v1356
        %v1393 = vunpack.c.l.b16 %v740
        %v1394 = vunpack.c.h.b16 %v740
        %v1395 = vunpack.c.l.b16 %v741
        %v1396 = vunpack.c.h.b16 %v741
        %v1397 = vunpack.c.l.b16 %v742
        %v1398 = vunpack.c.h.b16 %v742
        %v1399 = vunpack.c.l.b16 %v743
        %v1400 = vunpack.c.h.b16 %v743
        %v1401 = vunpack.c.l.b16 %v744
        %v1402 = vunpack.c.h.b16 %v744
        %v1403 = vunpack.c.l.b16 %v745
        %v1404 = vunpack.c.h.b16 %v745
        %v1405 = vunpack.c.l.b16 %v746
        %v1406 = vunpack.c.h.b16 %v746
        %v1407 = vunpack.c.l.b16 %v747
        %v1408 = vunpack.c.h.b16 %v747
        %v1409 = vunpack.c.l.b16 %v748
        %v1410 = vunpack.c.h.b16 %v748
        %v1411 = vunpack.c.l.b16 %v749
        %v1412 = vunpack.c.h.b16 %v749
        %v1413 = vunpack.c.l.b16 %v750
        %v1414 = vunpack.c.h.b16 %v750
        %v1415 = vunpack.c.l.b16 %v751
        %v1416 = vunpack.c.h.b16 %v751
        %v1417 = vunpack.c.l.b16 %v752
        %v1418 = vunpack.c.h.b16 %v752
        %v1419 = vunpack.c.l.b16 %v753
        %v1420 = vunpack.c.h.b16 %v753
        %v1421 = vunpack.c.l.b16 %v754
        %v1422 = vunpack.c.h.b16 %v754
        %v1423 = vunpack.c.l.b16 %v755
        %v1424 = vunpack.c.h.b16 %v755
        %v1425 = vunpack.c.l.b16 %v756
        %v1426 = vunpack.c.h.b16 %v756
        %v1427 = vunpack.c.l.b16 %v757
        %v1428 = vunpack.c.h.b16 %v757
        %v1429 = vunpack.c.l.b16 %v758
        %v1430 = vunpack.c.h.b16 %v758
        %v1431 = vunpack.c.l.b16 %v759
        %v1432 = vunpack.c.h.b16 %v759
        %v1433 = vunpack.c.l.b16 %v760
        %v1434 = vunpack.c.h.b16 %v760
        %v1435 = vunpack.c.l.b16 %v761
        %v1436 = vunpack.c.h.b16 %v761
        %v1437 = vunpack.c.l.b16 %v762
        %v1438 = vunpack.c.h.b16 %v762
        %v1439 = vunpack.c.l.b16 %v763
        %v1440 = vunpack.c.h.b16 %v763
        %v1441 = vunpack.c.l.b16 %v764
        %v1442 = vunpack.c.h.b16 %v764
        %v1443 = vunpack.c.l.b16 %v765
        %v1444 = vunpack.c.h.b16 %v765
        %v1445 = vunpack.c.l.b16 %v766
        %v1446 = vunpack.c.h.b16 %v766
        %v1447 = vunpack.c.l.b16 %v767
        %v1448 = vunpack.c.h.b16 %v767
        %v1449 = vunpack.c.l.b16 %v768
        %v1450 = vunpack.c.h.b16 %v768
        %v1451 = vunpack.c.l.b16 %v769
        %v1452 = vunpack.c.h.b16 %v769
        %v1453 = vunpack.c.l.b16 %v770
        %v1454 = vunpack.c.h.b16 %v770
        %v1455 = vunpack.c.l.b16 %v771
        %v1456 = vunpack.c.h.b16 %v771
        %v1457 = vpack.c.b16 %v1395, %v1393
        %v1458 = vpack.c.b16 %v1396, %v1394
        %v1459 = vpack.c.b16 %v1399, %v1397
        %v1460 = vpack.c.b16 %v1400, %v1398
        %v1461 = vpack.c.b16 %v1403, %v1401
        %v1462 = vpack.c.b16 %v1404, %v1402
        %v1463 = vpack.c.b16 %v1407, %v1405
        %v1464 = vpack.c.b16 %v1408, %v1406
        %v1465 = vpack.c.b16 %v1411, %v1409
        %v1466 = vpack.c.b16 %v1412, %v1410
        %v1467 = vpack.c.b16 %v1415, %v1413
        %v1468 = vpack.c.b16 %v1416, %v1414
        %v1469 = vpack.c.b16 %v1419, %v1417
        %v1470 = vpack.c.b16 %v1420, %v1418
        %v1471 = vpack.c.b16 %v1423, %v1421
        %v1472 = vpack.c.b16 %v1424, %v1422
        %v1473 = vpack.c.b16 %v1427, %v1425
        %v1474 = vpack.c.b16 %v1428, %v1426
        %v1475 = vpack.c.b16 %v1431, %v1429
        %v1476 = vpack.c.b16 %v1432, %v1430
        %v1477 = vpack.c.b16 %v1435, %v1433
        %v1478 = vpack.c.b16 %v1436, %v1434
        %v1479 = vpack.c.b16 %v1439, %v1437
        %v1480 = vpack.c.b16 %v1440, %v1438
        %v1481 = vpack.c.b16 %v1443, %v1441
        %v1482 = vpack.c.b16 %v1444, %v1442
        %v1483 = vpack.c.b16 %v1447, %v1445
        %v1484 = vpack.c.b16 %v1448, %v1446
        %v1485 = vpack.c.b16 %v1451, %v1449
        %v1486 = vpack.c.b16 %v1452, %v1450
        %v1487 = vpack.c.b16 %v1455, %v1453
        %v1488 = vpack.c.b16 %v1456, %v1454
        %1521 = vmatprep.subr.bf16.mxu0 %v1458
        %1522 = vmatpush1.bf16.xpose.msra.mxu0 %v1457
        %1523 = vmatprep.subr.bf16.mxu0 %v1460
        %1524 = vmatpush1.bf16.xpose.msra.mxu0 %v1459
        %1525 = vmatprep.subr.bf16.mxu0 %v1462
        %1526 = vmatpush1.bf16.xpose.msra.mxu0 %v1461
        %1527 = vmatprep.subr.bf16.mxu0 %v1464
        %1528 = vmatpush1.bf16.xpose.msra.mxu0 %v1463
        %1529 = vmatprep.subr.bf16.mxu0 %v1466
        %1530 = vmatpush1.bf16.xpose.msra.mxu0 %v1465
        %1531 = vmatprep.subr.bf16.mxu0 %v1468
        %1532 = vmatpush1.bf16.xpose.msra.mxu0 %v1467
        %1533 = vmatprep.subr.bf16.mxu0 %v1470
        %1534 = vmatpush1.bf16.xpose.msra.mxu0 %v1469
        %1535 = vmatprep.subr.bf16.mxu0 %v1472
        %1536 = vmatpush1.bf16.xpose.msra.mxu0 %v1471
        %1537 = vmatprep.subr.bf16.mxu0 %v1474
        %1538 = vmatpush1.bf16.xpose.msra.mxu0 %v1473
        %1539 = vmatprep.subr.bf16.mxu0 %v1476
        %1540 = vmatpush1.bf16.xpose.msra.mxu0 %v1475
        %1541 = vmatprep.subr.bf16.mxu0 %v1478
        %1542 = vmatpush1.bf16.xpose.msra.mxu0 %v1477
        %1543 = vmatprep.subr.bf16.mxu0 %v1480
        %1544 = vmatpush1.bf16.xpose.msra.mxu0 %v1479
        %1545 = vmatprep.subr.bf16.mxu0 %v1482
        %1546 = vmatpush1.bf16.xpose.msra.mxu0 %v1481
        %1547 = vmatprep.subr.bf16.mxu0 %v1484
        %1548 = vmatpush1.bf16.xpose.msra.mxu0 %v1483
        %1549 = vmatprep.subr.bf16.mxu0 %v1486
        %1550 = vmatpush1.bf16.xpose.msra.mxu0 %v1485
        %1551 = vmatprep.subr.bf16.mxu0 %v1488
        %1552 = vmatpush1.bf16.xpose.msra.mxu0 %v1487
        %1553 = vmatprep.mubr.bf16.mxu0 %v1358
        %1554 = vmatmul.mubr.bf16.gmra.mrb[0].mxu0 %v1357
        %v1555 = vpop.f32.mrb[0].mxu0
        %v1556 = vadd.f32 %v1348, %v1555
        %v1557 = vpop.f32.mrb[0].mxu0
        %v1558 = vadd.f32 %v1350, %v1557
        %v1559 = vpop.f32.mrb[0].mxu0
        %v1560 = vpop.f32.mrb[0].mxu0
        %1561 = vdwg.mxu0
        %v1562 = vld [vmem:[#allocation2] sm:$0xee]
        %v1563 = vld [vmem:[#allocation2 + $0x18] sm:$0xee]
        %v1564 = vld [vmem:[#allocation2 + $0x30] sm:$0xee]
        %v1565 = vld [vmem:[#allocation2 + $0x48] sm:$0xee]
        %v1566 = vld [vmem:[#allocation2 + $0x60] sm:$0xee]
        %v1567 = vld [vmem:[#allocation2 + $0x78] sm:$0xee]
        %v1568 = vld [vmem:[#allocation2 + $0x90] sm:$0xee]
        %v1569 = vld [vmem:[#allocation2 + $0xa8] sm:$0xee]
        %v1570 = vld [vmem:[#allocation2 + $0xc0] sm:$0xee]
        %v1571 = vld [vmem:[#allocation2 + $0xd8] sm:$0xee]
        %v1572 = vld [vmem:[#allocation2 + $0xf0] sm:$0xee]
        %v1573 = vld [vmem:[#allocation2 + $0x108] sm:$0xee]
        %v1574 = vld [vmem:[#allocation2 + $0x120] sm:$0xee]
        %v1575 = vld [vmem:[#allocation2 + $0x138] sm:$0xee]
        %v1576 = vld [vmem:[#allocation2 + $0x150] sm:$0xee]
        %v1577 = vld [vmem:[#allocation2 + $0x168] sm:$0xee]
        %vm1610 = vcmask 1042432
        %vm1611 = vcmask 1046532
        %vm1612 = vmor %vm1610, %vm1611
        %v1613 = vrot.slane %v1562, 5
        %v1614 = vrot.slane %v1613, 4
        %v1615 = vrot.slane %v741, 5
        %v1616 = vsel %vm1612, %v1614, %v1615
        %v1617 = vrot.slane %v1615, 4
        %v1618 = vrot.slane %v773, 5
        %v1619 = vsel %vm1612, %v1617, %v1618
        %v1620 = vrot.slane %v1563, 5
        %v1621 = vrot.slane %v1620, 4
        %v1622 = vrot.slane %v743, 5
        %v1623 = vsel %vm1612, %v1621, %v1622
        %v1624 = vrot.slane %v1622, 4
        %v1625 = vrot.slane %v774, 5
        %v1626 = vsel %vm1612, %v1624, %v1625
        %v1627 = vrot.slane %v1564, 5
        %v1628 = vrot.slane %v1627, 4
        %v1629 = vrot.slane %v745, 5
        %v1630 = vsel %vm1612, %v1628, %v1629
        %v1631 = vrot.slane %v1629, 4
        %v1632 = vrot.slane %v775, 5
        %v1633 = vsel %vm1612, %v1631, %v1632
        %v1634 = vrot.slane %v1565, 5
        %v1635 = vrot.slane %v1634, 4
        %v1636 = vrot.slane %v747, 5
        %v1637 = vsel %vm1612, %v1635, %v1636
        %v1638 = vrot.slane %v1636, 4
        %v1639 = vrot.slane %v776, 5
        %v1640 = vsel %vm1612, %v1638, %v1639
        %v1641 = vrot.slane %v1566, 5
        %v1642 = vrot.slane %v1641, 4
        %v1643 = vrot.slane %v749, 5
        %v1644 = vsel %vm1612, %v1642, %v1643
        %v1645 = vrot.slane %v1643, 4
        %v1646 = vrot.slane %v777, 5
        %v1647 = vsel %vm1612, %v1645, %v1646
        %v1648 = vrot.slane %v1567, 5
        %v1649 = vrot.slane %v1648, 4
        %v1650 = vrot.slane %v751, 5
        %v1651 = vsel %vm1612, %v1649, %v1650
        %v1652 = vrot.slane %v1650, 4
        %v1653 = vrot.slane %v778, 5
        %v1654 = vsel %vm1612, %v1652, %v1653
        %v1655 = vrot.slane %v1568, 5
        %v1656 = vrot.slane %v1655, 4
        %v1657 = vrot.slane %v753, 5
        %v1658 = vsel %vm1612, %v1656, %v1657
        %v1659 = vrot.slane %v1657, 4
        %v1660 = vrot.slane %v779, 5
        %v1661 = vsel %vm1612, %v1659, %v1660
        %v1662 = vrot.slane %v1569, 5
        %v1663 = vrot.slane %v1662, 4
        %v1664 = vrot.slane %v755, 5
        %v1665 = vsel %vm1612, %v1663, %v1664
        %v1666 = vrot.slane %v1664, 4
        %v1667 = vrot.slane %v780, 5
        %v1668 = vsel %vm1612, %v1666, %v1667
        %v1669 = vrot.slane %v1570, 5
        %v1670 = vrot.slane %v1669, 4
        %v1671 = vrot.slane %v757, 5
        %v1672 = vsel %vm1612, %v1670, %v1671
        %v1673 = vrot.slane %v1671, 4
        %v1674 = vrot.slane %v781, 5
        %v1675 = vsel %vm1612, %v1673, %v1674
        %v1676 = vrot.slane %v1571, 5
        %v1677 = vrot.slane %v1676, 4
        %v1678 = vrot.slane %v759, 5
        %v1679 = vsel %vm1612, %v1677, %v1678
        %v1680 = vrot.slane %v1678, 4
        %v1681 = vrot.slane %v782, 5
        %v1682 = vsel %vm1612, %v1680, %v1681
        %v1683 = vrot.slane %v1572, 5
        %v1684 = vrot.slane %v1683, 4
        %v1685 = vrot.slane %v761, 5
        %v1686 = vsel %vm1612, %v1684, %v1685
        %v1687 = vrot.slane %v1685, 4
        %v1688 = vrot.slane %v783, 5
        %v1689 = vsel %vm1612, %v1687, %v1688
        %v1690 = vrot.slane %v1573, 5
        %v1691 = vrot.slane %v1690, 4
        %v1692 = vrot.slane %v763, 5
        %v1693 = vsel %vm1612, %v1691, %v1692
        %v1694 = vrot.slane %v1692, 4
        %v1695 = vrot.slane %v784, 5
        %v1696 = vsel %vm1612, %v1694, %v1695
        %v1697 = vrot.slane %v1574, 5
        %v1698 = vrot.slane %v1697, 4
        %v1699 = vrot.slane %v765, 5
        %v1700 = vsel %vm1612, %v1698, %v1699
        %v1701 = vrot.slane %v1699, 4
        %v1702 = vrot.slane %v785, 5
        %v1703 = vsel %vm1612, %v1701, %v1702
        %v1704 = vrot.slane %v1575, 5
        %v1705 = vrot.slane %v1704, 4
        %v1706 = vrot.slane %v767, 5
        %v1707 = vsel %vm1612, %v1705, %v1706
        %v1708 = vrot.slane %v1706, 4
        %v1709 = vrot.slane %v786, 5
        %v1710 = vsel %vm1612, %v1708, %v1709
        %v1711 = vrot.slane %v1576, 5
        %v1712 = vrot.slane %v1711, 4
        %v1713 = vrot.slane %v769, 5
        %v1714 = vsel %vm1612, %v1712, %v1713
        %v1715 = vrot.slane %v1713, 4
        %v1716 = vrot.slane %v787, 5
        %v1717 = vsel %vm1612, %v1715, %v1716
        %v1718 = vrot.slane %v1577, 5
        %v1719 = vrot.slane %v1718, 4
        %v1720 = vrot.slane %v771, 5
        %v1721 = vsel %vm1612, %v1719, %v1720
        %v1722 = vrot.slane %v1720, 4
        %v1723 = vrot.slane %v788, 5
        %v1724 = vsel %vm1612, %v1722, %v1723
        %s1725 = scalar_lea.vmem [#allocation6], 16
        %v1726 = vld [vmem:[%s1725] sm:$0xff]
        %v1728 = vunpack.c.l.b16 %v1726
        %v1729 = vunpack.c.h.b16 %v1726
        %v1730 = vpack.c.b16 %v1728, %v1728
        %v1731 = vpack.c.b16 %v1729, %v1729
        %v1734 = vunpack.c.l.b16 %v1616
        %v1735 = vunpack.c.h.b16 %v1616
        %v1736 = vunpack.c.l.b16 %v1619
        %v1737 = vunpack.c.h.b16 %v1619
        %v1738 = vunpack.c.l.b16 %v1623
        %v1739 = vunpack.c.h.b16 %v1623
        %v1740 = vunpack.c.l.b16 %v1626
        %v1741 = vunpack.c.h.b16 %v1626
        %v1742 = vunpack.c.l.b16 %v1630
        %v1743 = vunpack.c.h.b16 %v1630
        %v1744 = vunpack.c.l.b16 %v1633
        %v1745 = vunpack.c.h.b16 %v1633
        %v1746 = vunpack.c.l.b16 %v1637
        %v1747 = vunpack.c.h.b16 %v1637
        %v1748 = vunpack.c.l.b16 %v1640
        %v1749 = vunpack.c.h.b16 %v1640
        %v1750 = vunpack.c.l.b16 %v1644
        %v1751 = vunpack.c.h.b16 %v1644
        %v1752 = vunpack.c.l.b16 %v1647
        %v1753 = vunpack.c.h.b16 %v1647
        %v1754 = vunpack.c.l.b16 %v1651
        %v1755 = vunpack.c.h.b16 %v1651
        %v1756 = vunpack.c.l.b16 %v1654
        %v1757 = vunpack.c.h.b16 %v1654
        %v1758 = vunpack.c.l.b16 %v1658
        %v1759 = vunpack.c.h.b16 %v1658
        %v1760 = vunpack.c.l.b16 %v1661
        %v1761 = vunpack.c.h.b16 %v1661
        %v1762 = vunpack.c.l.b16 %v1665
        %v1763 = vunpack.c.h.b16 %v1665
        %v1764 = vunpack.c.l.b16 %v1668
        %v1765 = vunpack.c.h.b16 %v1668
        %v1766 = vunpack.c.l.b16 %v1672
        %v1767 = vunpack.c.h.b16 %v1672
        %v1768 = vunpack.c.l.b16 %v1675
        %v1769 = vunpack.c.h.b16 %v1675
        %v1770 = vunpack.c.l.b16 %v1679
        %v1771 = vunpack.c.h.b16 %v1679
        %v1772 = vunpack.c.l.b16 %v1682
        %v1773 = vunpack.c.h.b16 %v1682
        %v1774 = vunpack.c.l.b16 %v1686
        %v1775 = vunpack.c.h.b16 %v1686
        %v1776 = vunpack.c.l.b16 %v1689
        %v1777 = vunpack.c.h.b16 %v1689
        %v1778 = vunpack.c.l.b16 %v1693
        %v1779 = vunpack.c.h.b16 %v1693
        %v1780 = vunpack.c.l.b16 %v1696
        %v1781 = vunpack.c.h.b16 %v1696
        %v1782 = vunpack.c.l.b16 %v1700
        %v1783 = vunpack.c.h.b16 %v1700
        %v1784 = vunpack.c.l.b16 %v1703
        %v1785 = vunpack.c.h.b16 %v1703
        %v1786 = vunpack.c.l.b16 %v1707
        %v1787 = vunpack.c.h.b16 %v1707
        %v1788 = vunpack.c.l.b16 %v1710
        %v1789 = vunpack.c.h.b16 %v1710
        %v1790 = vunpack.c.l.b16 %v1714
        %v1791 = vunpack.c.h.b16 %v1714
        %v1792 = vunpack.c.l.b16 %v1717
        %v1793 = vunpack.c.h.b16 %v1717
        %v1794 = vunpack.c.l.b16 %v1721
        %v1795 = vunpack.c.h.b16 %v1721
        %v1796 = vunpack.c.l.b16 %v1724
        %v1797 = vunpack.c.h.b16 %v1724
        %v1798 = vpack.c.b16 %v1736, %v1734
        %v1799 = vpack.c.b16 %v1737, %v1735
        %v1800 = vpack.c.b16 %v1740, %v1738
        %v1801 = vpack.c.b16 %v1741, %v1739
        %v1802 = vpack.c.b16 %v1744, %v1742
        %v1803 = vpack.c.b16 %v1745, %v1743
        %v1804 = vpack.c.b16 %v1748, %v1746
        %v1805 = vpack.c.b16 %v1749, %v1747
        %v1806 = vpack.c.b16 %v1752, %v1750
        %v1807 = vpack.c.b16 %v1753, %v1751
        %v1808 = vpack.c.b16 %v1756, %v1754
        %v1809 = vpack.c.b16 %v1757, %v1755
        %v1810 = vpack.c.b16 %v1760, %v1758
        %v1811 = vpack.c.b16 %v1761, %v1759
        %v1812 = vpack.c.b16 %v1764, %v1762
        %v1813 = vpack.c.b16 %v1765, %v1763
        %v1814 = vpack.c.b16 %v1768, %v1766
        %v1815 = vpack.c.b16 %v1769, %v1767
        %v1816 = vpack.c.b16 %v1772, %v1770
        %v1817 = vpack.c.b16 %v1773, %v1771
        %v1818 = vpack.c.b16 %v1776, %v1774
        %v1819 = vpack.c.b16 %v1777, %v1775
        %v1820 = vpack.c.b16 %v1780, %v1778
        %v1821 = vpack.c.b16 %v1781, %v1779
        %v1822 = vpack.c.b16 %v1784, %v1782
        %v1823 = vpack.c.b16 %v1785, %v1783
        %v1824 = vpack.c.b16 %v1788, %v1786
        %v1825 = vpack.c.b16 %v1789, %v1787
        %v1826 = vpack.c.b16 %v1792, %v1790
        %v1827 = vpack.c.b16 %v1793, %v1791
        %v1828 = vpack.c.b16 %v1796, %v1794
        %v1829 = vpack.c.b16 %v1797, %v1795
        %1862 = vmatprep.subr.bf16.mxu0 %v1799
        %1863 = vmatpush1.bf16.xpose.msra.mxu0 %v1798
        %1864 = vmatprep.subr.bf16.mxu0 %v1801
        %1865 = vmatpush1.bf16.xpose.msra.mxu0 %v1800
        %1866 = vmatprep.subr.bf16.mxu0 %v1803
        %1867 = vmatpush1.bf16.xpose.msra.mxu0 %v1802
        %1868 = vmatprep.subr.bf16.mxu0 %v1805
        %1869 = vmatpush1.bf16.xpose.msra.mxu0 %v1804
        %1870 = vmatprep.subr.bf16.mxu0 %v1807
        %1871 = vmatpush1.bf16.xpose.msra.mxu0 %v1806
        %1872 = vmatprep.subr.bf16.mxu0 %v1809
        %1873 = vmatpush1.bf16.xpose.msra.mxu0 %v1808
        %1874 = vmatprep.subr.bf16.mxu0 %v1811
        %1875 = vmatpush1.bf16.xpose.msra.mxu0 %v1810
        %1876 = vmatprep.subr.bf16.mxu0 %v1813
        %1877 = vmatpush1.bf16.xpose.msra.mxu0 %v1812
        %1878 = vmatprep.subr.bf16.mxu0 %v1815
        %1879 = vmatpush1.bf16.xpose.msra.mxu0 %v1814
        %1880 = vmatprep.subr.bf16.mxu0 %v1817
        %1881 = vmatpush1.bf16.xpose.msra.mxu0 %v1816
        %1882 = vmatprep.subr.bf16.mxu0 %v1819
        %1883 = vmatpush1.bf16.xpose.msra.mxu0 %v1818
        %1884 = vmatprep.subr.bf16.mxu0 %v1821
        %1885 = vmatpush1.bf16.xpose.msra.mxu0 %v1820
        %1886 = vmatprep.subr.bf16.mxu0 %v1823
        %1887 = vmatpush1.bf16.xpose.msra.mxu0 %v1822
        %1888 = vmatprep.subr.bf16.mxu0 %v1825
        %1889 = vmatpush1.bf16.xpose.msra.mxu0 %v1824
        %1890 = vmatprep.subr.bf16.mxu0 %v1827
        %1891 = vmatpush1.bf16.xpose.msra.mxu0 %v1826
        %1892 = vmatprep.subr.bf16.mxu0 %v1829
        %1893 = vmatpush1.bf16.xpose.msra.mxu0 %v1828
        %1894 = vmatprep.mubr.bf16.mxu0 %v1731
        %1895 = vmatmul.mubr.bf16.gmra.mrb[0].mxu0 %v1730
        %v1896 = vpop.f32.mrb[0].mxu0
        %v1897 = vadd.f32 0.0, %v1896
        %v1898 = vpop.f32.mrb[0].mxu0
        %v1899 = vadd.f32 0.0, %v1898
        %v1900 = vpop.f32.mrb[0].mxu0
        %v1901 = vpop.f32.mrb[0].mxu0
        %1902 = vdwg.mxu0
        %v1903 = vadd.f32 %v1556, %v1897
        %v1904 = vadd.f32 %v1558, %v1899
        %v1905 = vld [vmem:[%s614] sm:$0xff]
        %v1906 = vld [vmem:[%s614 + $0x8] sm:$0xff]
        %v1907 = vld [vmem:[%s614 + $0x18] sm:$0xff]
        %v1908 = vld [vmem:[%s614 + $0x20] sm:$0xff]
        %v1909 = vld [vmem:[%s614 + $0x30] sm:$0xff]
        %v1910 = vld [vmem:[%s614 + $0x38] sm:$0xff]
        %v1911 = vld [vmem:[%s614 + $0x48] sm:$0xff]
        %v1912 = vld [vmem:[%s614 + $0x50] sm:$0xff]
        %v1913 = vld [vmem:[%s614 + $0x60] sm:$0xff]
        %v1914 = vld [vmem:[%s614 + $0x68] sm:$0xff]
        %v1915 = vld [vmem:[%s614 + $0x78] sm:$0xff]
        %v1916 = vld [vmem:[%s614 + $0x80] sm:$0xff]
        %v1917 = vld [vmem:[%s614 + $0x90] sm:$0xff]
        %v1918 = vld [vmem:[%s614 + $0x98] sm:$0xff]
        %v1919 = vld [vmem:[%s614 + $0xa8] sm:$0xff]
        %v1920 = vld [vmem:[%s614 + $0xb0] sm:$0xff]
        %v1921 = vld [vmem:[%s614 + $0xc0] sm:$0xff]
        %v1922 = vld [vmem:[%s614 + $0xc8] sm:$0xff]
        %v1923 = vld [vmem:[%s614 + $0xd8] sm:$0xff]
        %v1924 = vld [vmem:[%s614 + $0xe0] sm:$0xff]
        %v1925 = vld [vmem:[%s614 + $0xf0] sm:$0xff]
        %v1926 = vld [vmem:[%s614 + $0xf8] sm:$0xff]
        %v1927 = vld [vmem:[%s614 + $0x108] sm:$0xff]
        %v1928 = vld [vmem:[%s614 + $0x110] sm:$0xff]
        %v1929 = vld [vmem:[%s614 + $0x120] sm:$0xff]
        %v1930 = vld [vmem:[%s614 + $0x128] sm:$0xff]
        %v1931 = vld [vmem:[%s614 + $0x138] sm:$0xff]
        %v1932 = vld [vmem:[%s614 + $0x140] sm:$0xff]
        %v1933 = vld [vmem:[%s614 + $0x150] sm:$0xff]
        %v1934 = vld [vmem:[%s614 + $0x158] sm:$0xff]
        %v1935 = vld [vmem:[%s614 + $0x168] sm:$0xff]
        %v1936 = vld [vmem:[%s614 + $0x170] sm:$0xff]
        %s1937 = scalar_lea.vmem [#allocation6], 24
        %v1938 = vld [vmem:[%s1937] sm:$0xff]
        %v1940 = vunpack.c.l.b16 %v1938
        %v1941 = vunpack.c.h.b16 %v1938
        %v1942 = vpack.c.b16 %v1940, %v1940
        %v1943 = vpack.c.b16 %v1941, %v1941
        %v1978 = vunpack.c.l.b16 %v1905
        %v1979 = vunpack.c.h.b16 %v1905
        %v1980 = vunpack.c.l.b16 %v1906
        %v1981 = vunpack.c.h.b16 %v1906
        %v1982 = vunpack.c.l.b16 %v1907
        %v1983 = vunpack.c.h.b16 %v1907
        %v1984 = vunpack.c.l.b16 %v1908
        %v1985 = vunpack.c.h.b16 %v1908
        %v1986 = vunpack.c.l.b16 %v1909
        %v1987 = vunpack.c.h.b16 %v1909
        %v1988 = vunpack.c.l.b16 %v1910
        %v1989 = vunpack.c.h.b16 %v1910
        %v1990 = vunpack.c.l.b16 %v1911
        %v1991 = vunpack.c.h.b16 %v1911
        %v1992 = vunpack.c.l.b16 %v1912
        %v1993 = vunpack.c.h.b16 %v1912
        %v1994 = vunpack.c.l.b16 %v1913
        %v1995 = vunpack.c.h.b16 %v1913
        %v1996 = vunpack.c.l.b16 %v1914
        %v1997 = vunpack.c.h.b16 %v1914
        %v1998 = vunpack.c.l.b16 %v1915
        %v1999 = vunpack.c.h.b16 %v1915
        %v2000 = vunpack.c.l.b16 %v1916
        %v2001 = vunpack.c.h.b16 %v1916
        %v2002 = vunpack.c.l.b16 %v1917
        %v2003 = vunpack.c.h.b16 %v1917
        %v2004 = vunpack.c.l.b16 %v1918
        %v2005 = vunpack.c.h.b16 %v1918
        %v2006 = vunpack.c.l.b16 %v1919
        %v2007 = vunpack.c.h.b16 %v1919
        %v2008 = vunpack.c.l.b16 %v1920
        %v2009 = vunpack.c.h.b16 %v1920
        %v2010 = vunpack.c.l.b16 %v1921
        %v2011 = vunpack.c.h.b16 %v1921
        %v2012 = vunpack.c.l.b16 %v1922
        %v2013 = vunpack.c.h.b16 %v1922
        %v2014 = vunpack.c.l.b16 %v1923
        %v2015 = vunpack.c.h.b16 %v1923
        %v2016 = vunpack.c.l.b16 %v1924
        %v2017 = vunpack.c.h.b16 %v1924
        %v2018 = vunpack.c.l.b16 %v1925
        %v2019 = vunpack.c.h.b16 %v1925
        %v2020 = vunpack.c.l.b16 %v1926
        %v2021 = vunpack.c.h.b16 %v1926
        %v2022 = vunpack.c.l.b16 %v1927
        %v2023 = vunpack.c.h.b16 %v1927
        %v2024 = vunpack.c.l.b16 %v1928
        %v2025 = vunpack.c.h.b16 %v1928
        %v2026 = vunpack.c.l.b16 %v1929
        %v2027 = vunpack.c.h.b16 %v1929
        %v2028 = vunpack.c.l.b16 %v1930
        %v2029 = vunpack.c.h.b16 %v1930
        %v2030 = vunpack.c.l.b16 %v1931
        %v2031 = vunpack.c.h.b16 %v1931
        %v2032 = vunpack.c.l.b16 %v1932
        %v2033 = vunpack.c.h.b16 %v1932
        %v2034 = vunpack.c.l.b16 %v1933
        %v2035 = vunpack.c.h.b16 %v1933
        %v2036 = vunpack.c.l.b16 %v1934
        %v2037 = vunpack.c.h.b16 %v1934
        %v2038 = vunpack.c.l.b16 %v1935
        %v2039 = vunpack.c.h.b16 %v1935
        %v2040 = vunpack.c.l.b16 %v1936
        %v2041 = vunpack.c.h.b16 %v1936
        %v2042 = vpack.c.b16 %v1980, %v1978
        %v2043 = vpack.c.b16 %v1981, %v1979
        %v2044 = vpack.c.b16 %v1984, %v1982
        %v2045 = vpack.c.b16 %v1985, %v1983
        %v2046 = vpack.c.b16 %v1988, %v1986
        %v2047 = vpack.c.b16 %v1989, %v1987
        %v2048 = vpack.c.b16 %v1992, %v1990
        %v2049 = vpack.c.b16 %v1993, %v1991
        %v2050 = vpack.c.b16 %v1996, %v1994
        %v2051 = vpack.c.b16 %v1997, %v1995
        %v2052 = vpack.c.b16 %v2000, %v1998
        %v2053 = vpack.c.b16 %v2001, %v1999
        %v2054 = vpack.c.b16 %v2004, %v2002
        %v2055 = vpack.c.b16 %v2005, %v2003
        %v2056 = vpack.c.b16 %v2008, %v2006
        %v2057 = vpack.c.b16 %v2009, %v2007
        %v2058 = vpack.c.b16 %v2012, %v2010
        %v2059 = vpack.c.b16 %v2013, %v2011
        %v2060 = vpack.c.b16 %v2016, %v2014
        %v2061 = vpack.c.b16 %v2017, %v2015
        %v2062 = vpack.c.b16 %v2020, %v2018
        %v2063 = vpack.c.b16 %v2021, %v2019
        %v2064 = vpack.c.b16 %v2024, %v2022
        %v2065 = vpack.c.b16 %v2025, %v2023
        %v2066 = vpack.c.b16 %v2028, %v2026
        %v2067 = vpack.c.b16 %v2029, %v2027
        %v2068 = vpack.c.b16 %v2032, %v2030
        %v2069 = vpack.c.b16 %v2033, %v2031
        %v2070 = vpack.c.b16 %v2036, %v2034
        %v2071 = vpack.c.b16 %v2037, %v2035
        %v2072 = vpack.c.b16 %v2040, %v2038
        %v2073 = vpack.c.b16 %v2041, %v2039
        %2106 = vmatprep.subr.bf16.mxu0 %v2043
        %2107 = vmatpush1.bf16.xpose.msra.mxu0 %v2042
        %2108 = vmatprep.subr.bf16.mxu0 %v2045
        %2109 = vmatpush1.bf16.xpose.msra.mxu0 %v2044
        %2110 = vmatprep.subr.bf16.mxu0 %v2047
        %2111 = vmatpush1.bf16.xpose.msra.mxu0 %v2046
        %2112 = vmatprep.subr.bf16.mxu0 %v2049
        %2113 = vmatpush1.bf16.xpose.msra.mxu0 %v2048
        %2114 = vmatprep.subr.bf16.mxu0 %v2051
        %2115 = vmatpush1.bf16.xpose.msra.mxu0 %v2050
        %2116 = vmatprep.subr.bf16.mxu0 %v2053
        %2117 = vmatpush1.bf16.xpose.msra.mxu0 %v2052
        %2118 = vmatprep.subr.bf16.mxu0 %v2055
        %2119 = vmatpush1.bf16.xpose.msra.mxu0 %v2054
        %2120 = vmatprep.subr.bf16.mxu0 %v2057
        %2121 = vmatpush1.bf16.xpose.msra.mxu0 %v2056
        %2122 = vmatprep.subr.bf16.mxu0 %v2059
        %2123 = vmatpush1.bf16.xpose.msra.mxu0 %v2058
        %2124 = vmatprep.subr.bf16.mxu0 %v2061
        %2125 = vmatpush1.bf16.xpose.msra.mxu0 %v2060
        %2126 = vmatprep.subr.bf16.mxu0 %v2063
        %2127 = vmatpush1.bf16.xpose.msra.mxu0 %v2062
        %2128 = vmatprep.subr.bf16.mxu0 %v2065
        %2129 = vmatpush1.bf16.xpose.msra.mxu0 %v2064
        %2130 = vmatprep.subr.bf16.mxu0 %v2067
        %2131 = vmatpush1.bf16.xpose.msra.mxu0 %v2066
        %2132 = vmatprep.subr.bf16.mxu0 %v2069
        %2133 = vmatpush1.bf16.xpose.msra.mxu0 %v2068
        %2134 = vmatprep.subr.bf16.mxu0 %v2071
        %2135 = vmatpush1.bf16.xpose.msra.mxu0 %v2070
        %2136 = vmatprep.subr.bf16.mxu0 %v2073
        %2137 = vmatpush1.bf16.xpose.msra.mxu0 %v2072
        %2138 = vmatprep.mubr.bf16.mxu0 %v1943
        %2139 = vmatmul.mubr.bf16.gmra.mrb[0].mxu0 %v1942
        %v2140 = vpop.f32.mrb[0].mxu0
        %v2141 = vadd.f32 0.0, %v2140
        %v2142 = vpop.f32.mrb[0].mxu0
        %v2143 = vadd.f32 0.0, %v2142
        %v2144 = vpop.f32.mrb[0].mxu0
        %v2145 = vpop.f32.mrb[0].mxu0
        %2146 = vdwg.mxu0
        %v2147 = vadd.f32 %v1903, %v2141
        %v2148 = vadd.f32 %v1904, %v2143
        %v2149 = vld [vmem:[%s614] sm:$0xff]
        %v2150 = vld [vmem:[%s614 + $0x8] sm:$0xff]
        %v2151 = vld [vmem:[%s614 + $0x10] sm:$0x11]
        %v2152 = vld [vmem:[%s614 + $0x18] sm:$0xff]
        %v2153 = vld [vmem:[%s614 + $0x20] sm:$0xff]
        %v2154 = vld [vmem:[%s614 + $0x28] sm:$0x11]
        %v2155 = vld [vmem:[%s614 + $0x30] sm:$0xff]
        %v2156 = vld [vmem:[%s614 + $0x38] sm:$0xff]
        %v2157 = vld [vmem:[%s614 + $0x40] sm:$0x11]
        %v2158 = vld [vmem:[%s614 + $0x48] sm:$0xff]
        %v2159 = vld [vmem:[%s614 + $0x50] sm:$0xff]
        %v2160 = vld [vmem:[%s614 + $0x58] sm:$0x11]
        %v2161 = vld [vmem:[%s614 + $0x60] sm:$0xff]
        %v2162 = vld [vmem:[%s614 + $0x68] sm:$0xff]
        %v2163 = vld [vmem:[%s614 + $0x70] sm:$0x11]
        %v2164 = vld [vmem:[%s614 + $0x78] sm:$0xff]
        %v2165 = vld [vmem:[%s614 + $0x80] sm:$0xff]
        %v2166 = vld [vmem:[%s614 + $0x88] sm:$0x11]
        %v2167 = vld [vmem:[%s614 + $0x90] sm:$0xff]
        %v2168 = vld [vmem:[%s614 + $0x98] sm:$0xff]
        %v2169 = vld [vmem:[%s614 + $0xa0] sm:$0x11]
        %v2170 = vld [vmem:[%s614 + $0xa8] sm:$0xff]
        %v2171 = vld [vmem:[%s614 + $0xb0] sm:$0xff]
        %v2172 = vld [vmem:[%s614 + $0xb8] sm:$0x11]
        %v2173 = vld [vmem:[%s614 + $0xc0] sm:$0xff]
        %v2174 = vld [vmem:[%s614 + $0xc8] sm:$0xff]
        %v2175 = vld [vmem:[%s614 + $0xd0] sm:$0x11]
        %v2176 = vld [vmem:[%s614 + $0xd8] sm:$0xff]
        %v2177 = vld [vmem:[%s614 + $0xe0] sm:$0xff]
        %v2178 = vld [vmem:[%s614 + $0xe8] sm:$0x11]
        %v2179 = vld [vmem:[%s614 + $0xf0] sm:$0xff]
        %v2180 = vld [vmem:[%s614 + $0xf8] sm:$0xff]
        %v2181 = vld [vmem:[%s614 + $0x100] sm:$0x11]
        %v2182 = vld [vmem:[%s614 + $0x108] sm:$0xff]
        %v2183 = vld [vmem:[%s614 + $0x110] sm:$0xff]
        %v2184 = vld [vmem:[%s614 + $0x118] sm:$0x11]
        %v2185 = vld [vmem:[%s614 + $0x120] sm:$0xff]
        %v2186 = vld [vmem:[%s614 + $0x128] sm:$0xff]
        %v2187 = vld [vmem:[%s614 + $0x130] sm:$0x11]
        %v2188 = vld [vmem:[%s614 + $0x138] sm:$0xff]
        %v2189 = vld [vmem:[%s614 + $0x140] sm:$0xff]
        %v2190 = vld [vmem:[%s614 + $0x148] sm:$0x11]
        %v2191 = vld [vmem:[%s614 + $0x150] sm:$0xff]
        %v2192 = vld [vmem:[%s614 + $0x158] sm:$0xff]
        %v2193 = vld [vmem:[%s614 + $0x160] sm:$0x11]
        %v2194 = vld [vmem:[%s614 + $0x168] sm:$0xff]
        %v2195 = vld [vmem:[%s614 + $0x170] sm:$0xff]
        %v2196 = vld [vmem:[%s614 + $0x178] sm:$0x11]
        %v2198 = vshrl.u32 %v2149, 16
        %v2200 = vrot.slane %v2198, 4
        %v2201 = vshll.u32 %v2149, 16
        %v2203 = vrot.slane %v2201, 5
        %v2204 = vor.u32 %v2200, %v2203
        %v2205 = vrot.slane %v2204, 4
        %v2207 = vshll.u32 %v2150, 16
        %v2209 = vrot.slane %v2207, 5
        %v2210 = vsel %vm791, %v2205, %v2209
        %v2211 = vshrl.u32 %v2150, 16
        %v2213 = vrot.slane %v2211, 4
        %v2214 = vor.u32 %v2213, %v2209
        %v2215 = vrot.slane %v2214, 4
        %v2217 = vshll.u32 %v2151, 16
        %v2219 = vrot.slane %v2217, 5
        %v2220 = vsel %vm791, %v2215, %v2219
        %v2222 = vshrl.u32 %v2152, 16
        %v2224 = vrot.slane %v2222, 4
        %v2225 = vshll.u32 %v2152, 16
        %v2227 = vrot.slane %v2225, 5
        %v2228 = vor.u32 %v2224, %v2227
        %v2229 = vrot.slane %v2228, 4
        %v2231 = vshll.u32 %v2153, 16
        %v2233 = vrot.slane %v2231, 5
        %v2234 = vsel %vm791, %v2229, %v2233
        %v2235 = vshrl.u32 %v2153, 16
        %v2237 = vrot.slane %v2235, 4
        %v2238 = vor.u32 %v2237, %v2233
        %v2239 = vrot.slane %v2238, 4
        %v2241 = vshll.u32 %v2154, 16
        %v2243 = vrot.slane %v2241, 5
        %v2244 = vsel %vm791, %v2239, %v2243
        %v2246 = vshrl.u32 %v2155, 16
        %v2248 = vrot.slane %v2246, 4
        %v2249 = vshll.u32 %v2155, 16
        %v2251 = vrot.slane %v2249, 5
        %v2252 = vor.u32 %v2248, %v2251
        %v2253 = vrot.slane %v2252, 4
        %v2255 = vshll.u32 %v2156, 16
        %v2257 = vrot.slane %v2255, 5
        %v2258 = vsel %vm791, %v2253, %v2257
        %v2259 = vshrl.u32 %v2156, 16
        %v2261 = vrot.slane %v2259, 4
        %v2262 = vor.u32 %v2261, %v2257
        %v2263 = vrot.slane %v2262, 4
        %v2265 = vshll.u32 %v2157, 16
        %v2267 = vrot.slane %v2265, 5
        %v2268 = vsel %vm791, %v2263, %v2267
        %v2270 = vshrl.u32 %v2158, 16
        %v2272 = vrot.slane %v2270, 4
        %v2273 = vshll.u32 %v2158, 16
        %v2275 = vrot.slane %v2273, 5
        %v2276 = vor.u32 %v2272, %v2275
        %v2277 = vrot.slane %v2276, 4
        %v2279 = vshll.u32 %v2159, 16
        %v2281 = vrot.slane %v2279, 5
        %v2282 = vsel %vm791, %v2277, %v2281
        %v2283 = vshrl.u32 %v2159, 16
        %v2285 = vrot.slane %v2283, 4
        %v2286 = vor.u32 %v2285, %v2281
        %v2287 = vrot.slane %v2286, 4
        %v2289 = vshll.u32 %v2160, 16
        %v2291 = vrot.slane %v2289, 5
        %v2292 = vsel %vm791, %v2287, %v2291
        %v2294 = vshrl.u32 %v2161, 16
        %v2296 = vrot.slane %v2294, 4
        %v2297 = vshll.u32 %v2161, 16
        %v2299 = vrot.slane %v2297, 5
        %v2300 = vor.u32 %v2296, %v2299
        %v2301 = vrot.slane %v2300, 4
        %v2303 = vshll.u32 %v2162, 16
        %v2305 = vrot.slane %v2303, 5
        %v2306 = vsel %vm791, %v2301, %v2305
        %v2307 = vshrl.u32 %v2162, 16
        %v2309 = vrot.slane %v2307, 4
        %v2310 = vor.u32 %v2309, %v2305
        %v2311 = vrot.slane %v2310, 4
        %v2313 = vshll.u32 %v2163, 16
        %v2315 = vrot.slane %v2313, 5
        %v2316 = vsel %vm791, %v2311, %v2315
        %v2318 = vshrl.u32 %v2164, 16
        %v2320 = vrot.slane %v2318, 4
        %v2321 = vshll.u32 %v2164, 16
        %v2323 = vrot.slane %v2321, 5
        %v2324 = vor.u32 %v2320, %v2323
        %v2325 = vrot.slane %v2324, 4
        %v2327 = vshll.u32 %v2165, 16
        %v2329 = vrot.slane %v2327, 5
        %v2330 = vsel %vm791, %v2325, %v2329
        %v2331 = vshrl.u32 %v2165, 16
        %v2333 = vrot.slane %v2331, 4
        %v2334 = vor.u32 %v2333, %v2329
        %v2335 = vrot.slane %v2334, 4
        %v2337 = vshll.u32 %v2166, 16
        %v2339 = vrot.slane %v2337, 5
        %v2340 = vsel %vm791, %v2335, %v2339
        %v2342 = vshrl.u32 %v2167, 16
        %v2344 = vrot.slane %v2342, 4
        %v2345 = vshll.u32 %v2167, 16
        %v2347 = vrot.slane %v2345, 5
        %v2348 = vor.u32 %v2344, %v2347
        %v2349 = vrot.slane %v2348, 4
        %v2351 = vshll.u32 %v2168, 16
        %v2353 = vrot.slane %v2351, 5
        %v2354 = vsel %vm791, %v2349, %v2353
        %v2355 = vshrl.u32 %v2168, 16
        %v2357 = vrot.slane %v2355, 4
        %v2358 = vor.u32 %v2357, %v2353
        %v2359 = vrot.slane %v2358, 4
        %v2361 = vshll.u32 %v2169, 16
        %v2363 = vrot.slane %v2361, 5
        %v2364 = vsel %vm791, %v2359, %v2363
        %v2366 = vshrl.u32 %v2170, 16
        %v2368 = vrot.slane %v2366, 4
        %v2369 = vshll.u32 %v2170, 16
        %v2371 = vrot.slane %v2369, 5
        %v2372 = vor.u32 %v2368, %v2371
        %v2373 = vrot.slane %v2372, 4
        %v2375 = vshll.u32 %v2171, 16
        %v2377 = vrot.slane %v2375, 5
        %v2378 = vsel %vm791, %v2373, %v2377
        %v2379 = vshrl.u32 %v2171, 16
        %v2381 = vrot.slane %v2379, 4
        %v2382 = vor.u32 %v2381, %v2377
        %v2383 = vrot.slane %v2382, 4
        %v2385 = vshll.u32 %v2172, 16
        %v2387 = vrot.slane %v2385, 5
        %v2388 = vsel %vm791, %v2383, %v2387
        %v2390 = vshrl.u32 %v2173, 16
        %v2392 = vrot.slane %v2390, 4
        %v2393 = vshll.u32 %v2173, 16
        %v2395 = vrot.slane %v2393, 5
        %v2396 = vor.u32 %v2392, %v2395
        %v2397 = vrot.slane %v2396, 4
        %v2399 = vshll.u32 %v2174, 16
        %v2401 = vrot.slane %v2399, 5
        %v2402 = vsel %vm791, %v2397, %v2401
        %v2403 = vshrl.u32 %v2174, 16
        %v2405 = vrot.slane %v2403, 4
        %v2406 = vor.u32 %v2405, %v2401
        %v2407 = vrot.slane %v2406, 4
        %v2409 = vshll.u32 %v2175, 16
        %v2411 = vrot.slane %v2409, 5
        %v2412 = vsel %vm791, %v2407, %v2411
        %v2414 = vshrl.u32 %v2176, 16
        %v2416 = vrot.slane %v2414, 4
        %v2417 = vshll.u32 %v2176, 16
        %v2419 = vrot.slane %v2417, 5
        %v2420 = vor.u32 %v2416, %v2419
        %v2421 = vrot.slane %v2420, 4
        %v2423 = vshll.u32 %v2177, 16
        %v2425 = vrot.slane %v2423, 5
        %v2426 = vsel %vm791, %v2421, %v2425
        %v2427 = vshrl.u32 %v2177, 16
        %v2429 = vrot.slane %v2427, 4
        %v2430 = vor.u32 %v2429, %v2425
        %v2431 = vrot.slane %v2430, 4
        %v2433 = vshll.u32 %v2178, 16
        %v2435 = vrot.slane %v2433, 5
        %v2436 = vsel %vm791, %v2431, %v2435
        %v2438 = vshrl.u32 %v2179, 16
        %v2440 = vrot.slane %v2438, 4
        %v2441 = vshll.u32 %v2179, 16
        %v2443 = vrot.slane %v2441, 5
        %v2444 = vor.u32 %v2440, %v2443
        %v2445 = vrot.slane %v2444, 4
        %v2447 = vshll.u32 %v2180, 16
        %v2449 = vrot.slane %v2447, 5
        %v2450 = vsel %vm791, %v2445, %v2449
        %v2451 = vshrl.u32 %v2180, 16
        %v2453 = vrot.slane %v2451, 4
        %v2454 = vor.u32 %v2453, %v2449
        %v2455 = vrot.slane %v2454, 4
        %v2457 = vshll.u32 %v2181, 16
        %v2459 = vrot.slane %v2457, 5
        %v2460 = vsel %vm791, %v2455, %v2459
        %v2462 = vshrl.u32 %v2182, 16
        %v2464 = vrot.slane %v2462, 4
        %v2465 = vshll.u32 %v2182, 16
        %v2467 = vrot.slane %v2465, 5
        %v2468 = vor.u32 %v2464, %v2467
        %v2469 = vrot.slane %v2468, 4
        %v2471 = vshll.u32 %v2183, 16
        %v2473 = vrot.slane %v2471, 5
        %v2474 = vsel %vm791, %v2469, %v2473
        %v2475 = vshrl.u32 %v2183, 16
        %v2477 = vrot.slane %v2475, 4
        %v2478 = vor.u32 %v2477, %v2473
        %v2479 = vrot.slane %v2478, 4
        %v2481 = vshll.u32 %v2184, 16
        %v2483 = vrot.slane %v2481, 5
        %v2484 = vsel %vm791, %v2479, %v2483
        %v2486 = vshrl.u32 %v2185, 16
        %v2488 = vrot.slane %v2486, 4
        %v2489 = vshll.u32 %v2185, 16
        %v2491 = vrot.slane %v2489, 5
        %v2492 = vor.u32 %v2488, %v2491
        %v2493 = vrot.slane %v2492, 4
        %v2495 = vshll.u32 %v2186, 16
        %v2497 = vrot.slane %v2495, 5
        %v2498 = vsel %vm791, %v2493, %v2497
        %v2499 = vshrl.u32 %v2186, 16
        %v2501 = vrot.slane %v2499, 4
        %v2502 = vor.u32 %v2501, %v2497
        %v2503 = vrot.slane %v2502, 4
        %v2505 = vshll.u32 %v2187, 16
        %v2507 = vrot.slane %v2505, 5
        %v2508 = vsel %vm791, %v2503, %v2507
        %v2510 = vshrl.u32 %v2188, 16
        %v2512 = vrot.slane %v2510, 4
        %v2513 = vshll.u32 %v2188, 16
        %v2515 = vrot.slane %v2513, 5
        %v2516 = vor.u32 %v2512, %v2515
        %v2517 = vrot.slane %v2516, 4
        %v2519 = vshll.u32 %v2189, 16
        %v2521 = vrot.slane %v2519, 5
        %v2522 = vsel %vm791, %v2517, %v2521
        %v2523 = vshrl.u32 %v2189, 16
        %v2525 = vrot.slane %v2523, 4
        %v2526 = vor.u32 %v2525, %v2521
        %v2527 = vrot.slane %v2526, 4
        %v2529 = vshll.u32 %v2190, 16
        %v2531 = vrot.slane %v2529, 5
        %v2532 = vsel %vm791, %v2527, %v2531
        %v2534 = vshrl.u32 %v2191, 16
        %v2536 = vrot.slane %v2534, 4
        %v2537 = vshll.u32 %v2191, 16
        %v2539 = vrot.slane %v2537, 5
        %v2540 = vor.u32 %v2536, %v2539
        %v2541 = vrot.slane %v2540, 4
        %v2543 = vshll.u32 %v2192, 16
        %v2545 = vrot.slane %v2543, 5
        %v2546 = vsel %vm791, %v2541, %v2545
        %v2547 = vshrl.u32 %v2192, 16
        %v2549 = vrot.slane %v2547, 4
        %v2550 = vor.u32 %v2549, %v2545
        %v2551 = vrot.slane %v2550, 4
        %v2553 = vshll.u32 %v2193, 16
        %v2555 = vrot.slane %v2553, 5
        %v2556 = vsel %vm791, %v2551, %v2555
        %v2558 = vshrl.u32 %v2194, 16
        %v2560 = vrot.slane %v2558, 4
        %v2561 = vshll.u32 %v2194, 16
        %v2563 = vrot.slane %v2561, 5
        %v2564 = vor.u32 %v2560, %v2563
        %v2565 = vrot.slane %v2564, 4
        %v2567 = vshll.u32 %v2195, 16
        %v2569 = vrot.slane %v2567, 5
        %v2570 = vsel %vm791, %v2565, %v2569
        %v2571 = vshrl.u32 %v2195, 16
        %v2573 = vrot.slane %v2571, 4
        %v2574 = vor.u32 %v2573, %v2569
        %v2575 = vrot.slane %v2574, 4
        %v2577 = vshll.u32 %v2196, 16
        %v2579 = vrot.slane %v2577, 5
        %v2580 = vsel %vm791, %v2575, %v2579
        %s2581 = scalar_lea.vmem [#allocation6], 32
        %v2582 = vld [vmem:[%s2581] sm:$0xff]
        %v2584 = vunpack.c.l.b16 %v2582
        %v2585 = vunpack.c.h.b16 %v2582
        %v2586 = vpack.c.b16 %v2584, %v2584
        %v2587 = vpack.c.b16 %v2585, %v2585
        %v2590 = vunpack.c.l.b16 %v2210
        %v2591 = vunpack.c.h.b16 %v2210
        %v2592 = vunpack.c.l.b16 %v2220
        %v2593 = vunpack.c.h.b16 %v2220
        %v2594 = vunpack.c.l.b16 %v2234
        %v2595 = vunpack.c.h.b16 %v2234
        %v2596 = vunpack.c.l.b16 %v2244
        %v2597 = vunpack.c.h.b16 %v2244
        %v2598 = vunpack.c.l.b16 %v2258
        %v2599 = vunpack.c.h.b16 %v2258
        %v2600 = vunpack.c.l.b16 %v2268
        %v2601 = vunpack.c.h.b16 %v2268
        %v2602 = vunpack.c.l.b16 %v2282
        %v2603 = vunpack.c.h.b16 %v2282
        %v2604 = vunpack.c.l.b16 %v2292
        %v2605 = vunpack.c.h.b16 %v2292
        %v2606 = vunpack.c.l.b16 %v2306
        %v2607 = vunpack.c.h.b16 %v2306
        %v2608 = vunpack.c.l.b16 %v2316
        %v2609 = vunpack.c.h.b16 %v2316
        %v2610 = vunpack.c.l.b16 %v2330
        %v2611 = vunpack.c.h.b16 %v2330
        %v2612 = vunpack.c.l.b16 %v2340
        %v2613 = vunpack.c.h.b16 %v2340
        %v2614 = vunpack.c.l.b16 %v2354
        %v2615 = vunpack.c.h.b16 %v2354
        %v2616 = vunpack.c.l.b16 %v2364
        %v2617 = vunpack.c.h.b16 %v2364
        %v2618 = vunpack.c.l.b16 %v2378
        %v2619 = vunpack.c.h.b16 %v2378
        %v2620 = vunpack.c.l.b16 %v2388
        %v2621 = vunpack.c.h.b16 %v2388
        %v2622 = vunpack.c.l.b16 %v2402
        %v2623 = vunpack.c.h.b16 %v2402
        %v2624 = vunpack.c.l.b16 %v2412
        %v2625 = vunpack.c.h.b16 %v2412
        %v2626 = vunpack.c.l.b16 %v2426
        %v2627 = vunpack.c.h.b16 %v2426
        %v2628 = vunpack.c.l.b16 %v2436
        %v2629 = vunpack.c.h.b16 %v2436
        %v2630 = vunpack.c.l.b16 %v2450
        %v2631 = vunpack.c.h.b16 %v2450
        %v2632 = vunpack.c.l.b16 %v2460
        %v2633 = vunpack.c.h.b16 %v2460
        %v2634 = vunpack.c.l.b16 %v2474
        %v2635 = vunpack.c.h.b16 %v2474
        %v2636 = vunpack.c.l.b16 %v2484
        %v2637 = vunpack.c.h.b16 %v2484
        %v2638 = vunpack.c.l.b16 %v2498
        %v2639 = vunpack.c.h.b16 %v2498
        %v2640 = vunpack.c.l.b16 %v2508
        %v2641 = vunpack.c.h.b16 %v2508
        %v2642 = vunpack.c.l.b16 %v2522
        %v2643 = vunpack.c.h.b16 %v2522
        %v2644 = vunpack.c.l.b16 %v2532
        %v2645 = vunpack.c.h.b16 %v2532
        %v2646 = vunpack.c.l.b16 %v2546
        %v2647 = vunpack.c.h.b16 %v2546
        %v2648 = vunpack.c.l.b16 %v2556
        %v2649 = vunpack.c.h.b16 %v2556
        %v2650 = vunpack.c.l.b16 %v2570
        %v2651 = vunpack.c.h.b16 %v2570
        %v2652 = vunpack.c.l.b16 %v2580
        %v2653 = vunpack.c.h.b16 %v2580
        %v2654 = vpack.c.b16 %v2592, %v2590
        %v2655 = vpack.c.b16 %v2593, %v2591
        %v2656 = vpack.c.b16 %v2596, %v2594
        %v2657 = vpack.c.b16 %v2597, %v2595
        %v2658 = vpack.c.b16 %v2600, %v2598
        %v2659 = vpack.c.b16 %v2601, %v2599
        %v2660 = vpack.c.b16 %v2604, %v2602
        %v2661 = vpack.c.b16 %v2605, %v2603
        %v2662 = vpack.c.b16 %v2608, %v2606
        %v2663 = vpack.c.b16 %v2609, %v2607
        %v2664 = vpack.c.b16 %v2612, %v2610
        %v2665 = vpack.c.b16 %v2613, %v2611
        %v2666 = vpack.c.b16 %v2616, %v2614
        %v2667 = vpack.c.b16 %v2617, %v2615
        %v2668 = vpack.c.b16 %v2620, %v2618
        %v2669 = vpack.c.b16 %v2621, %v2619
        %v2670 = vpack.c.b16 %v2624, %v2622
        %v2671 = vpack.c.b16 %v2625, %v2623
        %v2672 = vpack.c.b16 %v2628, %v2626
        %v2673 = vpack.c.b16 %v2629, %v2627
        %v2674 = vpack.c.b16 %v2632, %v2630
        %v2675 = vpack.c.b16 %v2633, %v2631
        %v2676 = vpack.c.b16 %v2636, %v2634
        %v2677 = vpack.c.b16 %v2637, %v2635
        %v2678 = vpack.c.b16 %v2640, %v2638
        %v2679 = vpack.c.b16 %v2641, %v2639
        %v2680 = vpack.c.b16 %v2644, %v2642
        %v2681 = vpack.c.b16 %v2645, %v2643
        %v2682 = vpack.c.b16 %v2648, %v2646
        %v2683 = vpack.c.b16 %v2649, %v2647
        %v2684 = vpack.c.b16 %v2652, %v2650
        %v2685 = vpack.c.b16 %v2653, %v2651
        %2718 = vmatprep.subr.bf16.mxu0 %v2655
        %2719 = vmatpush1.bf16.xpose.msra.mxu0 %v2654
        %2720 = vmatprep.subr.bf16.mxu0 %v2657
        %2721 = vmatpush1.bf16.xpose.msra.mxu0 %v2656
        %2722 = vmatprep.subr.bf16.mxu0 %v2659
        %2723 = vmatpush1.bf16.xpose.msra.mxu0 %v2658
        %2724 = vmatprep.subr.bf16.mxu0 %v2661
        %2725 = vmatpush1.bf16.xpose.msra.mxu0 %v2660
        %2726 = vmatprep.subr.bf16.mxu0 %v2663
        %2727 = vmatpush1.bf16.xpose.msra.mxu0 %v2662
        %2728 = vmatprep.subr.bf16.mxu0 %v2665
        %2729 = vmatpush1.bf16.xpose.msra.mxu0 %v2664
        %2730 = vmatprep.subr.bf16.mxu0 %v2667
        %2731 = vmatpush1.bf16.xpose.msra.mxu0 %v2666
        %2732 = vmatprep.subr.bf16.mxu0 %v2669
        %2733 = vmatpush1.bf16.xpose.msra.mxu0 %v2668
        %2734 = vmatprep.subr.bf16.mxu0 %v2671
        %2735 = vmatpush1.bf16.xpose.msra.mxu0 %v2670
        %2736 = vmatprep.subr.bf16.mxu0 %v2673
        %2737 = vmatpush1.bf16.xpose.msra.mxu0 %v2672
        %2738 = vmatprep.subr.bf16.mxu0 %v2675
        %2739 = vmatpush1.bf16.xpose.msra.mxu0 %v2674
        %2740 = vmatprep.subr.bf16.mxu0 %v2677
        %2741 = vmatpush1.bf16.xpose.msra.mxu0 %v2676
        %2742 = vmatprep.subr.bf16.mxu0 %v2679
        %2743 = vmatpush1.bf16.xpose.msra.mxu0 %v2678
        %2744 = vmatprep.subr.bf16.mxu0 %v2681
        %2745 = vmatpush1.bf16.xpose.msra.mxu0 %v2680
        %2746 = vmatprep.subr.bf16.mxu0 %v2683
        %2747 = vmatpush1.bf16.xpose.msra.mxu0 %v2682
        %2748 = vmatprep.subr.bf16.mxu0 %v2685
        %2749 = vmatpush1.bf16.xpose.msra.mxu0 %v2684
        %2750 = vmatprep.mubr.bf16.mxu0 %v2587
        %2751 = vmatmul.mubr.bf16.gmra.mrb[0].mxu0 %v2586
        %v2752 = vpop.f32.mrb[0].mxu0
        %v2753 = vadd.f32 0.0, %v2752
        %v2754 = vpop.f32.mrb[0].mxu0
        %v2755 = vadd.f32 0.0, %v2754
        %v2756 = vpop.f32.mrb[0].mxu0
        %v2757 = vpop.f32.mrb[0].mxu0
        %2758 = vdwg.mxu0
        %v2759 = vadd.f32 %v2147, %v2753
        %v2760 = vadd.f32 %v2148, %v2755
        %v2761 = vld [vmem:[%s614] sm:$0xee]
        %v2762 = vld [vmem:[%s614 + $0x18] sm:$0xee]
        %v2763 = vld [vmem:[%s614 + $0x30] sm:$0xee]
        %v2764 = vld [vmem:[%s614 + $0x48] sm:$0xee]
        %v2765 = vld [vmem:[%s614 + $0x60] sm:$0xee]
        %v2766 = vld [vmem:[%s614 + $0x78] sm:$0xee]
        %v2767 = vld [vmem:[%s614 + $0x90] sm:$0xee]
        %v2768 = vld [vmem:[%s614 + $0xa8] sm:$0xee]
        %v2769 = vld [vmem:[%s614 + $0xc0] sm:$0xee]
        %v2770 = vld [vmem:[%s614 + $0xd8] sm:$0xee]
        %v2771 = vld [vmem:[%s614 + $0xf0] sm:$0xee]
        %v2772 = vld [vmem:[%s614 + $0x108] sm:$0xee]
        %v2773 = vld [vmem:[%s614 + $0x120] sm:$0xee]
        %v2774 = vld [vmem:[%s614 + $0x138] sm:$0xee]
        %v2775 = vld [vmem:[%s614 + $0x150] sm:$0xee]
        %v2776 = vld [vmem:[%s614 + $0x168] sm:$0xee]
        %v2825 = vrot.slane %v2761, 5
        %v2826 = vrot.slane %v2825, 4
        %v2827 = vrot.slane %v2150, 5
        %v2828 = vsel %vm1612, %v2826, %v2827
        %v2829 = vrot.slane %v2827, 4
        %v2830 = vrot.slane %v2151, 5
        %v2831 = vsel %vm1612, %v2829, %v2830
        %v2832 = vrot.slane %v2762, 5
        %v2833 = vrot.slane %v2832, 4
        %v2834 = vrot.slane %v2153, 5
        %v2835 = vsel %vm1612, %v2833, %v2834
        %v2836 = vrot.slane %v2834, 4
        %v2837 = vrot.slane %v2154, 5
        %v2838 = vsel %vm1612, %v2836, %v2837
        %v2839 = vrot.slane %v2763, 5
        %v2840 = vrot.slane %v2839, 4
        %v2841 = vrot.slane %v2156, 5
        %v2842 = vsel %vm1612, %v2840, %v2841
        %v2843 = vrot.slane %v2841, 4
        %v2844 = vrot.slane %v2157, 5
        %v2845 = vsel %vm1612, %v2843, %v2844
        %v2846 = vrot.slane %v2764, 5
        %v2847 = vrot.slane %v2846, 4
        %v2848 = vrot.slane %v2159, 5
        %v2849 = vsel %vm1612, %v2847, %v2848
        %v2850 = vrot.slane %v2848, 4
        %v2851 = vrot.slane %v2160, 5
        %v2852 = vsel %vm1612, %v2850, %v2851
        %v2853 = vrot.slane %v2765, 5
        %v2854 = vrot.slane %v2853, 4
        %v2855 = vrot.slane %v2162, 5
        %v2856 = vsel %vm1612, %v2854, %v2855
        %v2857 = vrot.slane %v2855, 4
        %v2858 = vrot.slane %v2163, 5
        %v2859 = vsel %vm1612, %v2857, %v2858
        %v2860 = vrot.slane %v2766, 5
        %v2861 = vrot.slane %v2860, 4
        %v2862 = vrot.slane %v2165, 5
        %v2863 = vsel %vm1612, %v2861, %v2862
        %v2864 = vrot.slane %v2862, 4
        %v2865 = vrot.slane %v2166, 5
        %v2866 = vsel %vm1612, %v2864, %v2865
        %v2867 = vrot.slane %v2767, 5
        %v2868 = vrot.slane %v2867, 4
        %v2869 = vrot.slane %v2168, 5
        %v2870 = vsel %vm1612, %v2868, %v2869
        %v2871 = vrot.slane %v2869, 4
        %v2872 = vrot.slane %v2169, 5
        %v2873 = vsel %vm1612, %v2871, %v2872
        %v2874 = vrot.slane %v2768, 5
        %v2875 = vrot.slane %v2874, 4
        %v2876 = vrot.slane %v2171, 5
        %v2877 = vsel %vm1612, %v2875, %v2876
        %v2878 = vrot.slane %v2876, 4
        %v2879 = vrot.slane %v2172, 5
        %v2880 = vsel %vm1612, %v2878, %v2879
        %v2881 = vrot.slane %v2769, 5
        %v2882 = vrot.slane %v2881, 4
        %v2883 = vrot.slane %v2174, 5
        %v2884 = vsel %vm1612, %v2882, %v2883
        %v2885 = vrot.slane %v2883, 4
        %v2886 = vrot.slane %v2175, 5
        %v2887 = vsel %vm1612, %v2885, %v2886
        %v2888 = vrot.slane %v2770, 5
        %v2889 = vrot.slane %v2888, 4
        %v2890 = vrot.slane %v2177, 5
        %v2891 = vsel %vm1612, %v2889, %v2890
        %v2892 = vrot.slane %v2890, 4
        %v2893 = vrot.slane %v2178, 5
        %v2894 = vsel %vm1612, %v2892, %v2893
        %v2895 = vrot.slane %v2771, 5
        %v2896 = vrot.slane %v2895, 4
        %v2897 = vrot.slane %v2180, 5
        %v2898 = vsel %vm1612, %v2896, %v2897
        %v2899 = vrot.slane %v2897, 4
        %v2900 = vrot.slane %v2181, 5
        %v2901 = vsel %vm1612, %v2899, %v2900
        %v2902 = vrot.slane %v2772, 5
        %v2903 = vrot.slane %v2902, 4
        %v2904 = vrot.slane %v2183, 5
        %v2905 = vsel %vm1612, %v2903, %v2904
        %v2906 = vrot.slane %v2904, 4
        %v2907 = vrot.slane %v2184, 5
        %v2908 = vsel %vm1612, %v2906, %v2907
        %v2909 = vrot.slane %v2773, 5
        %v2910 = vrot.slane %v2909, 4
        %v2911 = vrot.slane %v2186, 5
        %v2912 = vsel %vm1612, %v2910, %v2911
        %v2913 = vrot.slane %v2911, 4
        %v2914 = vrot.slane %v2187, 5
        %v2915 = vsel %vm1612, %v2913, %v2914
        %v2916 = vrot.slane %v2774, 5
        %v2917 = vrot.slane %v2916, 4
        %v2918 = vrot.slane %v2189, 5
        %v2919 = vsel %vm1612, %v2917, %v2918
        %v2920 = vrot.slane %v2918, 4
        %v2921 = vrot.slane %v2190, 5
        %v2922 = vsel %vm1612, %v2920, %v2921
        %v2923 = vrot.slane %v2775, 5
        %v2924 = vrot.slane %v2923, 4
        %v2925 = vrot.slane %v2192, 5
        %v2926 = vsel %vm1612, %v2924, %v2925
        %v2927 = vrot.slane %v2925, 4
        %v2928 = vrot.slane %v2193, 5
        %v2929 = vsel %vm1612, %v2927, %v2928
        %v2930 = vrot.slane %v2776, 5
        %v2931 = vrot.slane %v2930, 4
        %v2932 = vrot.slane %v2195, 5
        %v2933 = vsel %vm1612, %v2931, %v2932
        %v2934 = vrot.slane %v2932, 4
        %v2935 = vrot.slane %v2196, 5
        %v2936 = vsel %vm1612, %v2934, %v2935
        %s2937 = scalar_lea.vmem [#allocation6], 40
        %v2938 = vld [vmem:[%s2937] sm:$0xff]
        %v2940 = vunpack.c.l.b16 %v2938
        %v2941 = vunpack.c.h.b16 %v2938
        %v2942 = vpack.c.b16 %v2940, %v2940
        %v2943 = vpack.c.b16 %v2941, %v2941
        %v2946 = vunpack.c.l.b16 %v2828
        %v2947 = vunpack.c.h.b16 %v2828
        %v2948 = vunpack.c.l.b16 %v2831
        %v2949 = vunpack.c.h.b16 %v2831
        %v2950 = vunpack.c.l.b16 %v2835
        %v2951 = vunpack.c.h.b16 %v2835
        %v2952 = vunpack.c.l.b16 %v2838
        %v2953 = vunpack.c.h.b16 %v2838
        %v2954 = vunpack.c.l.b16 %v2842
        %v2955 = vunpack.c.h.b16 %v2842
        %v2956 = vunpack.c.l.b16 %v2845
        %v2957 = vunpack.c.h.b16 %v2845
        %v2958 = vunpack.c.l.b16 %v2849
        %v2959 = vunpack.c.h.b16 %v2849
        %v2960 = vunpack.c.l.b16 %v2852
        %v2961 = vunpack.c.h.b16 %v2852
        %v2962 = vunpack.c.l.b16 %v2856
        %v2963 = vunpack.c.h.b16 %v2856
        %v2964 = vunpack.c.l.b16 %v2859
        %v2965 = vunpack.c.h.b16 %v2859
        %v2966 = vunpack.c.l.b16 %v2863
        %v2967 = vunpack.c.h.b16 %v2863
        %v2968 = vunpack.c.l.b16 %v2866
        %v2969 = vunpack.c.h.b16 %v2866
        %v2970 = vunpack.c.l.b16 %v2870
        %v2971 = vunpack.c.h.b16 %v2870
        %v2972 = vunpack.c.l.b16 %v2873
        %v2973 = vunpack.c.h.b16 %v2873
        %v2974 = vunpack.c.l.b16 %v2877
        %v2975 = vunpack.c.h.b16 %v2877
        %v2976 = vunpack.c.l.b16 %v2880
        %v2977 = vunpack.c.h.b16 %v2880
        %v2978 = vunpack.c.l.b16 %v2884
        %v2979 = vunpack.c.h.b16 %v2884
        %v2980 = vunpack.c.l.b16 %v2887
        %v2981 = vunpack.c.h.b16 %v2887
        %v2982 = vunpack.c.l.b16 %v2891
        %v2983 = vunpack.c.h.b16 %v2891
        %v2984 = vunpack.c.l.b16 %v2894
        %v2985 = vunpack.c.h.b16 %v2894
        %v2986 = vunpack.c.l.b16 %v2898
        %v2987 = vunpack.c.h.b16 %v2898
        %v2988 = vunpack.c.l.b16 %v2901
        %v2989 = vunpack.c.h.b16 %v2901
        %v2990 = vunpack.c.l.b16 %v2905
        %v2991 = vunpack.c.h.b16 %v2905
        %v2992 = vunpack.c.l.b16 %v2908
        %v2993 = vunpack.c.h.b16 %v2908
        %v2994 = vunpack.c.l.b16 %v2912
        %v2995 = vunpack.c.h.b16 %v2912
        %v2996 = vunpack.c.l.b16 %v2915
        %v2997 = vunpack.c.h.b16 %v2915
        %v2998 = vunpack.c.l.b16 %v2919
        %v2999 = vunpack.c.h.b16 %v2919
        %v3000 = vunpack.c.l.b16 %v2922
        %v3001 = vunpack.c.h.b16 %v2922
        %v3002 = vunpack.c.l.b16 %v2926
        %v3003 = vunpack.c.h.b16 %v2926
        %v3004 = vunpack.c.l.b16 %v2929
        %v3005 = vunpack.c.h.b16 %v2929
        %v3006 = vunpack.c.l.b16 %v2933
        %v3007 = vunpack.c.h.b16 %v2933
        %v3008 = vunpack.c.l.b16 %v2936
        %v3009 = vunpack.c.h.b16 %v2936
        %v3010 = vpack.c.b16 %v2948, %v2946
        %v3011 = vpack.c.b16 %v2949, %v2947
        %v3012 = vpack.c.b16 %v2952, %v2950
        %v3013 = vpack.c.b16 %v2953, %v2951
        %v3014 = vpack.c.b16 %v2956, %v2954
        %v3015 = vpack.c.b16 %v2957, %v2955
        %v3016 = vpack.c.b16 %v2960, %v2958
        %v3017 = vpack.c.b16 %v2961, %v2959
        %v3018 = vpack.c.b16 %v2964, %v2962
        %v3019 = vpack.c.b16 %v2965, %v2963
        %v3020 = vpack.c.b16 %v2968, %v2966
        %v3021 = vpack.c.b16 %v2969, %v2967
        %v3022 = vpack.c.b16 %v2972, %v2970
        %v3023 = vpack.c.b16 %v2973, %v2971
        %v3024 = vpack.c.b16 %v2976, %v2974
        %v3025 = vpack.c.b16 %v2977, %v2975
        %v3026 = vpack.c.b16 %v2980, %v2978
        %v3027 = vpack.c.b16 %v2981, %v2979
        %v3028 = vpack.c.b16 %v2984, %v2982
        %v3029 = vpack.c.b16 %v2985, %v2983
        %v3030 = vpack.c.b16 %v2988, %v2986
        %v3031 = vpack.c.b16 %v2989, %v2987
        %v3032 = vpack.c.b16 %v2992, %v2990
        %v3033 = vpack.c.b16 %v2993, %v2991
        %v3034 = vpack.c.b16 %v2996, %v2994
        %v3035 = vpack.c.b16 %v2997, %v2995
        %v3036 = vpack.c.b16 %v3000, %v2998
        %v3037 = vpack.c.b16 %v3001, %v2999
        %v3038 = vpack.c.b16 %v3004, %v3002
        %v3039 = vpack.c.b16 %v3005, %v3003
        %v3040 = vpack.c.b16 %v3008, %v3006
        %v3041 = vpack.c.b16 %v3009, %v3007
        %3074 = vmatprep.subr.bf16.mxu0 %v3011
        %3075 = vmatpush1.bf16.xpose.msra.mxu0 %v3010
        %3076 = vmatprep.subr.bf16.mxu0 %v3013
        %3077 = vmatpush1.bf16.xpose.msra.mxu0 %v3012
        %3078 = vmatprep.subr.bf16.mxu0 %v3015
        %3079 = vmatpush1.bf16.xpose.msra.mxu0 %v3014
        %3080 = vmatprep.subr.bf16.mxu0 %v3017
        %3081 = vmatpush1.bf16.xpose.msra.mxu0 %v3016
        %3082 = vmatprep.subr.bf16.mxu0 %v3019
        %3083 = vmatpush1.bf16.xpose.msra.mxu0 %v3018
        %3084 = vmatprep.subr.bf16.mxu0 %v3021
        %3085 = vmatpush1.bf16.xpose.msra.mxu0 %v3020
        %3086 = vmatprep.subr.bf16.mxu0 %v3023
        %3087 = vmatpush1.bf16.xpose.msra.mxu0 %v3022
        %3088 = vmatprep.subr.bf16.mxu0 %v3025
        %3089 = vmatpush1.bf16.xpose.msra.mxu0 %v3024
        %3090 = vmatprep.subr.bf16.mxu0 %v3027
        %3091 = vmatpush1.bf16.xpose.msra.mxu0 %v3026
        %3092 = vmatprep.subr.bf16.mxu0 %v3029
        %3093 = vmatpush1.bf16.xpose.msra.mxu0 %v3028
        %3094 = vmatprep.subr.bf16.mxu0 %v3031
        %3095 = vmatpush1.bf16.xpose.msra.mxu0 %v3030
        %3096 = vmatprep.subr.bf16.mxu0 %v3033
        %3097 = vmatpush1.bf16.xpose.msra.mxu0 %v3032
        %3098 = vmatprep.subr.bf16.mxu0 %v3035
        %3099 = vmatpush1.bf16.xpose.msra.mxu0 %v3034
        %3100 = vmatprep.subr.bf16.mxu0 %v3037
        %3101 = vmatpush1.bf16.xpose.msra.mxu0 %v3036
        %3102 = vmatprep.subr.bf16.mxu0 %v3039
        %3103 = vmatpush1.bf16.xpose.msra.mxu0 %v3038
        %3104 = vmatprep.subr.bf16.mxu0 %v3041
        %3105 = vmatpush1.bf16.xpose.msra.mxu0 %v3040
        %3106 = vmatprep.mubr.bf16.mxu0 %v2943
        %3107 = vmatmul.mubr.bf16.gmra.mrb[0].mxu0 %v2942
        %v3108 = vpop.f32.mrb[0].mxu0
        %v3109 = vadd.f32 0.0, %v3108
        %v3110 = vpop.f32.mrb[0].mxu0
        %v3111 = vadd.f32 0.0, %v3110
        %v3112 = vpop.f32.mrb[0].mxu0
        %v3113 = vpop.f32.mrb[0].mxu0
        %3114 = vdwg.mxu0
        %v3115 = vadd.f32 %v2759, %v3109
        %v3116 = vadd.f32 %v2760, %v3111
        %s3117 = scalar_lea.vmem [#allocation2], 48
        %v3118 = vld [vmem:[%s3117] sm:$0xff]
        %v3119 = vld [vmem:[%s3117 + $0x8] sm:$0xff]
        %v3120 = vld [vmem:[%s3117 + $0x18] sm:$0xff]
        %v3121 = vld [vmem:[%s3117 + $0x20] sm:$0xff]
        %v3122 = vld [vmem:[%s3117 + $0x30] sm:$0xff]
        %v3123 = vld [vmem:[%s3117 + $0x38] sm:$0xff]
        %v3124 = vld [vmem:[%s3117 + $0x48] sm:$0xff]
        %v3125 = vld [vmem:[%s3117 + $0x50] sm:$0xff]
        %v3126 = vld [vmem:[%s3117 + $0x60] sm:$0xff]
        %v3127 = vld [vmem:[%s3117 + $0x68] sm:$0xff]
        %v3128 = vld [vmem:[%s3117 + $0x78] sm:$0xff]
        %v3129 = vld [vmem:[%s3117 + $0x80] sm:$0xff]
        %v3130 = vld [vmem:[%s3117 + $0x90] sm:$0xff]
        %v3131 = vld [vmem:[%s3117 + $0x98] sm:$0xff]
        %v3132 = vld [vmem:[%s3117 + $0xa8] sm:$0xff]
        %v3133 = vld [vmem:[%s3117 + $0xb0] sm:$0xff]
        %v3134 = vld [vmem:[%s3117 + $0xc0] sm:$0xff]
        %v3135 = vld [vmem:[%s3117 + $0xc8] sm:$0xff]
        %v3136 = vld [vmem:[%s3117 + $0xd8] sm:$0xff]
        %v3137 = vld [vmem:[%s3117 + $0xe0] sm:$0xff]
        %v3138 = vld [vmem:[%s3117 + $0xf0] sm:$0xff]
        %v3139 = vld [vmem:[%s3117 + $0xf8] sm:$0xff]
        %v3140 = vld [vmem:[%s3117 + $0x108] sm:$0xff]
        %v3141 = vld [vmem:[%s3117 + $0x110] sm:$0xff]
        %v3142 = vld [vmem:[%s3117 + $0x120] sm:$0xff]
        %v3143 = vld [vmem:[%s3117 + $0x128] sm:$0xff]
        %v3144 = vld [vmem:[%s3117 + $0x138] sm:$0xff]
        %v3145 = vld [vmem:[%s3117 + $0x140] sm:$0xff]
        %v3146 = vld [vmem:[%s3117 + $0x150] sm:$0xff]
        %v3147 = vld [vmem:[%s3117 + $0x158] sm:$0xff]
        %v3148 = vld [vmem:[%s3117 + $0x168] sm:$0xff]
        %v3149 = vld [vmem:[%s3117 + $0x170] sm:$0xff]
        %s3150 = scalar_lea.vmem [#allocation6], 48
        %v3151 = vld [vmem:[%s3150] sm:$0xff]
        %v3153 = vunpack.c.l.b16 %v3151
        %v3154 = vunpack.c.h.b16 %v3151
        %v3155 = vpack.c.b16 %v3153, %v3153
        %v3156 = vpack.c.b16 %v3154, %v3154
        %v3191 = vunpack.c.l.b16 %v3118
        %v3192 = vunpack.c.h.b16 %v3118
        %v3193 = vunpack.c.l.b16 %v3119
        %v3194 = vunpack.c.h.b16 %v3119
        %v3195 = vunpack.c.l.b16 %v3120
        %v3196 = vunpack.c.h.b16 %v3120
        %v3197 = vunpack.c.l.b16 %v3121
        %v3198 = vunpack.c.h.b16 %v3121
        %v3199 = vunpack.c.l.b16 %v3122
        %v3200 = vunpack.c.h.b16 %v3122
        %v3201 = vunpack.c.l.b16 %v3123
        %v3202 = vunpack.c.h.b16 %v3123
        %v3203 = vunpack.c.l.b16 %v3124
        %v3204 = vunpack.c.h.b16 %v3124
        %v3205 = vunpack.c.l.b16 %v3125
        %v3206 = vunpack.c.h.b16 %v3125
        %v3207 = vunpack.c.l.b16 %v3126
        %v3208 = vunpack.c.h.b16 %v3126
        %v3209 = vunpack.c.l.b16 %v3127
        %v3210 = vunpack.c.h.b16 %v3127
        %v3211 = vunpack.c.l.b16 %v3128
        %v3212 = vunpack.c.h.b16 %v3128
        %v3213 = vunpack.c.l.b16 %v3129
        %v3214 = vunpack.c.h.b16 %v3129
        %v3215 = vunpack.c.l.b16 %v3130
        %v3216 = vunpack.c.h.b16 %v3130
        %v3217 = vunpack.c.l.b16 %v3131
        %v3218 = vunpack.c.h.b16 %v3131
        %v3219 = vunpack.c.l.b16 %v3132
        %v3220 = vunpack.c.h.b16 %v3132
        %v3221 = vunpack.c.l.b16 %v3133
        %v3222 = vunpack.c.h.b16 %v3133
        %v3223 = vunpack.c.l.b16 %v3134
        %v3224 = vunpack.c.h.b16 %v3134
        %v3225 = vunpack.c.l.b16 %v3135
        %v3226 = vunpack.c.h.b16 %v3135
        %v3227 = vunpack.c.l.b16 %v3136
        %v3228 = vunpack.c.h.b16 %v3136
        %v3229 = vunpack.c.l.b16 %v3137
        %v3230 = vunpack.c.h.b16 %v3137
        %v3231 = vunpack.c.l.b16 %v3138
        %v3232 = vunpack.c.h.b16 %v3138
        %v3233 = vunpack.c.l.b16 %v3139
        %v3234 = vunpack.c.h.b16 %v3139
        %v3235 = vunpack.c.l.b16 %v3140
        %v3236 = vunpack.c.h.b16 %v3140
        %v3237 = vunpack.c.l.b16 %v3141
        %v3238 = vunpack.c.h.b16 %v3141
        %v3239 = vunpack.c.l.b16 %v3142
        %v3240 = vunpack.c.h.b16 %v3142
        %v3241 = vunpack.c.l.b16 %v3143
        %v3242 = vunpack.c.h.b16 %v3143
        %v3243 = vunpack.c.l.b16 %v3144
        %v3244 = vunpack.c.h.b16 %v3144
        %v3245 = vunpack.c.l.b16 %v3145
        %v3246 = vunpack.c.h.b16 %v3145
        %v3247 = vunpack.c.l.b16 %v3146
        %v3248 = vunpack.c.h.b16 %v3146
        %v3249 = vunpack.c.l.b16 %v3147
        %v3250 = vunpack.c.h.b16 %v3147
        %v3251 = vunpack.c.l.b16 %v3148
        %v3252 = vunpack.c.h.b16 %v3148
        %v3253 = vunpack.c.l.b16 %v3149
        %v3254 = vunpack.c.h.b16 %v3149
        %v3255 = vpack.c.b16 %v3193, %v3191
        %v3256 = vpack.c.b16 %v3194, %v3192
        %v3257 = vpack.c.b16 %v3197, %v3195
        %v3258 = vpack.c.b16 %v3198, %v3196
        %v3259 = vpack.c.b16 %v3201, %v3199
        %v3260 = vpack.c.b16 %v3202, %v3200
        %v3261 = vpack.c.b16 %v3205, %v3203
        %v3262 = vpack.c.b16 %v3206, %v3204
        %v3263 = vpack.c.b16 %v3209, %v3207
        %v3264 = vpack.c.b16 %v3210, %v3208
        %v3265 = vpack.c.b16 %v3213, %v3211
        %v3266 = vpack.c.b16 %v3214, %v3212
        %v3267 = vpack.c.b16 %v3217, %v3215
        %v3268 = vpack.c.b16 %v3218, %v3216
        %v3269 = vpack.c.b16 %v3221, %v3219
        %v3270 = vpack.c.b16 %v3222, %v3220
        %v3271 = vpack.c.b16 %v3225, %v3223
        %v3272 = vpack.c.b16 %v3226, %v3224
        %v3273 = vpack.c.b16 %v3229, %v3227
        %v3274 = vpack.c.b16 %v3230, %v3228
        %v3275 = vpack.c.b16 %v3233, %v3231
        %v3276 = vpack.c.b16 %v3234, %v3232
        %v3277 = vpack.c.b16 %v3237, %v3235
        %v3278 = vpack.c.b16 %v3238, %v3236
        %v3279 = vpack.c.b16 %v3241, %v3239
        %v3280 = vpack.c.b16 %v3242, %v3240
        %v3281 = vpack.c.b16 %v3245, %v3243
        %v3282 = vpack.c.b16 %v3246, %v3244
        %v3283 = vpack.c.b16 %v3249, %v3247
        %v3284 = vpack.c.b16 %v3250, %v3248
        %v3285 = vpack.c.b16 %v3253, %v3251
        %v3286 = vpack.c.b16 %v3254, %v3252
        %3319 = vmatprep.subr.bf16.mxu0 %v3256
        %3320 = vmatpush1.bf16.xpose.msra.mxu0 %v3255
        %3321 = vmatprep.subr.bf16.mxu0 %v3258
        %3322 = vmatpush1.bf16.xpose.msra.mxu0 %v3257
        %3323 = vmatprep.subr.bf16.mxu0 %v3260
        %3324 = vmatpush1.bf16.xpose.msra.mxu0 %v3259
        %3325 = vmatprep.subr.bf16.mxu0 %v3262
        %3326 = vmatpush1.bf16.xpose.msra.mxu0 %v3261
        %3327 = vmatprep.subr.bf16.mxu0 %v3264
        %3328 = vmatpush1.bf16.xpose.msra.mxu0 %v3263
        %3329 = vmatprep.subr.bf16.mxu0 %v3266
        %3330 = vmatpush1.bf16.xpose.msra.mxu0 %v3265
        %3331 = vmatprep.subr.bf16.mxu0 %v3268
        %3332 = vmatpush1.bf16.xpose.msra.mxu0 %v3267
        %3333 = vmatprep.subr.bf16.mxu0 %v3270
        %3334 = vmatpush1.bf16.xpose.msra.mxu0 %v3269
        %3335 = vmatprep.subr.bf16.mxu0 %v3272
        %3336 = vmatpush1.bf16.xpose.msra.mxu0 %v3271
        %3337 = vmatprep.subr.bf16.mxu0 %v3274
        %3338 = vmatpush1.bf16.xpose.msra.mxu0 %v3273
        %3339 = vmatprep.subr.bf16.mxu0 %v3276
        %3340 = vmatpush1.bf16.xpose.msra.mxu0 %v3275
        %3341 = vmatprep.subr.bf16.mxu0 %v3278
        %3342 = vmatpush1.bf16.xpose.msra.mxu0 %v3277
        %3343 = vmatprep.subr.bf16.mxu0 %v3280
        %3344 = vmatpush1.bf16.xpose.msra.mxu0 %v3279
        %3345 = vmatprep.subr.bf16.mxu0 %v3282
        %3346 = vmatpush1.bf16.xpose.msra.mxu0 %v3281
        %3347 = vmatprep.subr.bf16.mxu0 %v3284
        %3348 = vmatpush1.bf16.xpose.msra.mxu0 %v3283
        %3349 = vmatprep.subr.bf16.mxu0 %v3286
        %3350 = vmatpush1.bf16.xpose.msra.mxu0 %v3285
        %3351 = vmatprep.mubr.bf16.mxu0 %v3156
        %3352 = vmatmul.mubr.bf16.gmra.mrb[0].mxu0 %v3155
        %v3353 = vpop.f32.mrb[0].mxu0
        %v3354 = vadd.f32 0.0, %v3353
        %v3355 = vpop.f32.mrb[0].mxu0
        %v3356 = vadd.f32 0.0, %v3355
        %v3357 = vpop.f32.mrb[0].mxu0
        %v3358 = vpop.f32.mrb[0].mxu0
        %3359 = vdwg.mxu0
        %v3360 = vadd.f32 %v3115, %v3354
        %v3361 = vadd.f32 %v3116, %v3356
        %v3362 = vld [vmem:[%s3117] sm:$0xff]
        %v3363 = vld [vmem:[%s3117 + $0x8] sm:$0xff]
        %v3364 = vld [vmem:[%s3117 + $0x10] sm:$0x11]
        %v3365 = vld [vmem:[%s3117 + $0x18] sm:$0xff]
        %v3366 = vld [vmem:[%s3117 + $0x20] sm:$0xff]
        %v3367 = vld [vmem:[%s3117 + $0x28] sm:$0x11]
        %v3368 = vld [vmem:[%s3117 + $0x30] sm:$0xff]
        %v3369 = vld [vmem:[%s3117 + $0x38] sm:$0xff]
        %v3370 = vld [vmem:[%s3117 + $0x40] sm:$0x11]
        %v3371 = vld [vmem:[%s3117 + $0x48] sm:$0xff]
        %v3372 = vld [vmem:[%s3117 + $0x50] sm:$0xff]
        %v3373 = vld [vmem:[%s3117 + $0x58] sm:$0x11]
        %v3374 = vld [vmem:[%s3117 + $0x60] sm:$0xff]
        %v3375 = vld [vmem:[%s3117 + $0x68] sm:$0xff]
        %v3376 = vld [vmem:[%s3117 + $0x70] sm:$0x11]
        %v3377 = vld [vmem:[%s3117 + $0x78] sm:$0xff]
        %v3378 = vld [vmem:[%s3117 + $0x80] sm:$0xff]
        %v3379 = vld [vmem:[%s3117 + $0x88] sm:$0x11]
        %v3380 = vld [vmem:[%s3117 + $0x90] sm:$0xff]
        %v3381 = vld [vmem:[%s3117 + $0x98] sm:$0xff]
        %v3382 = vld [vmem:[%s3117 + $0xa0] sm:$0x11]
        %v3383 = vld [vmem:[%s3117 + $0xa8] sm:$0xff]
        %v3384 = vld [vmem:[%s3117 + $0xb0] sm:$0xff]
        %v3385 = vld [vmem:[%s3117 + $0xb8] sm:$0x11]
        %v3386 = vld [vmem:[%s3117 + $0xc0] sm:$0xff]
        %v3387 = vld [vmem:[%s3117 + $0xc8] sm:$0xff]
        %v3388 = vld [vmem:[%s3117 + $0xd0] sm:$0x11]
        %v3389 = vld [vmem:[%s3117 + $0xd8] sm:$0xff]
        %v3390 = vld [vmem:[%s3117 + $0xe0] sm:$0xff]
        %v3391 = vld [vmem:[%s3117 + $0xe8] sm:$0x11]
        %v3392 = vld [vmem:[%s3117 + $0xf0] sm:$0xff]
        %v3393 = vld [vmem:[%s3117 + $0xf8] sm:$0xff]
        %v3394 = vld [vmem:[%s3117 + $0x100] sm:$0x11]
        %v3395 = vld [vmem:[%s3117 + $0x108] sm:$0xff]
        %v3396 = vld [vmem:[%s3117 + $0x110] sm:$0xff]
        %v3397 = vld [vmem:[%s3117 + $0x118] sm:$0x11]
        %v3398 = vld [vmem:[%s3117 + $0x120] sm:$0xff]
        %v3399 = vld [vmem:[%s3117 + $0x128] sm:$0xff]
        %v3400 = vld [vmem:[%s3117 + $0x130] sm:$0x11]
        %v3401 = vld [vmem:[%s3117 + $0x138] sm:$0xff]
        %v3402 = vld [vmem:[%s3117 + $0x140] sm:$0xff]
        %v3403 = vld [vmem:[%s3117 + $0x148] sm:$0x11]
        %v3404 = vld [vmem:[%s3117 + $0x150] sm:$0xff]
        %v3405 = vld [vmem:[%s3117 + $0x158] sm:$0xff]
        %v3406 = vld [vmem:[%s3117 + $0x160] sm:$0x11]
        %v3407 = vld [vmem:[%s3117 + $0x168] sm:$0xff]
        %v3408 = vld [vmem:[%s3117 + $0x170] sm:$0xff]
        %v3409 = vld [vmem:[%s3117 + $0x178] sm:$0x11]
        %v3411 = vshrl.u32 %v3362, 16
        %v3413 = vrot.slane %v3411, 4
        %v3414 = vshll.u32 %v3362, 16
        %v3416 = vrot.slane %v3414, 5
        %v3417 = vor.u32 %v3413, %v3416
        %v3418 = vrot.slane %v3417, 4
        %v3420 = vshll.u32 %v3363, 16
        %v3422 = vrot.slane %v3420, 5
        %v3423 = vsel %vm791, %v3418, %v3422
        %v3424 = vshrl.u32 %v3363, 16
        %v3426 = vrot.slane %v3424, 4
        %v3427 = vor.u32 %v3426, %v3422
        %v3428 = vrot.slane %v3427, 4
        %v3430 = vshll.u32 %v3364, 16
        %v3432 = vrot.slane %v3430, 5
        %v3433 = vsel %vm791, %v3428, %v3432
        %v3435 = vshrl.u32 %v3365, 16
        %v3437 = vrot.slane %v3435, 4
        %v3438 = vshll.u32 %v3365, 16
        %v3440 = vrot.slane %v3438, 5
        %v3441 = vor.u32 %v3437, %v3440
        %v3442 = vrot.slane %v3441, 4
        %v3444 = vshll.u32 %v3366, 16
        %v3446 = vrot.slane %v3444, 5
        %v3447 = vsel %vm791, %v3442, %v3446
        %v3448 = vshrl.u32 %v3366, 16
        %v3450 = vrot.slane %v3448, 4
        %v3451 = vor.u32 %v3450, %v3446
        %v3452 = vrot.slane %v3451, 4
        %v3454 = vshll.u32 %v3367, 16
        %v3456 = vrot.slane %v3454, 5
        %v3457 = vsel %vm791, %v3452, %v3456
        %v3459 = vshrl.u32 %v3368, 16
        %v3461 = vrot.slane %v3459, 4
        %v3462 = vshll.u32 %v3368, 16
        %v3464 = vrot.slane %v3462, 5
        %v3465 = vor.u32 %v3461, %v3464
        %v3466 = vrot.slane %v3465, 4
        %v3468 = vshll.u32 %v3369, 16
        %v3470 = vrot.slane %v3468, 5
        %v3471 = vsel %vm791, %v3466, %v3470
        %v3472 = vshrl.u32 %v3369, 16
        %v3474 = vrot.slane %v3472, 4
        %v3475 = vor.u32 %v3474, %v3470
        %v3476 = vrot.slane %v3475, 4
        %v3478 = vshll.u32 %v3370, 16
        %v3480 = vrot.slane %v3478, 5
        %v3481 = vsel %vm791, %v3476, %v3480
        %v3483 = vshrl.u32 %v3371, 16
        %v3485 = vrot.slane %v3483, 4
        %v3486 = vshll.u32 %v3371, 16
        %v3488 = vrot.slane %v3486, 5
        %v3489 = vor.u32 %v3485, %v3488
        %v3490 = vrot.slane %v3489, 4
        %v3492 = vshll.u32 %v3372, 16
        %v3494 = vrot.slane %v3492, 5
        %v3495 = vsel %vm791, %v3490, %v3494
        %v3496 = vshrl.u32 %v3372, 16
        %v3498 = vrot.slane %v3496, 4
        %v3499 = vor.u32 %v3498, %v3494
        %v3500 = vrot.slane %v3499, 4
        %v3502 = vshll.u32 %v3373, 16
        %v3504 = vrot.slane %v3502, 5
        %v3505 = vsel %vm791, %v3500, %v3504
        %v3507 = vshrl.u32 %v3374, 16
        %v3509 = vrot.slane %v3507, 4
        %v3510 = vshll.u32 %v3374, 16
        %v3512 = vrot.slane %v3510, 5
        %v3513 = vor.u32 %v3509, %v3512
        %v3514 = vrot.slane %v3513, 4
        %v3516 = vshll.u32 %v3375, 16
        %v3518 = vrot.slane %v3516, 5
        %v3519 = vsel %vm791, %v3514, %v3518
        %v3520 = vshrl.u32 %v3375, 16
        %v3522 = vrot.slane %v3520, 4
        %v3523 = vor.u32 %v3522, %v3518
        %v3524 = vrot.slane %v3523, 4
        %v3526 = vshll.u32 %v3376, 16
        %v3528 = vrot.slane %v3526, 5
        %v3529 = vsel %vm791, %v3524, %v3528
        %v3531 = vshrl.u32 %v3377, 16
        %v3533 = vrot.slane %v3531, 4
        %v3534 = vshll.u32 %v3377, 16
        %v3536 = vrot.slane %v3534, 5
        %v3537 = vor.u32 %v3533, %v3536
        %v3538 = vrot.slane %v3537, 4
        %v3540 = vshll.u32 %v3378, 16
        %v3542 = vrot.slane %v3540, 5
        %v3543 = vsel %vm791, %v3538, %v3542
        %v3544 = vshrl.u32 %v3378, 16
        %v3546 = vrot.slane %v3544, 4
        %v3547 = vor.u32 %v3546, %v3542
        %v3548 = vrot.slane %v3547, 4
        %v3550 = vshll.u32 %v3379, 16
        %v3552 = vrot.slane %v3550, 5
        %v3553 = vsel %vm791, %v3548, %v3552
        %v3555 = vshrl.u32 %v3380, 16
        %v3557 = vrot.slane %v3555, 4
        %v3558 = vshll.u32 %v3380, 16
        %v3560 = vrot.slane %v3558, 5
        %v3561 = vor.u32 %v3557, %v3560
        %v3562 = vrot.slane %v3561, 4
        %v3564 = vshll.u32 %v3381, 16
        %v3566 = vrot.slane %v3564, 5
        %v3567 = vsel %vm791, %v3562, %v3566
        %v3568 = vshrl.u32 %v3381, 16
        %v3570 = vrot.slane %v3568, 4
        %v3571 = vor.u32 %v3570, %v3566
        %v3572 = vrot.slane %v3571, 4
        %v3574 = vshll.u32 %v3382, 16
        %v3576 = vrot.slane %v3574, 5
        %v3577 = vsel %vm791, %v3572, %v3576
        %v3579 = vshrl.u32 %v3383, 16
        %v3581 = vrot.slane %v3579, 4
        %v3582 = vshll.u32 %v3383, 16
        %v3584 = vrot.slane %v3582, 5
        %v3585 = vor.u32 %v3581, %v3584
        %v3586 = vrot.slane %v3585, 4
        %v3588 = vshll.u32 %v3384, 16
        %v3590 = vrot.slane %v3588, 5
        %v3591 = vsel %vm791, %v3586, %v3590
        %v3592 = vshrl.u32 %v3384, 16
        %v3594 = vrot.slane %v3592, 4
        %v3595 = vor.u32 %v3594, %v3590
        %v3596 = vrot.slane %v3595, 4
        %v3598 = vshll.u32 %v3385, 16
        %v3600 = vrot.slane %v3598, 5
        %v3601 = vsel %vm791, %v3596, %v3600
        %v3603 = vshrl.u32 %v3386, 16
        %v3605 = vrot.slane %v3603, 4
        %v3606 = vshll.u32 %v3386, 16
        %v3608 = vrot.slane %v3606, 5
        %v3609 = vor.u32 %v3605, %v3608
        %v3610 = vrot.slane %v3609, 4
        %v3612 = vshll.u32 %v3387, 16
        %v3614 = vrot.slane %v3612, 5
        %v3615 = vsel %vm791, %v3610, %v3614
        %v3616 = vshrl.u32 %v3387, 16
        %v3618 = vrot.slane %v3616, 4
        %v3619 = vor.u32 %v3618, %v3614
        %v3620 = vrot.slane %v3619, 4
        %v3622 = vshll.u32 %v3388, 16
        %v3624 = vrot.slane %v3622, 5
        %v3625 = vsel %vm791, %v3620, %v3624
        %v3627 = vshrl.u32 %v3389, 16
        %v3629 = vrot.slane %v3627, 4
        %v3630 = vshll.u32 %v3389, 16
        %v3632 = vrot.slane %v3630, 5
        %v3633 = vor.u32 %v3629, %v3632
        %v3634 = vrot.slane %v3633, 4
        %v3636 = vshll.u32 %v3390, 16
        %v3638 = vrot.slane %v3636, 5
        %v3639 = vsel %vm791, %v3634, %v3638
        %v3640 = vshrl.u32 %v3390, 16
        %v3642 = vrot.slane %v3640, 4
        %v3643 = vor.u32 %v3642, %v3638
        %v3644 = vrot.slane %v3643, 4
        %v3646 = vshll.u32 %v3391, 16
        %v3648 = vrot.slane %v3646, 5
        %v3649 = vsel %vm791, %v3644, %v3648
        %v3651 = vshrl.u32 %v3392, 16
        %v3653 = vrot.slane %v3651, 4
        %v3654 = vshll.u32 %v3392, 16
        %v3656 = vrot.slane %v3654, 5
        %v3657 = vor.u32 %v3653, %v3656
        %v3658 = vrot.slane %v3657, 4
        %v3660 = vshll.u32 %v3393, 16
        %v3662 = vrot.slane %v3660, 5
        %v3663 = vsel %vm791, %v3658, %v3662
        %v3664 = vshrl.u32 %v3393, 16
        %v3666 = vrot.slane %v3664, 4
        %v3667 = vor.u32 %v3666, %v3662
        %v3668 = vrot.slane %v3667, 4
        %v3670 = vshll.u32 %v3394, 16
        %v3672 = vrot.slane %v3670, 5
        %v3673 = vsel %vm791, %v3668, %v3672
        %v3675 = vshrl.u32 %v3395, 16
        %v3677 = vrot.slane %v3675, 4
        %v3678 = vshll.u32 %v3395, 16
        %v3680 = vrot.slane %v3678, 5
        %v3681 = vor.u32 %v3677, %v3680
        %v3682 = vrot.slane %v3681, 4
        %v3684 = vshll.u32 %v3396, 16
        %v3686 = vrot.slane %v3684, 5
        %v3687 = vsel %vm791, %v3682, %v3686
        %v3688 = vshrl.u32 %v3396, 16
        %v3690 = vrot.slane %v3688, 4
        %v3691 = vor.u32 %v3690, %v3686
        %v3692 = vrot.slane %v3691, 4
        %v3694 = vshll.u32 %v3397, 16
        %v3696 = vrot.slane %v3694, 5
        %v3697 = vsel %vm791, %v3692, %v3696
        %v3699 = vshrl.u32 %v3398, 16
        %v3701 = vrot.slane %v3699, 4
        %v3702 = vshll.u32 %v3398, 16
        %v3704 = vrot.slane %v3702, 5
        %v3705 = vor.u32 %v3701, %v3704
        %v3706 = vrot.slane %v3705, 4
        %v3708 = vshll.u32 %v3399, 16
        %v3710 = vrot.slane %v3708, 5
        %v3711 = vsel %vm791, %v3706, %v3710
        %v3712 = vshrl.u32 %v3399, 16
        %v3714 = vrot.slane %v3712, 4
        %v3715 = vor.u32 %v3714, %v3710
        %v3716 = vrot.slane %v3715, 4
        %v3718 = vshll.u32 %v3400, 16
        %v3720 = vrot.slane %v3718, 5
        %v3721 = vsel %vm791, %v3716, %v3720
        %v3723 = vshrl.u32 %v3401, 16
        %v3725 = vrot.slane %v3723, 4
        %v3726 = vshll.u32 %v3401, 16
        %v3728 = vrot.slane %v3726, 5
        %v3729 = vor.u32 %v3725, %v3728
        %v3730 = vrot.slane %v3729, 4
        %v3732 = vshll.u32 %v3402, 16
        %v3734 = vrot.slane %v3732, 5
        %v3735 = vsel %vm791, %v3730, %v3734
        %v3736 = vshrl.u32 %v3402, 16
        %v3738 = vrot.slane %v3736, 4
        %v3739 = vor.u32 %v3738, %v3734
        %v3740 = vrot.slane %v3739, 4
        %v3742 = vshll.u32 %v3403, 16
        %v3744 = vrot.slane %v3742, 5
        %v3745 = vsel %vm791, %v3740, %v3744
        %v3747 = vshrl.u32 %v3404, 16
        %v3749 = vrot.slane %v3747, 4
        %v3750 = vshll.u32 %v3404, 16
        %v3752 = vrot.slane %v3750, 5
        %v3753 = vor.u32 %v3749, %v3752
        %v3754 = vrot.slane %v3753, 4
        %v3756 = vshll.u32 %v3405, 16
        %v3758 = vrot.slane %v3756, 5
        %v3759 = vsel %vm791, %v3754, %v3758
        %v3760 = vshrl.u32 %v3405, 16
        %v3762 = vrot.slane %v3760, 4
        %v3763 = vor.u32 %v3762, %v3758
        %v3764 = vrot.slane %v3763, 4
        %v3766 = vshll.u32 %v3406, 16
        %v3768 = vrot.slane %v3766, 5
        %v3769 = vsel %vm791, %v3764, %v3768
        %v3771 = vshrl.u32 %v3407, 16
        %v3773 = vrot.slane %v3771, 4
        %v3774 = vshll.u32 %v3407, 16
        %v3776 = vrot.slane %v3774, 5
        %v3777 = vor.u32 %v3773, %v3776
        %v3778 = vrot.slane %v3777, 4
        %v3780 = vshll.u32 %v3408, 16
        %v3782 = vrot.slane %v3780, 5
        %v3783 = vsel %vm791, %v3778, %v3782
        %v3784 = vshrl.u32 %v3408, 16
        %v3786 = vrot.slane %v3784, 4
        %v3787 = vor.u32 %v3786, %v3782
        %v3788 = vrot.slane %v3787, 4
        %v3790 = vshll.u32 %v3409, 16
        %v3792 = vrot.slane %v3790, 5
        %v3793 = vsel %vm791, %v3788, %v3792
        %s3794 = scalar_lea.vmem [#allocation6], 56
        %v3795 = vld [vmem:[%s3794] sm:$0xff]
        %v3797 = vunpack.c.l.b16 %v3795
        %v3798 = vunpack.c.h.b16 %v3795
        %v3799 = vpack.c.b16 %v3797, %v3797
        %v3800 = vpack.c.b16 %v3798, %v3798
        %v3803 = vunpack.c.l.b16 %v3423
        %v3804 = vunpack.c.h.b16 %v3423
        %v3805 = vunpack.c.l.b16 %v3433
        %v3806 = vunpack.c.h.b16 %v3433
        %v3807 = vunpack.c.l.b16 %v3447
        %v3808 = vunpack.c.h.b16 %v3447
        %v3809 = vunpack.c.l.b16 %v3457
        %v3810 = vunpack.c.h.b16 %v3457
        %v3811 = vunpack.c.l.b16 %v3471
        %v3812 = vunpack.c.h.b16 %v3471
        %v3813 = vunpack.c.l.b16 %v3481
        %v3814 = vunpack.c.h.b16 %v3481
        %v3815 = vunpack.c.l.b16 %v3495
        %v3816 = vunpack.c.h.b16 %v3495
        %v3817 = vunpack.c.l.b16 %v3505
        %v3818 = vunpack.c.h.b16 %v3505
        %v3819 = vunpack.c.l.b16 %v3519
        %v3820 = vunpack.c.h.b16 %v3519
        %v3821 = vunpack.c.l.b16 %v3529
        %v3822 = vunpack.c.h.b16 %v3529
        %v3823 = vunpack.c.l.b16 %v3543
        %v3824 = vunpack.c.h.b16 %v3543
        %v3825 = vunpack.c.l.b16 %v3553
        %v3826 = vunpack.c.h.b16 %v3553
        %v3827 = vunpack.c.l.b16 %v3567
        %v3828 = vunpack.c.h.b16 %v3567
        %v3829 = vunpack.c.l.b16 %v3577
        %v3830 = vunpack.c.h.b16 %v3577
        %v3831 = vunpack.c.l.b16 %v3591
        %v3832 = vunpack.c.h.b16 %v3591
        %v3833 = vunpack.c.l.b16 %v3601
        %v3834 = vunpack.c.h.b16 %v3601
        %v3835 = vunpack.c.l.b16 %v3615
        %v3836 = vunpack.c.h.b16 %v3615
        %v3837 = vunpack.c.l.b16 %v3625
        %v3838 = vunpack.c.h.b16 %v3625
        %v3839 = vunpack.c.l.b16 %v3639
        %v3840 = vunpack.c.h.b16 %v3639
        %v3841 = vunpack.c.l.b16 %v3649
        %v3842 = vunpack.c.h.b16 %v3649
        %v3843 = vunpack.c.l.b16 %v3663
        %v3844 = vunpack.c.h.b16 %v3663
        %v3845 = vunpack.c.l.b16 %v3673
        %v3846 = vunpack.c.h.b16 %v3673
        %v3847 = vunpack.c.l.b16 %v3687
        %v3848 = vunpack.c.h.b16 %v3687
        %v3849 = vunpack.c.l.b16 %v3697
        %v3850 = vunpack.c.h.b16 %v3697
        %v3851 = vunpack.c.l.b16 %v3711
        %v3852 = vunpack.c.h.b16 %v3711
        %v3853 = vunpack.c.l.b16 %v3721
        %v3854 = vunpack.c.h.b16 %v3721
        %v3855 = vunpack.c.l.b16 %v3735
        %v3856 = vunpack.c.h.b16 %v3735
        %v3857 = vunpack.c.l.b16 %v3745
        %v3858 = vunpack.c.h.b16 %v3745
        %v3859 = vunpack.c.l.b16 %v3759
        %v3860 = vunpack.c.h.b16 %v3759
        %v3861 = vunpack.c.l.b16 %v3769
        %v3862 = vunpack.c.h.b16 %v3769
        %v3863 = vunpack.c.l.b16 %v3783
        %v3864 = vunpack.c.h.b16 %v3783
        %v3865 = vunpack.c.l.b16 %v3793
        %v3866 = vunpack.c.h.b16 %v3793
        %v3867 = vpack.c.b16 %v3805, %v3803
        %v3868 = vpack.c.b16 %v3806, %v3804
        %v3869 = vpack.c.b16 %v3809, %v3807
        %v3870 = vpack.c.b16 %v3810, %v3808
        %v3871 = vpack.c.b16 %v3813, %v3811
        %v3872 = vpack.c.b16 %v3814, %v3812
        %v3873 = vpack.c.b16 %v3817, %v3815
        %v3874 = vpack.c.b16 %v3818, %v3816
        %v3875 = vpack.c.b16 %v3821, %v3819
        %v3876 = vpack.c.b16 %v3822, %v3820
        %v3877 = vpack.c.b16 %v3825, %v3823
        %v3878 = vpack.c.b16 %v3826, %v3824
        %v3879 = vpack.c.b16 %v3829, %v3827
        %v3880 = vpack.c.b16 %v3830, %v3828
        %v3881 = vpack.c.b16 %v3833, %v3831
        %v3882 = vpack.c.b16 %v3834, %v3832
        %v3883 = vpack.c.b16 %v3837, %v3835
        %v3884 = vpack.c.b16 %v3838, %v3836
        %v3885 = vpack.c.b16 %v3841, %v3839
        %v3886 = vpack.c.b16 %v3842, %v3840
        %v3887 = vpack.c.b16 %v3845, %v3843
        %v3888 = vpack.c.b16 %v3846, %v3844
        %v3889 = vpack.c.b16 %v3849, %v3847
        %v3890 = vpack.c.b16 %v3850, %v3848
        %v3891 = vpack.c.b16 %v3853, %v3851
        %v3892 = vpack.c.b16 %v3854, %v3852
        %v3893 = vpack.c.b16 %v3857, %v3855
        %v3894 = vpack.c.b16 %v3858, %v3856
        %v3895 = vpack.c.b16 %v3861, %v3859
        %v3896 = vpack.c.b16 %v3862, %v3860
        %v3897 = vpack.c.b16 %v3865, %v3863
        %v3898 = vpack.c.b16 %v3866, %v3864
        %3931 = vmatprep.subr.bf16.mxu0 %v3868
        %3932 = vmatpush1.bf16.xpose.msra.mxu0 %v3867
        %3933 = vmatprep.subr.bf16.mxu0 %v3870
        %3934 = vmatpush1.bf16.xpose.msra.mxu0 %v3869
        %3935 = vmatprep.subr.bf16.mxu0 %v3872
        %3936 = vmatpush1.bf16.xpose.msra.mxu0 %v3871
        %3937 = vmatprep.subr.bf16.mxu0 %v3874
        %3938 = vmatpush1.bf16.xpose.msra.mxu0 %v3873
        %3939 = vmatprep.subr.bf16.mxu0 %v3876
        %3940 = vmatpush1.bf16.xpose.msra.mxu0 %v3875
        %3941 = vmatprep.subr.bf16.mxu0 %v3878
        %3942 = vmatpush1.bf16.xpose.msra.mxu0 %v3877
        %3943 = vmatprep.subr.bf16.mxu0 %v3880
        %3944 = vmatpush1.bf16.xpose.msra.mxu0 %v3879
        %3945 = vmatprep.subr.bf16.mxu0 %v3882
        %3946 = vmatpush1.bf16.xpose.msra.mxu0 %v3881
        %3947 = vmatprep.subr.bf16.mxu0 %v3884
        %3948 = vmatpush1.bf16.xpose.msra.mxu0 %v3883
        %3949 = vmatprep.subr.bf16.mxu0 %v3886
        %3950 = vmatpush1.bf16.xpose.msra.mxu0 %v3885
        %3951 = vmatprep.subr.bf16.mxu0 %v3888
        %3952 = vmatpush1.bf16.xpose.msra.mxu0 %v3887
        %3953 = vmatprep.subr.bf16.mxu0 %v3890
        %3954 = vmatpush1.bf16.xpose.msra.mxu0 %v3889
        %3955 = vmatprep.subr.bf16.mxu0 %v3892
        %3956 = vmatpush1.bf16.xpose.msra.mxu0 %v3891
        %3957 = vmatprep.subr.bf16.mxu0 %v3894
        %3958 = vmatpush1.bf16.xpose.msra.mxu0 %v3893
        %3959 = vmatprep.subr.bf16.mxu0 %v3896
        %3960 = vmatpush1.bf16.xpose.msra.mxu0 %v3895
        %3961 = vmatprep.subr.bf16.mxu0 %v3898
        %3962 = vmatpush1.bf16.xpose.msra.mxu0 %v3897
        %3963 = vmatprep.mubr.bf16.mxu0 %v3800
        %3964 = vmatmul.mubr.bf16.gmra.mrb[0].mxu0 %v3799
        %v3965 = vpop.f32.mrb[0].mxu0
        %v3966 = vadd.f32 0.0, %v3965
        %v3967 = vpop.f32.mrb[0].mxu0
        %v3968 = vadd.f32 0.0, %v3967
        %v3969 = vpop.f32.mrb[0].mxu0
        %v3970 = vpop.f32.mrb[0].mxu0
        %3971 = vdwg.mxu0
        %v3972 = vadd.f32 %v3360, %v3966
        %v3973 = vadd.f32 %v3361, %v3968
        %v3974 = vld [vmem:[%s3117] sm:$0xee]
        %v3975 = vld [vmem:[%s3117 + $0x18] sm:$0xee]
        %v3976 = vld [vmem:[%s3117 + $0x30] sm:$0xee]
        %v3977 = vld [vmem:[%s3117 + $0x48] sm:$0xee]
        %v3978 = vld [vmem:[%s3117 + $0x60] sm:$0xee]
        %v3979 = vld [vmem:[%s3117 + $0x78] sm:$0xee]
        %v3980 = vld [vmem:[%s3117 + $0x90] sm:$0xee]
        %v3981 = vld [vmem:[%s3117 + $0xa8] sm:$0xee]
        %v3982 = vld [vmem:[%s3117 + $0xc0] sm:$0xee]
        %v3983 = vld [vmem:[%s3117 + $0xd8] sm:$0xee]
        %v3984 = vld [vmem:[%s3117 + $0xf0] sm:$0xee]
        %v3985 = vld [vmem:[%s3117 + $0x108] sm:$0xee]
        %v3986 = vld [vmem:[%s3117 + $0x120] sm:$0xee]
        %v3987 = vld [vmem:[%s3117 + $0x138] sm:$0xee]
        %v3988 = vld [vmem:[%s3117 + $0x150] sm:$0xee]
        %v3989 = vld [vmem:[%s3117 + $0x168] sm:$0xee]
        %v4038 = vrot.slane %v3974, 5
        %v4039 = vrot.slane %v4038, 4
        %v4040 = vrot.slane %v3363, 5
        %v4041 = vsel %vm1612, %v4039, %v4040
        %v4042 = vrot.slane %v4040, 4
        %v4043 = vrot.slane %v3364, 5
        %v4044 = vsel %vm1612, %v4042, %v4043
        %v4045 = vrot.slane %v3975, 5
        %v4046 = vrot.slane %v4045, 4
        %v4047 = vrot.slane %v3366, 5
        %v4048 = vsel %vm1612, %v4046, %v4047
        %v4049 = vrot.slane %v4047, 4
        %v4050 = vrot.slane %v3367, 5
        %v4051 = vsel %vm1612, %v4049, %v4050
        %v4052 = vrot.slane %v3976, 5
        %v4053 = vrot.slane %v4052, 4
        %v4054 = vrot.slane %v3369, 5
        %v4055 = vsel %vm1612, %v4053, %v4054
        %v4056 = vrot.slane %v4054, 4
        %v4057 = vrot.slane %v3370, 5
        %v4058 = vsel %vm1612, %v4056, %v4057
        %v4059 = vrot.slane %v3977, 5
        %v4060 = vrot.slane %v4059, 4
        %v4061 = vrot.slane %v3372, 5
        %v4062 = vsel %vm1612, %v4060, %v4061
        %v4063 = vrot.slane %v4061, 4
        %v4064 = vrot.slane %v3373, 5
        %v4065 = vsel %vm1612, %v4063, %v4064
        %v4066 = vrot.slane %v3978, 5
        %v4067 = vrot.slane %v4066, 4
        %v4068 = vrot.slane %v3375, 5
        %v4069 = vsel %vm1612, %v4067, %v4068
        %v4070 = vrot.slane %v4068, 4
        %v4071 = vrot.slane %v3376, 5
        %v4072 = vsel %vm1612, %v4070, %v4071
        %v4073 = vrot.slane %v3979, 5
        %v4074 = vrot.slane %v4073, 4
        %v4075 = vrot.slane %v3378, 5
        %v4076 = vsel %vm1612, %v4074, %v4075
        %v4077 = vrot.slane %v4075, 4
        %v4078 = vrot.slane %v3379, 5
        %v4079 = vsel %vm1612, %v4077, %v4078
        %v4080 = vrot.slane %v3980, 5
        %v4081 = vrot.slane %v4080, 4
        %v4082 = vrot.slane %v3381, 5
        %v4083 = vsel %vm1612, %v4081, %v4082
        %v4084 = vrot.slane %v4082, 4
        %v4085 = vrot.slane %v3382, 5
        %v4086 = vsel %vm1612, %v4084, %v4085
        %v4087 = vrot.slane %v3981, 5
        %v4088 = vrot.slane %v4087, 4
        %v4089 = vrot.slane %v3384, 5
        %v4090 = vsel %vm1612, %v4088, %v4089
        %v4091 = vrot.slane %v4089, 4
        %v4092 = vrot.slane %v3385, 5
        %v4093 = vsel %vm1612, %v4091, %v4092
        %v4094 = vrot.slane %v3982, 5
        %v4095 = vrot.slane %v4094, 4
        %v4096 = vrot.slane %v3387, 5
        %v4097 = vsel %vm1612, %v4095, %v4096
        %v4098 = vrot.slane %v4096, 4
        %v4099 = vrot.slane %v3388, 5
        %v4100 = vsel %vm1612, %v4098, %v4099
        %v4101 = vrot.slane %v3983, 5
        %v4102 = vrot.slane %v4101, 4
        %v4103 = vrot.slane %v3390, 5
        %v4104 = vsel %vm1612, %v4102, %v4103
        %v4105 = vrot.slane %v4103, 4
        %v4106 = vrot.slane %v3391, 5
        %v4107 = vsel %vm1612, %v4105, %v4106
        %v4108 = vrot.slane %v3984, 5
        %v4109 = vrot.slane %v4108, 4
        %v4110 = vrot.slane %v3393, 5
        %v4111 = vsel %vm1612, %v4109, %v4110
        %v4112 = vrot.slane %v4110, 4
        %v4113 = vrot.slane %v3394, 5
        %v4114 = vsel %vm1612, %v4112, %v4113
        %v4115 = vrot.slane %v3985, 5
        %v4116 = vrot.slane %v4115, 4
        %v4117 = vrot.slane %v3396, 5
        %v4118 = vsel %vm1612, %v4116, %v4117
        %v4119 = vrot.slane %v4117, 4
        %v4120 = vrot.slane %v3397, 5
        %v4121 = vsel %vm1612, %v4119, %v4120
        %v4122 = vrot.slane %v3986, 5
        %v4123 = vrot.slane %v4122, 4
        %v4124 = vrot.slane %v3399, 5
        %v4125 = vsel %vm1612, %v4123, %v4124
        %v4126 = vrot.slane %v4124, 4
        %v4127 = vrot.slane %v3400, 5
        %v4128 = vsel %vm1612, %v4126, %v4127
        %v4129 = vrot.slane %v3987, 5
        %v4130 = vrot.slane %v4129, 4
        %v4131 = vrot.slane %v3402, 5
        %v4132 = vsel %vm1612, %v4130, %v4131
        %v4133 = vrot.slane %v4131, 4
        %v4134 = vrot.slane %v3403, 5
        %v4135 = vsel %vm1612, %v4133, %v4134
        %v4136 = vrot.slane %v3988, 5
        %v4137 = vrot.slane %v4136, 4
        %v4138 = vrot.slane %v3405, 5
        %v4139 = vsel %vm1612, %v4137, %v4138
        %v4140 = vrot.slane %v4138, 4
        %v4141 = vrot.slane %v3406, 5
        %v4142 = vsel %vm1612, %v4140, %v4141
        %v4143 = vrot.slane %v3989, 5
        %v4144 = vrot.slane %v4143, 4
        %v4145 = vrot.slane %v3408, 5
        %v4146 = vsel %vm1612, %v4144, %v4145
        %v4147 = vrot.slane %v4145, 4
        %v4148 = vrot.slane %v3409, 5
        %v4149 = vsel %vm1612, %v4147, %v4148
        %s4150 = scalar_lea.vmem [#allocation6], 64
        %v4151 = vld [vmem:[%s4150] sm:$0xff]
        %v4153 = vunpack.c.l.b16 %v4151
        %v4154 = vunpack.c.h.b16 %v4151
        %v4155 = vpack.c.b16 %v4153, %v4153
        %v4156 = vpack.c.b16 %v4154, %v4154
        %v4159 = vunpack.c.l.b16 %v4041
        %v4160 = vunpack.c.h.b16 %v4041
        %v4161 = vunpack.c.l.b16 %v4044
        %v4162 = vunpack.c.h.b16 %v4044
        %v4163 = vunpack.c.l.b16 %v4048
        %v4164 = vunpack.c.h.b16 %v4048
        %v4165 = vunpack.c.l.b16 %v4051
        %v4166 = vunpack.c.h.b16 %v4051
        %v4167 = vunpack.c.l.b16 %v4055
        %v4168 = vunpack.c.h.b16 %v4055
        %v4169 = vunpack.c.l.b16 %v4058
        %v4170 = vunpack.c.h.b16 %v4058
        %v4171 = vunpack.c.l.b16 %v4062
        %v4172 = vunpack.c.h.b16 %v4062
        %v4173 = vunpack.c.l.b16 %v4065
        %v4174 = vunpack.c.h.b16 %v4065
        %v4175 = vunpack.c.l.b16 %v4069
        %v4176 = vunpack.c.h.b16 %v4069
        %v4177 = vunpack.c.l.b16 %v4072
        %v4178 = vunpack.c.h.b16 %v4072
        %v4179 = vunpack.c.l.b16 %v4076
        %v4180 = vunpack.c.h.b16 %v4076
        %v4181 = vunpack.c.l.b16 %v4079
        %v4182 = vunpack.c.h.b16 %v4079
        %v4183 = vunpack.c.l.b16 %v4083
        %v4184 = vunpack.c.h.b16 %v4083
        %v4185 = vunpack.c.l.b16 %v4086
        %v4186 = vunpack.c.h.b16 %v4086
        %v4187 = vunpack.c.l.b16 %v4090
        %v4188 = vunpack.c.h.b16 %v4090
        %v4189 = vunpack.c.l.b16 %v4093
        %v4190 = vunpack.c.h.b16 %v4093
        %v4191 = vunpack.c.l.b16 %v4097
        %v4192 = vunpack.c.h.b16 %v4097
        %v4193 = vunpack.c.l.b16 %v4100
        %v4194 = vunpack.c.h.b16 %v4100
        %v4195 = vunpack.c.l.b16 %v4104
        %v4196 = vunpack.c.h.b16 %v4104
        %v4197 = vunpack.c.l.b16 %v4107
        %v4198 = vunpack.c.h.b16 %v4107
        %v4199 = vunpack.c.l.b16 %v4111
        %v4200 = vunpack.c.h.b16 %v4111
        %v4201 = vunpack.c.l.b16 %v4114
        %v4202 = vunpack.c.h.b16 %v4114
        %v4203 = vunpack.c.l.b16 %v4118
        %v4204 = vunpack.c.h.b16 %v4118
        %v4205 = vunpack.c.l.b16 %v4121
        %v4206 = vunpack.c.h.b16 %v4121
        %v4207 = vunpack.c.l.b16 %v4125
        %v4208 = vunpack.c.h.b16 %v4125
        %v4209 = vunpack.c.l.b16 %v4128
        %v4210 = vunpack.c.h.b16 %v4128
        %v4211 = vunpack.c.l.b16 %v4132
        %v4212 = vunpack.c.h.b16 %v4132
        %v4213 = vunpack.c.l.b16 %v4135
        %v4214 = vunpack.c.h.b16 %v4135
        %v4215 = vunpack.c.l.b16 %v4139
        %v4216 = vunpack.c.h.b16 %v4139
        %v4217 = vunpack.c.l.b16 %v4142
        %v4218 = vunpack.c.h.b16 %v4142
        %v4219 = vunpack.c.l.b16 %v4146
        %v4220 = vunpack.c.h.b16 %v4146
        %v4221 = vunpack.c.l.b16 %v4149
        %v4222 = vunpack.c.h.b16 %v4149
        %v4223 = vpack.c.b16 %v4161, %v4159
        %v4224 = vpack.c.b16 %v4162, %v4160
        %v4225 = vpack.c.b16 %v4165, %v4163
        %v4226 = vpack.c.b16 %v4166, %v4164
        %v4227 = vpack.c.b16 %v4169, %v4167
        %v4228 = vpack.c.b16 %v4170, %v4168
        %v4229 = vpack.c.b16 %v4173, %v4171
        %v4230 = vpack.c.b16 %v4174, %v4172
        %v4231 = vpack.c.b16 %v4177, %v4175
        %v4232 = vpack.c.b16 %v4178, %v4176
        %v4233 = vpack.c.b16 %v4181, %v4179
        %v4234 = vpack.c.b16 %v4182, %v4180
        %v4235 = vpack.c.b16 %v4185, %v4183
        %v4236 = vpack.c.b16 %v4186, %v4184
        %v4237 = vpack.c.b16 %v4189, %v4187
        %v4238 = vpack.c.b16 %v4190, %v4188
        %v4239 = vpack.c.b16 %v4193, %v4191
        %v4240 = vpack.c.b16 %v4194, %v4192
        %v4241 = vpack.c.b16 %v4197, %v4195
        %v4242 = vpack.c.b16 %v4198, %v4196
        %v4243 = vpack.c.b16 %v4201, %v4199
        %v4244 = vpack.c.b16 %v4202, %v4200
        %v4245 = vpack.c.b16 %v4205, %v4203
        %v4246 = vpack.c.b16 %v4206, %v4204
        %v4247 = vpack.c.b16 %v4209, %v4207
        %v4248 = vpack.c.b16 %v4210, %v4208
        %v4249 = vpack.c.b16 %v4213, %v4211
        %v4250 = vpack.c.b16 %v4214, %v4212
        %v4251 = vpack.c.b16 %v4217, %v4215
        %v4252 = vpack.c.b16 %v4218, %v4216
        %v4253 = vpack.c.b16 %v4221, %v4219
        %v4254 = vpack.c.b16 %v4222, %v4220
        %4287 = vmatprep.subr.bf16.mxu0 %v4224
        %4288 = vmatpush1.bf16.xpose.msra.mxu0 %v4223
        %4289 = vmatprep.subr.bf16.mxu0 %v4226
        %4290 = vmatpush1.bf16.xpose.msra.mxu0 %v4225
        %4291 = vmatprep.subr.bf16.mxu0 %v4228
        %4292 = vmatpush1.bf16.xpose.msra.mxu0 %v4227
        %4293 = vmatprep.subr.bf16.mxu0 %v4230
        %4294 = vmatpush1.bf16.xpose.msra.mxu0 %v4229
        %4295 = vmatprep.subr.bf16.mxu0 %v4232
        %4296 = vmatpush1.bf16.xpose.msra.mxu0 %v4231
        %4297 = vmatprep.subr.bf16.mxu0 %v4234
        %4298 = vmatpush1.bf16.xpose.msra.mxu0 %v4233
        %4299 = vmatprep.subr.bf16.mxu0 %v4236
        %4300 = vmatpush1.bf16.xpose.msra.mxu0 %v4235
        %4301 = vmatprep.subr.bf16.mxu0 %v4238
        %4302 = vmatpush1.bf16.xpose.msra.mxu0 %v4237
        %4303 = vmatprep.subr.bf16.mxu0 %v4240
        %4304 = vmatpush1.bf16.xpose.msra.mxu0 %v4239
        %4305 = vmatprep.subr.bf16.mxu0 %v4242
        %4306 = vmatpush1.bf16.xpose.msra.mxu0 %v4241
        %4307 = vmatprep.subr.bf16.mxu0 %v4244
        %4308 = vmatpush1.bf16.xpose.msra.mxu0 %v4243
        %4309 = vmatprep.subr.bf16.mxu0 %v4246
        %4310 = vmatpush1.bf16.xpose.msra.mxu0 %v4245
        %4311 = vmatprep.subr.bf16.mxu0 %v4248
        %4312 = vmatpush1.bf16.xpose.msra.mxu0 %v4247
        %4313 = vmatprep.subr.bf16.mxu0 %v4250
        %4314 = vmatpush1.bf16.xpose.msra.mxu0 %v4249
        %4315 = vmatprep.subr.bf16.mxu0 %v4252
        %4316 = vmatpush1.bf16.xpose.msra.mxu0 %v4251
        %4317 = vmatprep.subr.bf16.mxu0 %v4254
        %4318 = vmatpush1.bf16.xpose.msra.mxu0 %v4253
        %4319 = vmatprep.mubr.bf16.mxu0 %v4156
        %4320 = vmatmul.mubr.bf16.gmra.mrb[0].mxu0 %v4155
        %v4321 = vpop.f32.mrb[0].mxu0
        %v4322 = vadd.f32 0.0, %v4321
        %v4323 = vpop.f32.mrb[0].mxu0
        %v4324 = vadd.f32 0.0, %v4323
        %v4325 = vpop.f32.mrb[0].mxu0
        %v4326 = vpop.f32.mrb[0].mxu0
        %4327 = vdwg.mxu0
        %v4328 = vadd.f32 %v3972, %v4322
        %v4329 = vadd.f32 %v3973, %v4324
        %v4330 = vld [vmem:[%s2] sm:$0xff]
        %4332 = vset.pattern.permute.xlu0 0
        %4333 = vperm.xlu0 %4332, %v4330
        %v4334 = vpop.permute.xlu0 %4333
        %v4336 = vadd.f32 %v4328, %v4334
        %v4337 = vadd.f32 %v4329, %v4334
        %4338 = vst [vmem:[%s203] sm:$0xff] %v4336
        %4339 = vst [vmem:[%s203 + $0x8] sm:$0xff] %v4337
        %s4340 = sand.u32 %s97, 1
        %s4341 = scalar_lea.sflag [#allocation5], %s4340
        %s4342 = sand.u32 %s97, 1
        %s4343 = smul.addr %s4342, 16
        %s4344 = scalar_lea.vmem [#allocation8], %s4343
        // Predicated region
        $region41: #{tpu_custom_call.1} parent=31 // pred_check
          %p4345 = pneg %p107
        $region42: #{tpu_custom_call.1} parent=31 // pred_check_branch
          %4347 = sbr.rel (%p4345) target = $region44
        $region43: #{tpu_custom_call.1} parent=31 // pred_region
          %s4349 = ssub.s32 256, 256
          %4350 = vsyncadd %s4341, %s4349
          %s4351 = smul.addr %s21, 2
          %s4352 = smul.addr %s4351, 128
          %s4353 = scalar_lea.hbm %s3, %s4352
          %s4355 = sshll.u32 %s4344, 4
          %s4356 = int_to_ptr.vmem [resolvable:$true] %s4355
          %4358 = dma.vmem_to_hbm [thread:$0]  %s4356, 256, %s4353, %s4341
        $region44: #{tpu_custom_call.1} parent=31 // pred_fallthru
          _
      $region32: #{tpu_custom_call.1} parent=5 // pred_fallthru
        _
      %p4359 = scmp.le.s32.totalorder 2, %s16
      // Predicated region
      $region45: #{tpu_custom_call.1} parent=5 // pred_check
        %p4360 = pneg %p4359
      $region46: #{tpu_custom_call.1} parent=5 // pred_check_branch
        %4362 = sbr.rel (%p4360) target = $region48
      $region47: #{tpu_custom_call.1} parent=5 // pred_region
        %s4363 = ssub.s32 %s16, 2
        // Predicated region
        $region49: #{tpu_custom_call.1} parent=47 // pred_check
          %p4364 = pneg %p113
        $region50: #{tpu_custom_call.1} parent=47 // pred_check_branch
          %4366 = sbr.rel (%p4364) target = $region52
        $region51: #{tpu_custom_call.1} parent=47 // pred_region
          %s4367 = sand.u32 %s98, 1
          %s4368 = scalar_lea.sflag [#allocation5], %s4367
          %s4369 = sand.u32 %s98, 1
          %s4370 = smul.addr %s4369, 16
          %s4371 = scalar_lea.vmem [#allocation8], %s4370
          %4372 = dma.done %s4368, 256
        $region52: #{tpu_custom_call.1} parent=47 // pred_fallthru
          _
      $region48: #{tpu_custom_call.1} parent=5 // pred_fallthru
        _
    $region6: #{tpu_custom_call.1} parent=1 // loop_footer
      %s20 = sadd.s32 1, %s16
    $region7: #{tpu_custom_call.1} parent=1 // loop_footer_branch
      %15 = sbr.rel target = $region3
    $region8: #{tpu_custom_call.1} parent=1 // loop_exit
      _
    %4373 = vsyncpa [#allocation4], 1
    %s4374 = scalar_lea.sflag [#allocation4], 1
    %4375 = vsyncpa %s4374, 1
    %4376 = vsyncpa [#allocation7], 1
    %4377 = vsyncpa [#allocation5], 1
    %s4378 = scalar_lea.sflag [#allocation5], 1
    %4379 = vsyncpa %s4378, 1

</llo_original>
